<compile_context>
chip_gen: v7x
topology: tpu7x:2x2x1
jax: 0.10.0
libtpu: 0.0.40
codegen_flags: <defaults>
</compile_context>

<pallas_src>
import jax
import jax.numpy as jnp
from jax.experimental import pallas as pl

# ---- small synthetic ChemBERTa config -------------------------------------
VOCAB = 100
VOCAB_PAD = 128          # vocab padded to a full 128-lane tile for the one-hot matmul
HIDDEN = 128
N_LAYERS = 2
N_HEADS = 4
HEAD_DIM = HIDDEN // N_HEADS
INTERMEDIATE = 256
BATCH = 2
SEQ = 8
BS = BATCH * SEQ
LN_EPS = 1e-12


# ---- fused Pallas kernel ----------------------------------------------------
def _fused_chemberta_kernel(ids_ref, mask_ref,
                            wemb_ref, pos_type_ref, emb_g_ref, emb_b_ref,
                            wqkv_ref, bqkv_ref, wo_ref, bo_ref,
                            ln1_g_ref, ln1_b_ref,
                            wi_ref, bi_ref, wf_ref, bf_ref,
                            ln2_g_ref, ln2_b_ref,
                            wp_ref, bp_ref, wfc_ref, bfc_ref,
                            o_ref):
    f32, bf16 = jnp.float32, jnp.bfloat16

    def layer_norm(x, g, b):
        mu = jnp.mean(x, axis=-1, keepdims=True)
        var = jnp.mean((x - mu) * (x - mu), axis=-1, keepdims=True)
        return (x - mu) * jax.lax.rsqrt(var + LN_EPS) * g + b

    def dense(x, w_bf16, b):
        # activations cast to bf16, weights already bf16, f32 accumulation on MXU.
        return jnp.dot(x.astype(bf16), w_bf16, preferred_element_type=f32) + b

    # ---- embeddings: one-hot gather on the MXU + LayerNorm ----
    ids = ids_ref[...]                                                    # (BS, 1) i32
    onehot = (ids == jax.lax.broadcasted_iota(jnp.int32, (BS, VOCAB_PAD), 1)
              ).astype(bf16)                                              # (BS, Vp)
    emb = jnp.dot(onehot, wemb_ref[...], preferred_element_type=f32)      # (BS, H)
    emb = emb + pos_type_ref[...]                                         # pos+type, pre-tiled
    h = layer_norm(emb, emb_g_ref[...], emb_b_ref[...])                   # (BS, H) f32

    # ---- additive attention bias over keys, hoisted out of all loops ----
    neg = (1.0 - mask_ref[...].astype(f32)) * -1e9                        # (B, 1, S)
    bias_bss = jnp.broadcast_to(neg, (BATCH, SEQ, SEQ))                   # (B, S, S)

    for l in range(N_LAYERS):
        wqkv_l = wqkv_ref[l]
        wo_l = wo_ref[l]

        # fused Q/K/V projection: (BS, H) @ (H, 3H)
        qkv = dense(h, wqkv_l, bqkv_ref[l])                               # (BS, 3H) f32

        attn = None
        for hd in range(N_HEADS):
            c0 = hd * HEAD_DIM
            # reshape on the f32 value (8-sublane aligned), then cast to bf16
            qh = qkv[:, c0:c0 + HEAD_DIM].reshape(BATCH, SEQ, HEAD_DIM).astype(bf16)
            kh = qkv[:, HIDDEN + c0:HIDDEN + c0 + HEAD_DIM].reshape(
                BATCH, SEQ, HEAD_DIM).astype(bf16)
            vh = qkv[:, 2 * HIDDEN + c0:2 * HIDDEN + c0 + HEAD_DIM].reshape(
                BATCH, SEQ, HEAD_DIM).astype(bf16)

            s = jnp.einsum('bsd,btd->bst', qh, kh,
                           preferred_element_type=f32)                    # (B, S, S)
            s = s + bias_bss                    # 1/sqrt(Dh) already folded into W_q
            m = jnp.max(s, axis=-1, keepdims=True)
            p = jnp.exp(s - m)
            p = p * pl.reciprocal(jnp.sum(p, axis=-1, keepdims=True), approx=True)
            ctx = jnp.einsum('bst,btd->bsd', p.astype(bf16), vh,
                             preferred_element_type=f32)                  # (B, S, Dh)
            # per-head output projection against the matching rows of W_o,
            # summed over heads == concat(heads) @ W_o without the lane concat.
            part = jnp.dot(ctx.reshape(BS, HEAD_DIM).astype(bf16),
                           wo_l[c0:c0 + HEAD_DIM, :],
                           preferred_element_type=f32)                    # (BS, H)
            attn = part if attn is None else attn + part

        h = layer_norm(attn + bo_ref[l] + h, ln1_g_ref[l], ln1_b_ref[l])  # residual + LN

        ff = dense(h, wi_ref[l], bi_ref[l])                               # (BS, I)
        # TODO(synk): HF RoBERTa uses exact (erf) GELU; tanh approximation used here.
        ff = jax.nn.gelu(ff, approximate=True)
        ff = dense(ff, wf_ref[l], bf_ref[l])                              # (BS, H)
        h = layer_norm(ff + h, ln2_g_ref[l], ln2_b_ref[l])                # residual + LN

    # ---- pooler on CLS rows only + fc head ----
    cls_rows = [h[b * SEQ:b * SEQ + 1, :] for b in range(BATCH)]          # B x (1, H)
    h_cls = jnp.concatenate(cls_rows, axis=0)                             # (B, H)
    pooled = jnp.tanh(dense(h_cls, wp_ref[...], bp_ref[...]))             # (B, H)
    pred = jnp.sum(pooled * wfc_ref[...], axis=-1, keepdims=True) + bfc_ref[...]
    o_ref[...] = pred.astype(o_ref.dtype)                                 # (B, 1)


# ---- deterministic parameter init (kernel-ready: bf16 weights, folded scale) --
def init_params(key):
    f32, bf16 = jnp.float32, jnp.bfloat16

    def w(k, shape):
        return 0.02 * jax.random.normal(k, shape, f32)

    keys = iter(jax.random.split(key, 16))

    word_emb = w(next(keys), (VOCAB, HIDDEN))
    # TODO(synk): RoBERTa position-id offset (padding_idx+1) omitted; positions 0..S-1 used.
    pos_emb = w(next(keys), (SEQ, HIDDEN))
    type_emb = w(next(keys), (1, HIDDEN))

    wqkv = w(next(keys), (N_LAYERS, HIDDEN, 3 * HIDDEN))
    bqkv = jnp.zeros((N_LAYERS, 1, 3 * HIDDEN), f32)
    # fold 1/sqrt(head_dim) into the Q third of the fused QKV projection
    scale = 1.0 / float(HEAD_DIM) ** 0.5
    wqkv = wqkv.at[:, :, :HIDDEN].multiply(scale)
    bqkv = bqkv.at[:, :, :HIDDEN].multiply(scale)

    wo = w(next(keys), (N_LAYERS, HIDDEN, HIDDEN))
    wi = w(next(keys), (N_LAYERS, HIDDEN, INTERMEDIATE))
    wf = w(next(keys), (N_LAYERS, INTERMEDIATE, HIDDEN))
    w_pool = w(next(keys), (HIDDEN, HIDDEN))
    w_fc = w(next(keys), (1, HIDDEN))

    wemb_padded = jnp.zeros((VOCAB_PAD, HIDDEN), f32).at[:VOCAB].set(word_emb)

    return {
        # bf16 pre-cast matmul weights (half the HBM->VMEM bytes, no kernel casts)
        "wemb": wemb_padded.astype(bf16),
        "wqkv": wqkv.astype(bf16),
        "wo": wo.astype(bf16),
        "wi": wi.astype(bf16),
        "wf": wf.astype(bf16),
        "w_pool": w_pool.astype(bf16),
        # f32 smalls: combined pos+type embedding pre-tiled to (B*S, H), biases,
        # LayerNorm params, fc head
        "pos_type": jnp.tile(pos_emb + type_emb, (BATCH, 1)),
        "emb_ln_g": jnp.ones((1, HIDDEN), f32),
        "emb_ln_b": jnp.zeros((1, HIDDEN), f32),
        "bqkv": bqkv,
        "bo": jnp.zeros((N_LAYERS, 1, HIDDEN), f32),
        "ln1_g": jnp.ones((N_LAYERS, 1, HIDDEN), f32),
        "ln1_b": jnp.zeros((N_LAYERS, 1, HIDDEN), f32),
        "bi": jnp.zeros((N_LAYERS, 1, INTERMEDIATE), f32),
        "bf": jnp.zeros((N_LAYERS, 1, HIDDEN), f32),
        "ln2_g": jnp.ones((N_LAYERS, 1, HIDDEN), f32),
        "ln2_b": jnp.zeros((N_LAYERS, 1, HIDDEN), f32),
        "b_pool": jnp.zeros((1, HIDDEN), f32),
        "w_fc": w_fc,
        "b_fc": jnp.zeros((1, 1), f32),
    }


# ---- forward pass (ChemBERTaModel.forward) ----------------------------------
def chemberta_forward(params, input_ids, attention_mask):
    B, S = input_ids.shape
    ids = input_ids.reshape(B * S, 1).astype(jnp.int32)       # (B*S, 1) for one-hot gather
    mask = attention_mask.reshape(B, 1, S).astype(jnp.int32)  # key mask, bias built in-kernel

    out = pl.pallas_call(
        _fused_chemberta_kernel,
        out_shape=jax.ShapeDtypeStruct((B, 1), jnp.float32),
        # No grid: every array is a single whole-array VMEM block (weights total
        # ~0.5 MB bf16), so there is nothing to pipeline or double-buffer.
    )(ids, mask,
      params["wemb"], params["pos_type"], params["emb_ln_g"], params["emb_ln_b"],
      params["wqkv"], params["bqkv"], params["wo"], params["bo"],
      params["ln1_g"], params["ln1_b"],
      params["wi"], params["bi"], params["wf"], params["bf"],
      params["ln2_g"], params["ln2_b"],
      params["w_pool"], params["b_pool"], params["w_fc"], params["b_fc"])

    return jnp.squeeze(out)                                    # matches prediction.squeeze()


# ---- main --------------------------------------------------------------------
if __name__ == "__main__":
    key = jax.random.PRNGKey(0)
    k_params, k_ids = jax.random.split(key)
    params = init_params(k_params)

    input_ids = jax.random.randint(k_ids, (BATCH, SEQ), 0, VOCAB, dtype=jnp.int32)
    attention_mask = jnp.ones((BATCH, SEQ), dtype=jnp.int32)
    attention_mask = attention_mask.at[1, SEQ - 2:].set(0)     # some padding in row 1

    out = jax.jit(chemberta_forward)(params, input_ids, attention_mask)
    jax.block_until_ready(out)
    assert out.shape == (BATCH,)
    print("KERNEL_OK")
</pallas_src>

<mosaic_0001>
module attributes {stable_mosaic.version = 11 : i64} {
  func.func @_fused_chemberta_kernel(%arg0: memref<16x1xi32, #tpu.memory_space<vmem>>, %arg1: memref<2x1x8xi32, #tpu.memory_space<vmem>>, %arg2: memref<128x128xbf16, #tpu.memory_space<vmem>>, %arg3: memref<16x128xf32, #tpu.memory_space<vmem>>, %arg4: memref<1x128xf32, #tpu.memory_space<vmem>>, %arg5: memref<1x128xf32, #tpu.memory_space<vmem>>, %arg6: memref<2x128x384xbf16, #tpu.memory_space<vmem>>, %arg7: memref<2x1x384xf32, #tpu.memory_space<vmem>>, %arg8: memref<2x128x128xbf16, #tpu.memory_space<vmem>>, %arg9: memref<2x1x128xf32, #tpu.memory_space<vmem>>, %arg10: memref<2x1x128xf32, #tpu.memory_space<vmem>>, %arg11: memref<2x1x128xf32, #tpu.memory_space<vmem>>, %arg12: memref<2x128x256xbf16, #tpu.memory_space<vmem>>, %arg13: memref<2x1x256xf32, #tpu.memory_space<vmem>>, %arg14: memref<2x256x128xbf16, #tpu.memory_space<vmem>>, %arg15: memref<2x1x128xf32, #tpu.memory_space<vmem>>, %arg16: memref<2x1x128xf32, #tpu.memory_space<vmem>>, %arg17: memref<2x1x128xf32, #tpu.memory_space<vmem>>, %arg18: memref<128x128xbf16, #tpu.memory_space<vmem>>, %arg19: memref<1x128xf32, #tpu.memory_space<vmem>>, %arg20: memref<1x128xf32, #tpu.memory_space<vmem>>, %arg21: memref<1x1xf32, #tpu.memory_space<vmem>>, %arg22: memref<2x1xf32, #tpu.memory_space<vmem>>) attributes {dimension_semantics = [], scalar_prefetch = 0 : i64, scratch_operands = 0 : i64, tpu.core_type = #tpu.core_type<tc>} {
    %c0 = arith.constant 0 : index
    %c0_0 = arith.constant 0 : index
    %0 = vector.load %arg0[%c0, %c0_0] : memref<16x1xi32, #tpu.memory_space<vmem>>, vector<16x1xi32>
    %1 = tpu.iota {dimensions = array<i32: 1>} : vector<16x128xi32>
    %2 = vector.broadcast %0 : vector<16x1xi32> to vector<16x128xi32>
    %3 = arith.cmpi eq, %2, %1 : vector<16x128xi32>
    %4 = arith.extui %3 : vector<16x128xi1> to vector<16x128xi32>
    %5 = arith.sitofp %4 : vector<16x128xi32> to vector<16x128xf32>
    %6 = arith.truncf %5 : vector<16x128xf32> to vector<16x128xbf16>
    %c0_1 = arith.constant 0 : index
    %c0_2 = arith.constant 0 : index
    %7 = vector.load %arg2[%c0_1, %c0_2] : memref<128x128xbf16, #tpu.memory_space<vmem>>, vector<128x128xbf16>
    %cst = arith.constant dense<0.000000e+00> : vector<16x128xf32>
    %8 = tpu.matmul %6, %7, %cst {dimension_numbers = #tpu.dot_dimension_numbers<[1], [0], [0], [1], [0, 0, 1, 1], [], []>} : vector<16x128xbf16>, vector<128x128xbf16>, vector<16x128xf32> -> vector<16x128xf32>
    %c0_3 = arith.constant 0 : index
    %c0_4 = arith.constant 0 : index
    %9 = vector.load %arg3[%c0_3, %c0_4] : memref<16x128xf32, #tpu.memory_space<vmem>>, vector<16x128xf32>
    %10 = arith.addf %8, %9 : vector<16x128xf32>
    %c0_5 = arith.constant 0 : index
    %c0_6 = arith.constant 0 : index
    %11 = vector.load %arg4[%c0_5, %c0_6] : memref<1x128xf32, #tpu.memory_space<vmem>>, vector<1x128xf32>
    %c0_7 = arith.constant 0 : index
    %c0_8 = arith.constant 0 : index
    %12 = vector.load %arg5[%c0_7, %c0_8] : memref<1x128xf32, #tpu.memory_space<vmem>>, vector<1x128xf32>
    %cst_9 = arith.constant dense<0.000000e+00> : vector<16xf32>
    %13 = vector.multi_reduction <add>, %10, %cst_9 [1] : vector<16x128xf32> to vector<16xf32>
    %14 = vector.shape_cast %13 : vector<16xf32> to vector<16x1xf32>
    %cst_10 = arith.constant 1.280000e+02 : f32
    %15 = vector.broadcast %cst_10 : f32 to vector<16x1xf32>
    %16 = arith.divf %14, %15 : vector<16x1xf32>
    %17 = vector.broadcast %16 : vector<16x1xf32> to vector<16x128xf32>
    %18 = arith.subf %10, %17 : vector<16x128xf32>
    %19 = vector.broadcast %16 : vector<16x1xf32> to vector<16x128xf32>
    %20 = arith.subf %10, %19 : vector<16x128xf32>
    %21 = arith.mulf %18, %20 : vector<16x128xf32>
    %cst_11 = arith.constant dense<0.000000e+00> : vector<16xf32>
    %22 = vector.multi_reduction <add>, %21, %cst_11 [1] : vector<16x128xf32> to vector<16xf32>
    %23 = vector.shape_cast %22 : vector<16xf32> to vector<16x1xf32>
    %cst_12 = arith.constant 1.280000e+02 : f32
    %24 = vector.broadcast %cst_12 : f32 to vector<16x1xf32>
    %25 = arith.divf %23, %24 : vector<16x1xf32>
    %26 = vector.broadcast %16 : vector<16x1xf32> to vector<16x128xf32>
    %27 = arith.subf %10, %26 : vector<16x128xf32>
    %cst_13 = arith.constant 9.99999996E-13 : f32
    %28 = vector.broadcast %cst_13 : f32 to vector<16x1xf32>
    %29 = arith.addf %25, %28 : vector<16x1xf32>
    %30 = math.rsqrt %29 : vector<16x1xf32>
    %31 = vector.broadcast %30 : vector<16x1xf32> to vector<16x128xf32>
    %32 = arith.mulf %27, %31 : vector<16x128xf32>
    %33 = vector.broadcast %11 : vector<1x128xf32> to vector<16x128xf32>
    %34 = arith.mulf %32, %33 : vector<16x128xf32>
    %35 = vector.broadcast %12 : vector<1x128xf32> to vector<16x128xf32>
    %36 = arith.addf %34, %35 : vector<16x128xf32>
    %c0_14 = arith.constant 0 : index
    %c0_15 = arith.constant 0 : index
    %c0_16 = arith.constant 0 : index
    %37 = vector.load %arg1[%c0_14, %c0_15, %c0_16] : memref<2x1x8xi32, #tpu.memory_space<vmem>>, vector<2x1x8xi32>
    %38 = arith.sitofp %37 : vector<2x1x8xi32> to vector<2x1x8xf32>
    %cst_17 = arith.constant 1.000000e+00 : f32
    %39 = vector.broadcast %cst_17 : f32 to vector<2x1x8xf32>
    %40 = arith.subf %39, %38 : vector<2x1x8xf32>
    %cst_18 = arith.constant -1.000000e+09 : f32
    %41 = vector.broadcast %cst_18 : f32 to vector<2x1x8xf32>
    %42 = arith.mulf %40, %41 : vector<2x1x8xf32>
    %43 = vector.shape_cast %42 : vector<2x1x8xf32> to vector<2x1x8xf32>
    %44 = vector.broadcast %43 : vector<2x1x8xf32> to vector<2x8x8xf32>
    %c0_19 = arith.constant 0 : index
    %c0_20 = arith.constant 0 : index
    %c0_21 = arith.constant 0 : index
    %45 = vector.load %arg6[%c0_19, %c0_20, %c0_21] : memref<2x128x384xbf16, #tpu.memory_space<vmem>>, vector<1x128x384xbf16>
    %46 = vector.shape_cast %45 : vector<1x128x384xbf16> to vector<128x384xbf16>
    %c0_22 = arith.constant 0 : index
    %c0_23 = arith.constant 0 : index
    %c0_24 = arith.constant 0 : index
    %47 = vector.load %arg8[%c0_22, %c0_23, %c0_24] : memref<2x128x128xbf16, #tpu.memory_space<vmem>>, vector<1x128x128xbf16>
    %48 = vector.shape_cast %47 : vector<1x128x128xbf16> to vector<128x128xbf16>
    %c0_25 = arith.constant 0 : index
    %c0_26 = arith.constant 0 : index
    %c0_27 = arith.constant 0 : index
    %49 = vector.load %arg7[%c0_25, %c0_26, %c0_27] : memref<2x1x384xf32, #tpu.memory_space<vmem>>, vector<1x1x384xf32>
    %50 = vector.shape_cast %49 : vector<1x1x384xf32> to vector<1x384xf32>
    %51 = arith.truncf %36 : vector<16x128xf32> to vector<16x128xbf16>
    %cst_28 = arith.constant dense<0.000000e+00> : vector<16x384xf32>
    %52 = tpu.matmul %51, %46, %cst_28 {dimension_numbers = #tpu.dot_dimension_numbers<[1], [0], [0], [1], [0, 0, 1, 1], [], []>} : vector<16x128xbf16>, vector<128x384xbf16>, vector<16x384xf32> -> vector<16x384xf32>
    %53 = vector.broadcast %50 : vector<1x384xf32> to vector<16x384xf32>
    %54 = arith.addf %52, %53 : vector<16x384xf32>
    %55 = vector.extract_strided_slice %54 {offsets = [0, 0], sizes = [16, 32], strides = [1, 1]} : vector<16x384xf32> to vector<16x32xf32>
    %56 = vector.shape_cast %55 : vector<16x32xf32> to vector<2x8x32xf32>
    %57 = arith.truncf %56 : vector<2x8x32xf32> to vector<2x8x32xbf16>
    %58 = vector.extract_strided_slice %54 {offsets = [0, 128], sizes = [16, 32], strides = [1, 1]} : vector<16x384xf32> to vector<16x32xf32>
    %59 = vector.shape_cast %58 : vector<16x32xf32> to vector<2x8x32xf32>
    %60 = arith.truncf %59 : vector<2x8x32xf32> to vector<2x8x32xbf16>
    %61 = vector.extract_strided_slice %54 {offsets = [0, 256], sizes = [16, 32], strides = [1, 1]} : vector<16x384xf32> to vector<16x32xf32>
    %62 = vector.shape_cast %61 : vector<16x32xf32> to vector<2x8x32xf32>
    %63 = arith.truncf %62 : vector<2x8x32xf32> to vector<2x8x32xbf16>
    "tpu.trace_start"() <{level = 10 : i32, message = "bsd,btd->bst"}> : () -> ()
    %cst_29 = arith.constant dense<0.000000e+00> : vector<2x8x8xf32>
    %64 = tpu.matmul %57, %60, %cst_29 {dimension_numbers = #tpu.dot_dimension_numbers<[2], [2], [1], [1], [0, 0, 0, 1, 1, 1], [0], [0]>} : vector<2x8x32xbf16>, vector<2x8x32xbf16>, vector<2x8x8xf32> -> vector<2x8x8xf32>
    "tpu.trace_stop"() : () -> ()
    %65 = arith.addf %64, %44 : vector<2x8x8xf32>
    %cst_30 = arith.constant dense<0xFF800000> : vector<2x8xf32>
    %66 = vector.multi_reduction <maximumf>, %65, %cst_30 [2] : vector<2x8x8xf32> to vector<2x8xf32>
    %67 = vector.shape_cast %66 : vector<2x8xf32> to vector<2x8x1xf32>
    %68 = vector.broadcast %67 : vector<2x8x1xf32> to vector<2x8x8xf32>
    %69 = arith.subf %65, %68 : vector<2x8x8xf32>
    %70 = math.exp %69 : vector<2x8x8xf32>
    %cst_31 = arith.constant dense<0.000000e+00> : vector<2x8xf32>
    %71 = vector.multi_reduction <add>, %70, %cst_31 [2] : vector<2x8x8xf32> to vector<2x8xf32>
    %72 = vector.shape_cast %71 : vector<2x8xf32> to vector<2x8x1xf32>
    %73 = tpu.reciprocal %72 {approx = true} : vector<2x8x1xf32> -> vector<2x8x1xf32>
    %74 = vector.broadcast %73 : vector<2x8x1xf32> to vector<2x8x8xf32>
    %75 = arith.mulf %70, %74 : vector<2x8x8xf32>
    %76 = arith.truncf %75 : vector<2x8x8xf32> to vector<2x8x8xbf16>
    "tpu.trace_start"() <{level = 10 : i32, message = "bst,btd->bsd"}> : () -> ()
    %cst_32 = arith.constant dense<0.000000e+00> : vector<2x8x32xf32>
    %77 = tpu.matmul %76, %63, %cst_32 {dimension_numbers = #tpu.dot_dimension_numbers<[2], [1], [1], [2], [0, 0, 0, 1, 1, 2], [0], [0]>} : vector<2x8x8xbf16>, vector<2x8x32xbf16>, vector<2x8x32xf32> -> vector<2x8x32xf32>
    "tpu.trace_stop"() : () -> ()
    %78 = vector.shape_cast %77 : vector<2x8x32xf32> to vector<16x32xf32>
    %79 = arith.truncf %78 : vector<16x32xf32> to vector<16x32xbf16>
    %80 = vector.extract_strided_slice %48 {offsets = [0, 0], sizes = [32, 128], strides = [1, 1]} : vector<128x128xbf16> to vector<32x128xbf16>
    %cst_33 = arith.constant dense<0.000000e+00> : vector<16x128xf32>
    %81 = tpu.matmul %79, %80, %cst_33 {dimension_numbers = #tpu.dot_dimension_numbers<[1], [0], [0], [1], [0, 0, 1, 1], [], []>} : vector<16x32xbf16>, vector<32x128xbf16>, vector<16x128xf32> -> vector<16x128xf32>
    %82 = vector.extract_strided_slice %54 {offsets = [0, 32], sizes = [16, 32], strides = [1, 1]} : vector<16x384xf32> to vector<16x32xf32>
    %83 = vector.shape_cast %82 : vector<16x32xf32> to vector<2x8x32xf32>
    %84 = arith.truncf %83 : vector<2x8x32xf32> to vector<2x8x32xbf16>
    %85 = vector.extract_strided_slice %54 {offsets = [0, 160], sizes = [16, 32], strides = [1, 1]} : vector<16x384xf32> to vector<16x32xf32>
    %86 = vector.shape_cast %85 : vector<16x32xf32> to vector<2x8x32xf32>
    %87 = arith.truncf %86 : vector<2x8x32xf32> to vector<2x8x32xbf16>
    %88 = vector.extract_strided_slice %54 {offsets = [0, 288], sizes = [16, 32], strides = [1, 1]} : vector<16x384xf32> to vector<16x32xf32>
    %89 = vector.shape_cast %88 : vector<16x32xf32> to vector<2x8x32xf32>
    %90 = arith.truncf %89 : vector<2x8x32xf32> to vector<2x8x32xbf16>
    "tpu.trace_start"() <{level = 10 : i32, message = "bsd,btd->bst"}> : () -> ()
    %cst_34 = arith.constant dense<0.000000e+00> : vector<2x8x8xf32>
    %91 = tpu.matmul %84, %87, %cst_34 {dimension_numbers = #tpu.dot_dimension_numbers<[2], [2], [1], [1], [0, 0, 0, 1, 1, 1], [0], [0]>} : vector<2x8x32xbf16>, vector<2x8x32xbf16>, vector<2x8x8xf32> -> vector<2x8x8xf32>
    "tpu.trace_stop"() : () -> ()
    %92 = arith.addf %91, %44 : vector<2x8x8xf32>
    %cst_35 = arith.constant dense<0xFF800000> : vector<2x8xf32>
    %93 = vector.multi_reduction <maximumf>, %92, %cst_35 [2] : vector<2x8x8xf32> to vector<2x8xf32>
    %94 = vector.shape_cast %93 : vector<2x8xf32> to vector<2x8x1xf32>
    %95 = vector.broadcast %94 : vector<2x8x1xf32> to vector<2x8x8xf32>
    %96 = arith.subf %92, %95 : vector<2x8x8xf32>
    %97 = math.exp %96 : vector<2x8x8xf32>
    %cst_36 = arith.constant dense<0.000000e+00> : vector<2x8xf32>
    %98 = vector.multi_reduction <add>, %97, %cst_36 [2] : vector<2x8x8xf32> to vector<2x8xf32>
    %99 = vector.shape_cast %98 : vector<2x8xf32> to vector<2x8x1xf32>
    %100 = tpu.reciprocal %99 {approx = true} : vector<2x8x1xf32> -> vector<2x8x1xf32>
    %101 = vector.broadcast %100 : vector<2x8x1xf32> to vector<2x8x8xf32>
    %102 = arith.mulf %97, %101 : vector<2x8x8xf32>
    %103 = arith.truncf %102 : vector<2x8x8xf32> to vector<2x8x8xbf16>
    "tpu.trace_start"() <{level = 10 : i32, message = "bst,btd->bsd"}> : () -> ()
    %cst_37 = arith.constant dense<0.000000e+00> : vector<2x8x32xf32>
    %104 = tpu.matmul %103, %90, %cst_37 {dimension_numbers = #tpu.dot_dimension_numbers<[2], [1], [1], [2], [0, 0, 0, 1, 1, 2], [0], [0]>} : vector<2x8x8xbf16>, vector<2x8x32xbf16>, vector<2x8x32xf32> -> vector<2x8x32xf32>
    "tpu.trace_stop"() : () -> ()
    %105 = vector.shape_cast %104 : vector<2x8x32xf32> to vector<16x32xf32>
    %106 = arith.truncf %105 : vector<16x32xf32> to vector<16x32xbf16>
    %107 = vector.extract_strided_slice %48 {offsets = [32, 0], sizes = [32, 128], strides = [1, 1]} : vector<128x128xbf16> to vector<32x128xbf16>
    %cst_38 = arith.constant dense<0.000000e+00> : vector<16x128xf32>
    %108 = tpu.matmul %106, %107, %cst_38 {dimension_numbers = #tpu.dot_dimension_numbers<[1], [0], [0], [1], [0, 0, 1, 1], [], []>} : vector<16x32xbf16>, vector<32x128xbf16>, vector<16x128xf32> -> vector<16x128xf32>
    %109 = arith.addf %81, %108 : vector<16x128xf32>
    %110 = vector.extract_strided_slice %54 {offsets = [0, 64], sizes = [16, 32], strides = [1, 1]} : vector<16x384xf32> to vector<16x32xf32>
    %111 = vector.shape_cast %110 : vector<16x32xf32> to vector<2x8x32xf32>
    %112 = arith.truncf %111 : vector<2x8x32xf32> to vector<2x8x32xbf16>
    %113 = vector.extract_strided_slice %54 {offsets = [0, 192], sizes = [16, 32], strides = [1, 1]} : vector<16x384xf32> to vector<16x32xf32>
    %114 = vector.shape_cast %113 : vector<16x32xf32> to vector<2x8x32xf32>
    %115 = arith.truncf %114 : vector<2x8x32xf32> to vector<2x8x32xbf16>
    %116 = vector.extract_strided_slice %54 {offsets = [0, 320], sizes = [16, 32], strides = [1, 1]} : vector<16x384xf32> to vector<16x32xf32>
    %117 = vector.shape_cast %116 : vector<16x32xf32> to vector<2x8x32xf32>
    %118 = arith.truncf %117 : vector<2x8x32xf32> to vector<2x8x32xbf16>
    "tpu.trace_start"() <{level = 10 : i32, message = "bsd,btd->bst"}> : () -> ()
    %cst_39 = arith.constant dense<0.000000e+00> : vector<2x8x8xf32>
    %119 = tpu.matmul %112, %115, %cst_39 {dimension_numbers = #tpu.dot_dimension_numbers<[2], [2], [1], [1], [0, 0, 0, 1, 1, 1], [0], [0]>} : vector<2x8x32xbf16>, vector<2x8x32xbf16>, vector<2x8x8xf32> -> vector<2x8x8xf32>
    "tpu.trace_stop"() : () -> ()
    %120 = arith.addf %119, %44 : vector<2x8x8xf32>
    %cst_40 = arith.constant dense<0xFF800000> : vector<2x8xf32>
    %121 = vector.multi_reduction <maximumf>, %120, %cst_40 [2] : vector<2x8x8xf32> to vector<2x8xf32>
    %122 = vector.shape_cast %121 : vector<2x8xf32> to vector<2x8x1xf32>
    %123 = vector.broadcast %122 : vector<2x8x1xf32> to vector<2x8x8xf32>
    %124 = arith.subf %120, %123 : vector<2x8x8xf32>
    %125 = math.exp %124 : vector<2x8x8xf32>
    %cst_41 = arith.constant dense<0.000000e+00> : vector<2x8xf32>
    %126 = vector.multi_reduction <add>, %125, %cst_41 [2] : vector<2x8x8xf32> to vector<2x8xf32>
    %127 = vector.shape_cast %126 : vector<2x8xf32> to vector<2x8x1xf32>
    %128 = tpu.reciprocal %127 {approx = true} : vector<2x8x1xf32> -> vector<2x8x1xf32>
    %129 = vector.broadcast %128 : vector<2x8x1xf32> to vector<2x8x8xf32>
    %130 = arith.mulf %125, %129 : vector<2x8x8xf32>
    %131 = arith.truncf %130 : vector<2x8x8xf32> to vector<2x8x8xbf16>
    "tpu.trace_start"() <{level = 10 : i32, message = "bst,btd->bsd"}> : () -> ()
    %cst_42 = arith.constant dense<0.000000e+00> : vector<2x8x32xf32>
    %132 = tpu.matmul %131, %118, %cst_42 {dimension_numbers = #tpu.dot_dimension_numbers<[2], [1], [1], [2], [0, 0, 0, 1, 1, 2], [0], [0]>} : vector<2x8x8xbf16>, vector<2x8x32xbf16>, vector<2x8x32xf32> -> vector<2x8x32xf32>
    "tpu.trace_stop"() : () -> ()
    %133 = vector.shape_cast %132 : vector<2x8x32xf32> to vector<16x32xf32>
    %134 = arith.truncf %133 : vector<16x32xf32> to vector<16x32xbf16>
    %135 = vector.extract_strided_slice %48 {offsets = [64, 0], sizes = [32, 128], strides = [1, 1]} : vector<128x128xbf16> to vector<32x128xbf16>
    %cst_43 = arith.constant dense<0.000000e+00> : vector<16x128xf32>
    %136 = tpu.matmul %134, %135, %cst_43 {dimension_numbers = #tpu.dot_dimension_numbers<[1], [0], [0], [1], [0, 0, 1, 1], [], []>} : vector<16x32xbf16>, vector<32x128xbf16>, vector<16x128xf32> -> vector<16x128xf32>
    %137 = arith.addf %109, %136 : vector<16x128xf32>
    %138 = vector.extract_strided_slice %54 {offsets = [0, 96], sizes = [16, 32], strides = [1, 1]} : vector<16x384xf32> to vector<16x32xf32>
    %139 = vector.shape_cast %138 : vector<16x32xf32> to vector<2x8x32xf32>
    %140 = arith.truncf %139 : vector<2x8x32xf32> to vector<2x8x32xbf16>
    %141 = vector.extract_strided_slice %54 {offsets = [0, 224], sizes = [16, 32], strides = [1, 1]} : vector<16x384xf32> to vector<16x32xf32>
    %142 = vector.shape_cast %141 : vector<16x32xf32> to vector<2x8x32xf32>
    %143 = arith.truncf %142 : vector<2x8x32xf32> to vector<2x8x32xbf16>
    %144 = vector.extract_strided_slice %54 {offsets = [0, 352], sizes = [16, 32], strides = [1, 1]} : vector<16x384xf32> to vector<16x32xf32>
    %145 = vector.shape_cast %144 : vector<16x32xf32> to vector<2x8x32xf32>
    %146 = arith.truncf %145 : vector<2x8x32xf32> to vector<2x8x32xbf16>
    "tpu.trace_start"() <{level = 10 : i32, message = "bsd,btd->bst"}> : () -> ()
    %cst_44 = arith.constant dense<0.000000e+00> : vector<2x8x8xf32>
    %147 = tpu.matmul %140, %143, %cst_44 {dimension_numbers = #tpu.dot_dimension_numbers<[2], [2], [1], [1], [0, 0, 0, 1, 1, 1], [0], [0]>} : vector<2x8x32xbf16>, vector<2x8x32xbf16>, vector<2x8x8xf32> -> vector<2x8x8xf32>
    "tpu.trace_stop"() : () -> ()
    %148 = arith.addf %147, %44 : vector<2x8x8xf32>
    %cst_45 = arith.constant dense<0xFF800000> : vector<2x8xf32>
    %149 = vector.multi_reduction <maximumf>, %148, %cst_45 [2] : vector<2x8x8xf32> to vector<2x8xf32>
    %150 = vector.shape_cast %149 : vector<2x8xf32> to vector<2x8x1xf32>
    %151 = vector.broadcast %150 : vector<2x8x1xf32> to vector<2x8x8xf32>
    %152 = arith.subf %148, %151 : vector<2x8x8xf32>
    %153 = math.exp %152 : vector<2x8x8xf32>
    %cst_46 = arith.constant dense<0.000000e+00> : vector<2x8xf32>
    %154 = vector.multi_reduction <add>, %153, %cst_46 [2] : vector<2x8x8xf32> to vector<2x8xf32>
    %155 = vector.shape_cast %154 : vector<2x8xf32> to vector<2x8x1xf32>
    %156 = tpu.reciprocal %155 {approx = true} : vector<2x8x1xf32> -> vector<2x8x1xf32>
    %157 = vector.broadcast %156 : vector<2x8x1xf32> to vector<2x8x8xf32>
    %158 = arith.mulf %153, %157 : vector<2x8x8xf32>
    %159 = arith.truncf %158 : vector<2x8x8xf32> to vector<2x8x8xbf16>
    "tpu.trace_start"() <{level = 10 : i32, message = "bst,btd->bsd"}> : () -> ()
    %cst_47 = arith.constant dense<0.000000e+00> : vector<2x8x32xf32>
    %160 = tpu.matmul %159, %146, %cst_47 {dimension_numbers = #tpu.dot_dimension_numbers<[2], [1], [1], [2], [0, 0, 0, 1, 1, 2], [0], [0]>} : vector<2x8x8xbf16>, vector<2x8x32xbf16>, vector<2x8x32xf32> -> vector<2x8x32xf32>
    "tpu.trace_stop"() : () -> ()
    %161 = vector.shape_cast %160 : vector<2x8x32xf32> to vector<16x32xf32>
    %162 = arith.truncf %161 : vector<16x32xf32> to vector<16x32xbf16>
    %163 = vector.extract_strided_slice %48 {offsets = [96, 0], sizes = [32, 128], strides = [1, 1]} : vector<128x128xbf16> to vector<32x128xbf16>
    %cst_48 = arith.constant dense<0.000000e+00> : vector<16x128xf32>
    %164 = tpu.matmul %162, %163, %cst_48 {dimension_numbers = #tpu.dot_dimension_numbers<[1], [0], [0], [1], [0, 0, 1, 1], [], []>} : vector<16x32xbf16>, vector<32x128xbf16>, vector<16x128xf32> -> vector<16x128xf32>
    %165 = arith.addf %137, %164 : vector<16x128xf32>
    %c0_49 = arith.constant 0 : index
    %c0_50 = arith.constant 0 : index
    %c0_51 = arith.constant 0 : index
    %166 = vector.load %arg9[%c0_49, %c0_50, %c0_51] : memref<2x1x128xf32, #tpu.memory_space<vmem>>, vector<1x1x128xf32>
    %167 = vector.shape_cast %166 : vector<1x1x128xf32> to vector<1x128xf32>
    %168 = vector.broadcast %167 : vector<1x128xf32> to vector<16x128xf32>
    %169 = arith.addf %165, %168 : vector<16x128xf32>
    %170 = arith.addf %169, %36 : vector<16x128xf32>
    %c0_52 = arith.constant 0 : index
    %c0_53 = arith.constant 0 : index
    %c0_54 = arith.constant 0 : index
    %171 = vector.load %arg10[%c0_52, %c0_53, %c0_54] : memref<2x1x128xf32, #tpu.memory_space<vmem>>, vector<1x1x128xf32>
    %172 = vector.shape_cast %171 : vector<1x1x128xf32> to vector<1x128xf32>
    %c0_55 = arith.constant 0 : index
    %c0_56 = arith.constant 0 : index
    %c0_57 = arith.constant 0 : index
    %173 = vector.load %arg11[%c0_55, %c0_56, %c0_57] : memref<2x1x128xf32, #tpu.memory_space<vmem>>, vector<1x1x128xf32>
    %174 = vector.shape_cast %173 : vector<1x1x128xf32> to vector<1x128xf32>
    %cst_58 = arith.constant dense<0.000000e+00> : vector<16xf32>
    %175 = vector.multi_reduction <add>, %170, %cst_58 [1] : vector<16x128xf32> to vector<16xf32>
    %176 = vector.shape_cast %175 : vector<16xf32> to vector<16x1xf32>
    %cst_59 = arith.constant 1.280000e+02 : f32
    %177 = vector.broadcast %cst_59 : f32 to vector<16x1xf32>
    %178 = arith.divf %176, %177 : vector<16x1xf32>
    %179 = vector.broadcast %178 : vector<16x1xf32> to vector<16x128xf32>
    %180 = arith.subf %170, %179 : vector<16x128xf32>
    %181 = vector.broadcast %178 : vector<16x1xf32> to vector<16x128xf32>
    %182 = arith.subf %170, %181 : vector<16x128xf32>
    %183 = arith.mulf %180, %182 : vector<16x128xf32>
    %cst_60 = arith.constant dense<0.000000e+00> : vector<16xf32>
    %184 = vector.multi_reduction <add>, %183, %cst_60 [1] : vector<16x128xf32> to vector<16xf32>
    %185 = vector.shape_cast %184 : vector<16xf32> to vector<16x1xf32>
    %cst_61 = arith.constant 1.280000e+02 : f32
    %186 = vector.broadcast %cst_61 : f32 to vector<16x1xf32>
    %187 = arith.divf %185, %186 : vector<16x1xf32>
    %188 = vector.broadcast %178 : vector<16x1xf32> to vector<16x128xf32>
    %189 = arith.subf %170, %188 : vector<16x128xf32>
    %cst_62 = arith.constant 9.99999996E-13 : f32
    %190 = vector.broadcast %cst_62 : f32 to vector<16x1xf32>
    %191 = arith.addf %187, %190 : vector<16x1xf32>
    %192 = math.rsqrt %191 : vector<16x1xf32>
    %193 = vector.broadcast %192 : vector<16x1xf32> to vector<16x128xf32>
    %194 = arith.mulf %189, %193 : vector<16x128xf32>
    %195 = vector.broadcast %172 : vector<1x128xf32> to vector<16x128xf32>
    %196 = arith.mulf %194, %195 : vector<16x128xf32>
    %197 = vector.broadcast %174 : vector<1x128xf32> to vector<16x128xf32>
    %198 = arith.addf %196, %197 : vector<16x128xf32>
    %c0_63 = arith.constant 0 : index
    %c0_64 = arith.constant 0 : index
    %c0_65 = arith.constant 0 : index
    %199 = vector.load %arg12[%c0_63, %c0_64, %c0_65] : memref<2x128x256xbf16, #tpu.memory_space<vmem>>, vector<1x128x256xbf16>
    %200 = vector.shape_cast %199 : vector<1x128x256xbf16> to vector<128x256xbf16>
    %c0_66 = arith.constant 0 : index
    %c0_67 = arith.constant 0 : index
    %c0_68 = arith.constant 0 : index
    %201 = vector.load %arg13[%c0_66, %c0_67, %c0_68] : memref<2x1x256xf32, #tpu.memory_space<vmem>>, vector<1x1x256xf32>
    %202 = vector.shape_cast %201 : vector<1x1x256xf32> to vector<1x256xf32>
    %203 = arith.truncf %198 : vector<16x128xf32> to vector<16x128xbf16>
    %cst_69 = arith.constant dense<0.000000e+00> : vector<16x256xf32>
    %204 = tpu.matmul %203, %200, %cst_69 {dimension_numbers = #tpu.dot_dimension_numbers<[1], [0], [0], [1], [0, 0, 1, 1], [], []>} : vector<16x128xbf16>, vector<128x256xbf16>, vector<16x256xf32> -> vector<16x256xf32>
    %205 = vector.broadcast %202 : vector<1x256xf32> to vector<16x256xf32>
    %206 = arith.addf %204, %205 : vector<16x256xf32>
    %207 = arith.mulf %206, %206 : vector<16x256xf32>
    %208 = arith.mulf %206, %207 : vector<16x256xf32>
    %cst_70 = arith.constant 4.471500e-02 : f32
    %209 = vector.broadcast %cst_70 : f32 to vector<16x256xf32>
    %210 = arith.mulf %209, %208 : vector<16x256xf32>
    %211 = arith.addf %206, %210 : vector<16x256xf32>
    %cst_71 = arith.constant 0.797884583 : f32
    %212 = vector.broadcast %cst_71 : f32 to vector<16x256xf32>
    %213 = arith.mulf %212, %211 : vector<16x256xf32>
    %214 = math.tanh %213 : vector<16x256xf32>
    %cst_72 = arith.constant 1.000000e+00 : f32
    %215 = vector.broadcast %cst_72 : f32 to vector<16x256xf32>
    %216 = arith.addf %215, %214 : vector<16x256xf32>
    %cst_73 = arith.constant 5.000000e-01 : f32
    %217 = vector.broadcast %cst_73 : f32 to vector<16x256xf32>
    %218 = arith.mulf %217, %216 : vector<16x256xf32>
    %219 = arith.mulf %206, %218 : vector<16x256xf32>
    %c0_74 = arith.constant 0 : index
    %c0_75 = arith.constant 0 : index
    %c0_76 = arith.constant 0 : index
    %220 = vector.load %arg14[%c0_74, %c0_75, %c0_76] : memref<2x256x128xbf16, #tpu.memory_space<vmem>>, vector<1x256x128xbf16>
    %221 = vector.shape_cast %220 : vector<1x256x128xbf16> to vector<256x128xbf16>
    %c0_77 = arith.constant 0 : index
    %c0_78 = arith.constant 0 : index
    %c0_79 = arith.constant 0 : index
    %222 = vector.load %arg15[%c0_77, %c0_78, %c0_79] : memref<2x1x128xf32, #tpu.memory_space<vmem>>, vector<1x1x128xf32>
    %223 = vector.shape_cast %222 : vector<1x1x128xf32> to vector<1x128xf32>
    %224 = arith.truncf %219 : vector<16x256xf32> to vector<16x256xbf16>
    %cst_80 = arith.constant dense<0.000000e+00> : vector<16x128xf32>
    %225 = tpu.matmul %224, %221, %cst_80 {dimension_numbers = #tpu.dot_dimension_numbers<[1], [0], [0], [1], [0, 0, 1, 1], [], []>} : vector<16x256xbf16>, vector<256x128xbf16>, vector<16x128xf32> -> vector<16x128xf32>
    %226 = vector.broadcast %223 : vector<1x128xf32> to vector<16x128xf32>
    %227 = arith.addf %225, %226 : vector<16x128xf32>
    %228 = arith.addf %227, %198 : vector<16x128xf32>
    %c0_81 = arith.constant 0 : index
    %c0_82 = arith.constant 0 : index
    %c0_83 = arith.constant 0 : index
    %229 = vector.load %arg16[%c0_81, %c0_82, %c0_83] : memref<2x1x128xf32, #tpu.memory_space<vmem>>, vector<1x1x128xf32>
    %230 = vector.shape_cast %229 : vector<1x1x128xf32> to vector<1x128xf32>
    %c0_84 = arith.constant 0 : index
    %c0_85 = arith.constant 0 : index
    %c0_86 = arith.constant 0 : index
    %231 = vector.load %arg17[%c0_84, %c0_85, %c0_86] : memref<2x1x128xf32, #tpu.memory_space<vmem>>, vector<1x1x128xf32>
    %232 = vector.shape_cast %231 : vector<1x1x128xf32> to vector<1x128xf32>
    %cst_87 = arith.constant dense<0.000000e+00> : vector<16xf32>
    %233 = vector.multi_reduction <add>, %228, %cst_87 [1] : vector<16x128xf32> to vector<16xf32>
    %234 = vector.shape_cast %233 : vector<16xf32> to vector<16x1xf32>
    %cst_88 = arith.constant 1.280000e+02 : f32
    %235 = vector.broadcast %cst_88 : f32 to vector<16x1xf32>
    %236 = arith.divf %234, %235 : vector<16x1xf32>
    %237 = vector.broadcast %236 : vector<16x1xf32> to vector<16x128xf32>
    %238 = arith.subf %228, %237 : vector<16x128xf32>
    %239 = vector.broadcast %236 : vector<16x1xf32> to vector<16x128xf32>
    %240 = arith.subf %228, %239 : vector<16x128xf32>
    %241 = arith.mulf %238, %240 : vector<16x128xf32>
    %cst_89 = arith.constant dense<0.000000e+00> : vector<16xf32>
    %242 = vector.multi_reduction <add>, %241, %cst_89 [1] : vector<16x128xf32> to vector<16xf32>
    %243 = vector.shape_cast %242 : vector<16xf32> to vector<16x1xf32>
    %cst_90 = arith.constant 1.280000e+02 : f32
    %244 = vector.broadcast %cst_90 : f32 to vector<16x1xf32>
    %245 = arith.divf %243, %244 : vector<16x1xf32>
    %246 = vector.broadcast %236 : vector<16x1xf32> to vector<16x128xf32>
    %247 = arith.subf %228, %246 : vector<16x128xf32>
    %cst_91 = arith.constant 9.99999996E-13 : f32
    %248 = vector.broadcast %cst_91 : f32 to vector<16x1xf32>
    %249 = arith.addf %245, %248 : vector<16x1xf32>
    %250 = math.rsqrt %249 : vector<16x1xf32>
    %251 = vector.broadcast %250 : vector<16x1xf32> to vector<16x128xf32>
    %252 = arith.mulf %247, %251 : vector<16x128xf32>
    %253 = vector.broadcast %230 : vector<1x128xf32> to vector<16x128xf32>
    %254 = arith.mulf %252, %253 : vector<16x128xf32>
    %255 = vector.broadcast %232 : vector<1x128xf32> to vector<16x128xf32>
    %256 = arith.addf %254, %255 : vector<16x128xf32>
    %c1 = arith.constant 1 : index
    %c0_92 = arith.constant 0 : index
    %c0_93 = arith.constant 0 : index
    %257 = vector.load %arg6[%c1, %c0_92, %c0_93] : memref<2x128x384xbf16, #tpu.memory_space<vmem>>, vector<1x128x384xbf16>
    %258 = vector.shape_cast %257 : vector<1x128x384xbf16> to vector<128x384xbf16>
    %c1_94 = arith.constant 1 : index
    %c0_95 = arith.constant 0 : index
    %c0_96 = arith.constant 0 : index
    %259 = vector.load %arg8[%c1_94, %c0_95, %c0_96] : memref<2x128x128xbf16, #tpu.memory_space<vmem>>, vector<1x128x128xbf16>
    %260 = vector.shape_cast %259 : vector<1x128x128xbf16> to vector<128x128xbf16>
    %c1_97 = arith.constant 1 : index
    %c0_98 = arith.constant 0 : index
    %c0_99 = arith.constant 0 : index
    %261 = vector.load %arg7[%c1_97, %c0_98, %c0_99] : memref<2x1x384xf32, #tpu.memory_space<vmem>>, vector<1x1x384xf32>
    %262 = vector.shape_cast %261 : vector<1x1x384xf32> to vector<1x384xf32>
    %263 = arith.truncf %256 : vector<16x128xf32> to vector<16x128xbf16>
    %cst_100 = arith.constant dense<0.000000e+00> : vector<16x384xf32>
    %264 = tpu.matmul %263, %258, %cst_100 {dimension_numbers = #tpu.dot_dimension_numbers<[1], [0], [0], [1], [0, 0, 1, 1], [], []>} : vector<16x128xbf16>, vector<128x384xbf16>, vector<16x384xf32> -> vector<16x384xf32>
    %265 = vector.broadcast %262 : vector<1x384xf32> to vector<16x384xf32>
    %266 = arith.addf %264, %265 : vector<16x384xf32>
    %267 = vector.extract_strided_slice %266 {offsets = [0, 0], sizes = [16, 32], strides = [1, 1]} : vector<16x384xf32> to vector<16x32xf32>
    %268 = vector.shape_cast %267 : vector<16x32xf32> to vector<2x8x32xf32>
    %269 = arith.truncf %268 : vector<2x8x32xf32> to vector<2x8x32xbf16>
    %270 = vector.extract_strided_slice %266 {offsets = [0, 128], sizes = [16, 32], strides = [1, 1]} : vector<16x384xf32> to vector<16x32xf32>
    %271 = vector.shape_cast %270 : vector<16x32xf32> to vector<2x8x32xf32>
    %272 = arith.truncf %271 : vector<2x8x32xf32> to vector<2x8x32xbf16>
    %273 = vector.extract_strided_slice %266 {offsets = [0, 256], sizes = [16, 32], strides = [1, 1]} : vector<16x384xf32> to vector<16x32xf32>
    %274 = vector.shape_cast %273 : vector<16x32xf32> to vector<2x8x32xf32>
    %275 = arith.truncf %274 : vector<2x8x32xf32> to vector<2x8x32xbf16>
    "tpu.trace_start"() <{level = 10 : i32, message = "bsd,btd->bst"}> : () -> ()
    %cst_101 = arith.constant dense<0.000000e+00> : vector<2x8x8xf32>
    %276 = tpu.matmul %269, %272, %cst_101 {dimension_numbers = #tpu.dot_dimension_numbers<[2], [2], [1], [1], [0, 0, 0, 1, 1, 1], [0], [0]>} : vector<2x8x32xbf16>, vector<2x8x32xbf16>, vector<2x8x8xf32> -> vector<2x8x8xf32>
    "tpu.trace_stop"() : () -> ()
    %277 = arith.addf %276, %44 : vector<2x8x8xf32>
    %cst_102 = arith.constant dense<0xFF800000> : vector<2x8xf32>
    %278 = vector.multi_reduction <maximumf>, %277, %cst_102 [2] : vector<2x8x8xf32> to vector<2x8xf32>
    %279 = vector.shape_cast %278 : vector<2x8xf32> to vector<2x8x1xf32>
    %280 = vector.broadcast %279 : vector<2x8x1xf32> to vector<2x8x8xf32>
    %281 = arith.subf %277, %280 : vector<2x8x8xf32>
    %282 = math.exp %281 : vector<2x8x8xf32>
    %cst_103 = arith.constant dense<0.000000e+00> : vector<2x8xf32>
    %283 = vector.multi_reduction <add>, %282, %cst_103 [2] : vector<2x8x8xf32> to vector<2x8xf32>
    %284 = vector.shape_cast %283 : vector<2x8xf32> to vector<2x8x1xf32>
    %285 = tpu.reciprocal %284 {approx = true} : vector<2x8x1xf32> -> vector<2x8x1xf32>
    %286 = vector.broadcast %285 : vector<2x8x1xf32> to vector<2x8x8xf32>
    %287 = arith.mulf %282, %286 : vector<2x8x8xf32>
    %288 = arith.truncf %287 : vector<2x8x8xf32> to vector<2x8x8xbf16>
    "tpu.trace_start"() <{level = 10 : i32, message = "bst,btd->bsd"}> : () -> ()
    %cst_104 = arith.constant dense<0.000000e+00> : vector<2x8x32xf32>
    %289 = tpu.matmul %288, %275, %cst_104 {dimension_numbers = #tpu.dot_dimension_numbers<[2], [1], [1], [2], [0, 0, 0, 1, 1, 2], [0], [0]>} : vector<2x8x8xbf16>, vector<2x8x32xbf16>, vector<2x8x32xf32> -> vector<2x8x32xf32>
    "tpu.trace_stop"() : () -> ()
    %290 = vector.shape_cast %289 : vector<2x8x32xf32> to vector<16x32xf32>
    %291 = arith.truncf %290 : vector<16x32xf32> to vector<16x32xbf16>
    %292 = vector.extract_strided_slice %260 {offsets = [0, 0], sizes = [32, 128], strides = [1, 1]} : vector<128x128xbf16> to vector<32x128xbf16>
    %cst_105 = arith.constant dense<0.000000e+00> : vector<16x128xf32>
    %293 = tpu.matmul %291, %292, %cst_105 {dimension_numbers = #tpu.dot_dimension_numbers<[1], [0], [0], [1], [0, 0, 1, 1], [], []>} : vector<16x32xbf16>, vector<32x128xbf16>, vector<16x128xf32> -> vector<16x128xf32>
    %294 = vector.extract_strided_slice %266 {offsets = [0, 32], sizes = [16, 32], strides = [1, 1]} : vector<16x384xf32> to vector<16x32xf32>
    %295 = vector.shape_cast %294 : vector<16x32xf32> to vector<2x8x32xf32>
    %296 = arith.truncf %295 : vector<2x8x32xf32> to vector<2x8x32xbf16>
    %297 = vector.extract_strided_slice %266 {offsets = [0, 160], sizes = [16, 32], strides = [1, 1]} : vector<16x384xf32> to vector<16x32xf32>
    %298 = vector.shape_cast %297 : vector<16x32xf32> to vector<2x8x32xf32>
    %299 = arith.truncf %298 : vector<2x8x32xf32> to vector<2x8x32xbf16>
    %300 = vector.extract_strided_slice %266 {offsets = [0, 288], sizes = [16, 32], strides = [1, 1]} : vector<16x384xf32> to vector<16x32xf32>
    %301 = vector.shape_cast %300 : vector<16x32xf32> to vector<2x8x32xf32>
    %302 = arith.truncf %301 : vector<2x8x32xf32> to vector<2x8x32xbf16>
    "tpu.trace_start"() <{level = 10 : i32, message = "bsd,btd->bst"}> : () -> ()
    %cst_106 = arith.constant dense<0.000000e+00> : vector<2x8x8xf32>
    %303 = tpu.matmul %296, %299, %cst_106 {dimension_numbers = #tpu.dot_dimension_numbers<[2], [2], [1], [1], [0, 0, 0, 1, 1, 1], [0], [0]>} : vector<2x8x32xbf16>, vector<2x8x32xbf16>, vector<2x8x8xf32> -> vector<2x8x8xf32>
    "tpu.trace_stop"() : () -> ()
    %304 = arith.addf %303, %44 : vector<2x8x8xf32>
    %cst_107 = arith.constant dense<0xFF800000> : vector<2x8xf32>
    %305 = vector.multi_reduction <maximumf>, %304, %cst_107 [2] : vector<2x8x8xf32> to vector<2x8xf32>
    %306 = vector.shape_cast %305 : vector<2x8xf32> to vector<2x8x1xf32>
    %307 = vector.broadcast %306 : vector<2x8x1xf32> to vector<2x8x8xf32>
    %308 = arith.subf %304, %307 : vector<2x8x8xf32>
    %309 = math.exp %308 : vector<2x8x8xf32>
    %cst_108 = arith.constant dense<0.000000e+00> : vector<2x8xf32>
    %310 = vector.multi_reduction <add>, %309, %cst_108 [2] : vector<2x8x8xf32> to vector<2x8xf32>
    %311 = vector.shape_cast %310 : vector<2x8xf32> to vector<2x8x1xf32>
    %312 = tpu.reciprocal %311 {approx = true} : vector<2x8x1xf32> -> vector<2x8x1xf32>
    %313 = vector.broadcast %312 : vector<2x8x1xf32> to vector<2x8x8xf32>
    %314 = arith.mulf %309, %313 : vector<2x8x8xf32>
    %315 = arith.truncf %314 : vector<2x8x8xf32> to vector<2x8x8xbf16>
    "tpu.trace_start"() <{level = 10 : i32, message = "bst,btd->bsd"}> : () -> ()
    %cst_109 = arith.constant dense<0.000000e+00> : vector<2x8x32xf32>
    %316 = tpu.matmul %315, %302, %cst_109 {dimension_numbers = #tpu.dot_dimension_numbers<[2], [1], [1], [2], [0, 0, 0, 1, 1, 2], [0], [0]>} : vector<2x8x8xbf16>, vector<2x8x32xbf16>, vector<2x8x32xf32> -> vector<2x8x32xf32>
    "tpu.trace_stop"() : () -> ()
    %317 = vector.shape_cast %316 : vector<2x8x32xf32> to vector<16x32xf32>
    %318 = arith.truncf %317 : vector<16x32xf32> to vector<16x32xbf16>
    %319 = vector.extract_strided_slice %260 {offsets = [32, 0], sizes = [32, 128], strides = [1, 1]} : vector<128x128xbf16> to vector<32x128xbf16>
    %cst_110 = arith.constant dense<0.000000e+00> : vector<16x128xf32>
    %320 = tpu.matmul %318, %319, %cst_110 {dimension_numbers = #tpu.dot_dimension_numbers<[1], [0], [0], [1], [0, 0, 1, 1], [], []>} : vector<16x32xbf16>, vector<32x128xbf16>, vector<16x128xf32> -> vector<16x128xf32>
    %321 = arith.addf %293, %320 : vector<16x128xf32>
    %322 = vector.extract_strided_slice %266 {offsets = [0, 64], sizes = [16, 32], strides = [1, 1]} : vector<16x384xf32> to vector<16x32xf32>
    %323 = vector.shape_cast %322 : vector<16x32xf32> to vector<2x8x32xf32>
    %324 = arith.truncf %323 : vector<2x8x32xf32> to vector<2x8x32xbf16>
    %325 = vector.extract_strided_slice %266 {offsets = [0, 192], sizes = [16, 32], strides = [1, 1]} : vector<16x384xf32> to vector<16x32xf32>
    %326 = vector.shape_cast %325 : vector<16x32xf32> to vector<2x8x32xf32>
    %327 = arith.truncf %326 : vector<2x8x32xf32> to vector<2x8x32xbf16>
    %328 = vector.extract_strided_slice %266 {offsets = [0, 320], sizes = [16, 32], strides = [1, 1]} : vector<16x384xf32> to vector<16x32xf32>
    %329 = vector.shape_cast %328 : vector<16x32xf32> to vector<2x8x32xf32>
    %330 = arith.truncf %329 : vector<2x8x32xf32> to vector<2x8x32xbf16>
    "tpu.trace_start"() <{level = 10 : i32, message = "bsd,btd->bst"}> : () -> ()
    %cst_111 = arith.constant dense<0.000000e+00> : vector<2x8x8xf32>
    %331 = tpu.matmul %324, %327, %cst_111 {dimension_numbers = #tpu.dot_dimension_numbers<[2], [2], [1], [1], [0, 0, 0, 1, 1, 1], [0], [0]>} : vector<2x8x32xbf16>, vector<2x8x32xbf16>, vector<2x8x8xf32> -> vector<2x8x8xf32>
    "tpu.trace_stop"() : () -> ()
    %332 = arith.addf %331, %44 : vector<2x8x8xf32>
    %cst_112 = arith.constant dense<0xFF800000> : vector<2x8xf32>
    %333 = vector.multi_reduction <maximumf>, %332, %cst_112 [2] : vector<2x8x8xf32> to vector<2x8xf32>
    %334 = vector.shape_cast %333 : vector<2x8xf32> to vector<2x8x1xf32>
    %335 = vector.broadcast %334 : vector<2x8x1xf32> to vector<2x8x8xf32>
    %336 = arith.subf %332, %335 : vector<2x8x8xf32>
    %337 = math.exp %336 : vector<2x8x8xf32>
    %cst_113 = arith.constant dense<0.000000e+00> : vector<2x8xf32>
    %338 = vector.multi_reduction <add>, %337, %cst_113 [2] : vector<2x8x8xf32> to vector<2x8xf32>
    %339 = vector.shape_cast %338 : vector<2x8xf32> to vector<2x8x1xf32>
    %340 = tpu.reciprocal %339 {approx = true} : vector<2x8x1xf32> -> vector<2x8x1xf32>
    %341 = vector.broadcast %340 : vector<2x8x1xf32> to vector<2x8x8xf32>
    %342 = arith.mulf %337, %341 : vector<2x8x8xf32>
    %343 = arith.truncf %342 : vector<2x8x8xf32> to vector<2x8x8xbf16>
    "tpu.trace_start"() <{level = 10 : i32, message = "bst,btd->bsd"}> : () -> ()
    %cst_114 = arith.constant dense<0.000000e+00> : vector<2x8x32xf32>
    %344 = tpu.matmul %343, %330, %cst_114 {dimension_numbers = #tpu.dot_dimension_numbers<[2], [1], [1], [2], [0, 0, 0, 1, 1, 2], [0], [0]>} : vector<2x8x8xbf16>, vector<2x8x32xbf16>, vector<2x8x32xf32> -> vector<2x8x32xf32>
    "tpu.trace_stop"() : () -> ()
    %345 = vector.shape_cast %344 : vector<2x8x32xf32> to vector<16x32xf32>
    %346 = arith.truncf %345 : vector<16x32xf32> to vector<16x32xbf16>
    %347 = vector.extract_strided_slice %260 {offsets = [64, 0], sizes = [32, 128], strides = [1, 1]} : vector<128x128xbf16> to vector<32x128xbf16>
    %cst_115 = arith.constant dense<0.000000e+00> : vector<16x128xf32>
    %348 = tpu.matmul %346, %347, %cst_115 {dimension_numbers = #tpu.dot_dimension_numbers<[1], [0], [0], [1], [0, 0, 1, 1], [], []>} : vector<16x32xbf16>, vector<32x128xbf16>, vector<16x128xf32> -> vector<16x128xf32>
    %349 = arith.addf %321, %348 : vector<16x128xf32>
    %350 = vector.extract_strided_slice %266 {offsets = [0, 96], sizes = [16, 32], strides = [1, 1]} : vector<16x384xf32> to vector<16x32xf32>
    %351 = vector.shape_cast %350 : vector<16x32xf32> to vector<2x8x32xf32>
    %352 = arith.truncf %351 : vector<2x8x32xf32> to vector<2x8x32xbf16>
    %353 = vector.extract_strided_slice %266 {offsets = [0, 224], sizes = [16, 32], strides = [1, 1]} : vector<16x384xf32> to vector<16x32xf32>
    %354 = vector.shape_cast %353 : vector<16x32xf32> to vector<2x8x32xf32>
    %355 = arith.truncf %354 : vector<2x8x32xf32> to vector<2x8x32xbf16>
    %356 = vector.extract_strided_slice %266 {offsets = [0, 352], sizes = [16, 32], strides = [1, 1]} : vector<16x384xf32> to vector<16x32xf32>
    %357 = vector.shape_cast %356 : vector<16x32xf32> to vector<2x8x32xf32>
    %358 = arith.truncf %357 : vector<2x8x32xf32> to vector<2x8x32xbf16>
    "tpu.trace_start"() <{level = 10 : i32, message = "bsd,btd->bst"}> : () -> ()
    %cst_116 = arith.constant dense<0.000000e+00> : vector<2x8x8xf32>
    %359 = tpu.matmul %352, %355, %cst_116 {dimension_numbers = #tpu.dot_dimension_numbers<[2], [2], [1], [1], [0, 0, 0, 1, 1, 1], [0], [0]>} : vector<2x8x32xbf16>, vector<2x8x32xbf16>, vector<2x8x8xf32> -> vector<2x8x8xf32>
    "tpu.trace_stop"() : () -> ()
    %360 = arith.addf %359, %44 : vector<2x8x8xf32>
    %cst_117 = arith.constant dense<0xFF800000> : vector<2x8xf32>
    %361 = vector.multi_reduction <maximumf>, %360, %cst_117 [2] : vector<2x8x8xf32> to vector<2x8xf32>
    %362 = vector.shape_cast %361 : vector<2x8xf32> to vector<2x8x1xf32>
    %363 = vector.broadcast %362 : vector<2x8x1xf32> to vector<2x8x8xf32>
    %364 = arith.subf %360, %363 : vector<2x8x8xf32>
    %365 = math.exp %364 : vector<2x8x8xf32>
    %cst_118 = arith.constant dense<0.000000e+00> : vector<2x8xf32>
    %366 = vector.multi_reduction <add>, %365, %cst_118 [2] : vector<2x8x8xf32> to vector<2x8xf32>
    %367 = vector.shape_cast %366 : vector<2x8xf32> to vector<2x8x1xf32>
    %368 = tpu.reciprocal %367 {approx = true} : vector<2x8x1xf32> -> vector<2x8x1xf32>
    %369 = vector.broadcast %368 : vector<2x8x1xf32> to vector<2x8x8xf32>
    %370 = arith.mulf %365, %369 : vector<2x8x8xf32>
    %371 = arith.truncf %370 : vector<2x8x8xf32> to vector<2x8x8xbf16>
    "tpu.trace_start"() <{level = 10 : i32, message = "bst,btd->bsd"}> : () -> ()
    %cst_119 = arith.constant dense<0.000000e+00> : vector<2x8x32xf32>
    %372 = tpu.matmul %371, %358, %cst_119 {dimension_numbers = #tpu.dot_dimension_numbers<[2], [1], [1], [2], [0, 0, 0, 1, 1, 2], [0], [0]>} : vector<2x8x8xbf16>, vector<2x8x32xbf16>, vector<2x8x32xf32> -> vector<2x8x32xf32>
    "tpu.trace_stop"() : () -> ()
    %373 = vector.shape_cast %372 : vector<2x8x32xf32> to vector<16x32xf32>
    %374 = arith.truncf %373 : vector<16x32xf32> to vector<16x32xbf16>
    %375 = vector.extract_strided_slice %260 {offsets = [96, 0], sizes = [32, 128], strides = [1, 1]} : vector<128x128xbf16> to vector<32x128xbf16>
    %cst_120 = arith.constant dense<0.000000e+00> : vector<16x128xf32>
    %376 = tpu.matmul %374, %375, %cst_120 {dimension_numbers = #tpu.dot_dimension_numbers<[1], [0], [0], [1], [0, 0, 1, 1], [], []>} : vector<16x32xbf16>, vector<32x128xbf16>, vector<16x128xf32> -> vector<16x128xf32>
    %377 = arith.addf %349, %376 : vector<16x128xf32>
    %c1_121 = arith.constant 1 : index
    %c0_122 = arith.constant 0 : index
    %c0_123 = arith.constant 0 : index
    %378 = vector.load %arg9[%c1_121, %c0_122, %c0_123] : memref<2x1x128xf32, #tpu.memory_space<vmem>>, vector<1x1x128xf32>
    %379 = vector.shape_cast %378 : vector<1x1x128xf32> to vector<1x128xf32>
    %380 = vector.broadcast %379 : vector<1x128xf32> to vector<16x128xf32>
    %381 = arith.addf %377, %380 : vector<16x128xf32>
    %382 = arith.addf %381, %256 : vector<16x128xf32>
    %c1_124 = arith.constant 1 : index
    %c0_125 = arith.constant 0 : index
    %c0_126 = arith.constant 0 : index
    %383 = vector.load %arg10[%c1_124, %c0_125, %c0_126] : memref<2x1x128xf32, #tpu.memory_space<vmem>>, vector<1x1x128xf32>
    %384 = vector.shape_cast %383 : vector<1x1x128xf32> to vector<1x128xf32>
    %c1_127 = arith.constant 1 : index
    %c0_128 = arith.constant 0 : index
    %c0_129 = arith.constant 0 : index
    %385 = vector.load %arg11[%c1_127, %c0_128, %c0_129] : memref<2x1x128xf32, #tpu.memory_space<vmem>>, vector<1x1x128xf32>
    %386 = vector.shape_cast %385 : vector<1x1x128xf32> to vector<1x128xf32>
    %cst_130 = arith.constant dense<0.000000e+00> : vector<16xf32>
    %387 = vector.multi_reduction <add>, %382, %cst_130 [1] : vector<16x128xf32> to vector<16xf32>
    %388 = vector.shape_cast %387 : vector<16xf32> to vector<16x1xf32>
    %cst_131 = arith.constant 1.280000e+02 : f32
    %389 = vector.broadcast %cst_131 : f32 to vector<16x1xf32>
    %390 = arith.divf %388, %389 : vector<16x1xf32>
    %391 = vector.broadcast %390 : vector<16x1xf32> to vector<16x128xf32>
    %392 = arith.subf %382, %391 : vector<16x128xf32>
    %393 = vector.broadcast %390 : vector<16x1xf32> to vector<16x128xf32>
    %394 = arith.subf %382, %393 : vector<16x128xf32>
    %395 = arith.mulf %392, %394 : vector<16x128xf32>
    %cst_132 = arith.constant dense<0.000000e+00> : vector<16xf32>
    %396 = vector.multi_reduction <add>, %395, %cst_132 [1] : vector<16x128xf32> to vector<16xf32>
    %397 = vector.shape_cast %396 : vector<16xf32> to vector<16x1xf32>
    %cst_133 = arith.constant 1.280000e+02 : f32
    %398 = vector.broadcast %cst_133 : f32 to vector<16x1xf32>
    %399 = arith.divf %397, %398 : vector<16x1xf32>
    %400 = vector.broadcast %390 : vector<16x1xf32> to vector<16x128xf32>
    %401 = arith.subf %382, %400 : vector<16x128xf32>
    %cst_134 = arith.constant 9.99999996E-13 : f32
    %402 = vector.broadcast %cst_134 : f32 to vector<16x1xf32>
    %403 = arith.addf %399, %402 : vector<16x1xf32>
    %404 = math.rsqrt %403 : vector<16x1xf32>
    %405 = vector.broadcast %404 : vector<16x1xf32> to vector<16x128xf32>
    %406 = arith.mulf %401, %405 : vector<16x128xf32>
    %407 = vector.broadcast %384 : vector<1x128xf32> to vector<16x128xf32>
    %408 = arith.mulf %406, %407 : vector<16x128xf32>
    %409 = vector.broadcast %386 : vector<1x128xf32> to vector<16x128xf32>
    %410 = arith.addf %408, %409 : vector<16x128xf32>
    %c1_135 = arith.constant 1 : index
    %c0_136 = arith.constant 0 : index
    %c0_137 = arith.constant 0 : index
    %411 = vector.load %arg12[%c1_135, %c0_136, %c0_137] : memref<2x128x256xbf16, #tpu.memory_space<vmem>>, vector<1x128x256xbf16>
    %412 = vector.shape_cast %411 : vector<1x128x256xbf16> to vector<128x256xbf16>
    %c1_138 = arith.constant 1 : index
    %c0_139 = arith.constant 0 : index
    %c0_140 = arith.constant 0 : index
    %413 = vector.load %arg13[%c1_138, %c0_139, %c0_140] : memref<2x1x256xf32, #tpu.memory_space<vmem>>, vector<1x1x256xf32>
    %414 = vector.shape_cast %413 : vector<1x1x256xf32> to vector<1x256xf32>
    %415 = arith.truncf %410 : vector<16x128xf32> to vector<16x128xbf16>
    %cst_141 = arith.constant dense<0.000000e+00> : vector<16x256xf32>
    %416 = tpu.matmul %415, %412, %cst_141 {dimension_numbers = #tpu.dot_dimension_numbers<[1], [0], [0], [1], [0, 0, 1, 1], [], []>} : vector<16x128xbf16>, vector<128x256xbf16>, vector<16x256xf32> -> vector<16x256xf32>
    %417 = vector.broadcast %414 : vector<1x256xf32> to vector<16x256xf32>
    %418 = arith.addf %416, %417 : vector<16x256xf32>
    %419 = arith.mulf %418, %418 : vector<16x256xf32>
    %420 = arith.mulf %418, %419 : vector<16x256xf32>
    %cst_142 = arith.constant 4.471500e-02 : f32
    %421 = vector.broadcast %cst_142 : f32 to vector<16x256xf32>
    %422 = arith.mulf %421, %420 : vector<16x256xf32>
    %423 = arith.addf %418, %422 : vector<16x256xf32>
    %cst_143 = arith.constant 0.797884583 : f32
    %424 = vector.broadcast %cst_143 : f32 to vector<16x256xf32>
    %425 = arith.mulf %424, %423 : vector<16x256xf32>
    %426 = math.tanh %425 : vector<16x256xf32>
    %cst_144 = arith.constant 1.000000e+00 : f32
    %427 = vector.broadcast %cst_144 : f32 to vector<16x256xf32>
    %428 = arith.addf %427, %426 : vector<16x256xf32>
    %cst_145 = arith.constant 5.000000e-01 : f32
    %429 = vector.broadcast %cst_145 : f32 to vector<16x256xf32>
    %430 = arith.mulf %429, %428 : vector<16x256xf32>
    %431 = arith.mulf %418, %430 : vector<16x256xf32>
    %c1_146 = arith.constant 1 : index
    %c0_147 = arith.constant 0 : index
    %c0_148 = arith.constant 0 : index
    %432 = vector.load %arg14[%c1_146, %c0_147, %c0_148] : memref<2x256x128xbf16, #tpu.memory_space<vmem>>, vector<1x256x128xbf16>
    %433 = vector.shape_cast %432 : vector<1x256x128xbf16> to vector<256x128xbf16>
    %c1_149 = arith.constant 1 : index
    %c0_150 = arith.constant 0 : index
    %c0_151 = arith.constant 0 : index
    %434 = vector.load %arg15[%c1_149, %c0_150, %c0_151] : memref<2x1x128xf32, #tpu.memory_space<vmem>>, vector<1x1x128xf32>
    %435 = vector.shape_cast %434 : vector<1x1x128xf32> to vector<1x128xf32>
    %436 = arith.truncf %431 : vector<16x256xf32> to vector<16x256xbf16>
    %cst_152 = arith.constant dense<0.000000e+00> : vector<16x128xf32>
    %437 = tpu.matmul %436, %433, %cst_152 {dimension_numbers = #tpu.dot_dimension_numbers<[1], [0], [0], [1], [0, 0, 1, 1], [], []>} : vector<16x256xbf16>, vector<256x128xbf16>, vector<16x128xf32> -> vector<16x128xf32>
    %438 = vector.broadcast %435 : vector<1x128xf32> to vector<16x128xf32>
    %439 = arith.addf %437, %438 : vector<16x128xf32>
    %440 = arith.addf %439, %410 : vector<16x128xf32>
    %c1_153 = arith.constant 1 : index
    %c0_154 = arith.constant 0 : index
    %c0_155 = arith.constant 0 : index
    %441 = vector.load %arg16[%c1_153, %c0_154, %c0_155] : memref<2x1x128xf32, #tpu.memory_space<vmem>>, vector<1x1x128xf32>
    %442 = vector.shape_cast %441 : vector<1x1x128xf32> to vector<1x128xf32>
    %c1_156 = arith.constant 1 : index
    %c0_157 = arith.constant 0 : index
    %c0_158 = arith.constant 0 : index
    %443 = vector.load %arg17[%c1_156, %c0_157, %c0_158] : memref<2x1x128xf32, #tpu.memory_space<vmem>>, vector<1x1x128xf32>
    %444 = vector.shape_cast %443 : vector<1x1x128xf32> to vector<1x128xf32>
    %cst_159 = arith.constant dense<0.000000e+00> : vector<16xf32>
    %445 = vector.multi_reduction <add>, %440, %cst_159 [1] : vector<16x128xf32> to vector<16xf32>
    %446 = vector.shape_cast %445 : vector<16xf32> to vector<16x1xf32>
    %cst_160 = arith.constant 1.280000e+02 : f32
    %447 = vector.broadcast %cst_160 : f32 to vector<16x1xf32>
    %448 = arith.divf %446, %447 : vector<16x1xf32>
    %449 = vector.broadcast %448 : vector<16x1xf32> to vector<16x128xf32>
    %450 = arith.subf %440, %449 : vector<16x128xf32>
    %451 = vector.broadcast %448 : vector<16x1xf32> to vector<16x128xf32>
    %452 = arith.subf %440, %451 : vector<16x128xf32>
    %453 = arith.mulf %450, %452 : vector<16x128xf32>
    %cst_161 = arith.constant dense<0.000000e+00> : vector<16xf32>
    %454 = vector.multi_reduction <add>, %453, %cst_161 [1] : vector<16x128xf32> to vector<16xf32>
    %455 = vector.shape_cast %454 : vector<16xf32> to vector<16x1xf32>
    %cst_162 = arith.constant 1.280000e+02 : f32
    %456 = vector.broadcast %cst_162 : f32 to vector<16x1xf32>
    %457 = arith.divf %455, %456 : vector<16x1xf32>
    %458 = vector.broadcast %448 : vector<16x1xf32> to vector<16x128xf32>
    %459 = arith.subf %440, %458 : vector<16x128xf32>
    %cst_163 = arith.constant 9.99999996E-13 : f32
    %460 = vector.broadcast %cst_163 : f32 to vector<16x1xf32>
    %461 = arith.addf %457, %460 : vector<16x1xf32>
    %462 = math.rsqrt %461 : vector<16x1xf32>
    %463 = vector.broadcast %462 : vector<16x1xf32> to vector<16x128xf32>
    %464 = arith.mulf %459, %463 : vector<16x128xf32>
    %465 = vector.broadcast %442 : vector<1x128xf32> to vector<16x128xf32>
    %466 = arith.mulf %464, %465 : vector<16x128xf32>
    %467 = vector.broadcast %444 : vector<1x128xf32> to vector<16x128xf32>
    %468 = arith.addf %466, %467 : vector<16x128xf32>
    %469 = vector.extract_strided_slice %468 {offsets = [0, 0], sizes = [1, 128], strides = [1, 1]} : vector<16x128xf32> to vector<1x128xf32>
    %470 = vector.extract_strided_slice %468 {offsets = [8, 0], sizes = [1, 128], strides = [1, 1]} : vector<16x128xf32> to vector<1x128xf32>
    %471 = tpu.concatenate %469, %470 in 0 : vector<1x128xf32>, vector<1x128xf32> -> vector<2x128xf32>
    %c0_164 = arith.constant 0 : index
    %c0_165 = arith.constant 0 : index
    %472 = vector.load %arg18[%c0_164, %c0_165] : memref<128x128xbf16, #tpu.memory_space<vmem>>, vector<128x128xbf16>
    %c0_166 = arith.constant 0 : index
    %c0_167 = arith.constant 0 : index
    %473 = vector.load %arg19[%c0_166, %c0_167] : memref<1x128xf32, #tpu.memory_space<vmem>>, vector<1x128xf32>
    %474 = arith.truncf %471 : vector<2x128xf32> to vector<2x128xbf16>
    %cst_168 = arith.constant dense<0.000000e+00> : vector<2x128xf32>
    %475 = tpu.matmul %474, %472, %cst_168 {dimension_numbers = #tpu.dot_dimension_numbers<[1], [0], [0], [1], [0, 0, 1, 1], [], []>} : vector<2x128xbf16>, vector<128x128xbf16>, vector<2x128xf32> -> vector<2x128xf32>
    %476 = vector.broadcast %473 : vector<1x128xf32> to vector<2x128xf32>
    %477 = arith.addf %475, %476 : vector<2x128xf32>
    %478 = math.tanh %477 : vector<2x128xf32>
    %c0_169 = arith.constant 0 : index
    %c0_170 = arith.constant 0 : index
    %479 = vector.load %arg20[%c0_169, %c0_170] : memref<1x128xf32, #tpu.memory_space<vmem>>, vector<1x128xf32>
    %480 = vector.broadcast %479 : vector<1x128xf32> to vector<2x128xf32>
    %481 = arith.mulf %478, %480 : vector<2x128xf32>
    %cst_171 = arith.constant dense<0.000000e+00> : vector<2xf32>
    %482 = vector.multi_reduction <add>, %481, %cst_171 [1] : vector<2x128xf32> to vector<2xf32>
    %483 = vector.shape_cast %482 : vector<2xf32> to vector<2x1xf32>
    %c0_172 = arith.constant 0 : index
    %c0_173 = arith.constant 0 : index
    %484 = vector.load %arg21[%c0_172, %c0_173] : memref<1x1xf32, #tpu.memory_space<vmem>>, vector<1x1xf32>
    %485 = vector.broadcast %484 : vector<1x1xf32> to vector<2x1xf32>
    %486 = arith.addf %483, %485 : vector<2x1xf32>
    %c0_174 = arith.constant 0 : index
    %c0_175 = arith.constant 0 : index
    %487 = vector.load %arg22[%c0_174, %c0_175] : memref<2x1xf32, #tpu.memory_space<vmem>>, vector<2x1xf32>
    tpu.vector_store %arg22[%c0_174, %c0_175], %486 {strides = array<i32>} : memref<2x1xf32, #tpu.memory_space<vmem>>, vector<2x1xf32>,
    return
  }
}

</mosaic_0001>

<llo_original>
// kernel: chemberta_forward.1
$region0: #{chemberta_forward.1}
  #allocation0 [shape = 'u32[]', space=smem, size = 0x4, offset = 0x4, fixed_abs, tag = 'smem constant byte address 0x4 - core index']
  #allocation1 [shape = 'u32[144,128]{1,0:T(1,128)}', space=vmem, size = 0x12000, scoped, tag = 'internal scratch']
  #allocation2 [shape = 'f32[1,1]{1,0:T(1,128)S(1)}', space=vmem, size = 0x200, scoped, tag = 'scoped memory for chemberta_forward.1']
  %s0 = inlined_call_operand.vmem [shape: s32[16,1], index: 0, kind: input, shape index: {}]
  %s1 = inlined_call_operand.vmem [shape: s32[2,1,8], index: 1, kind: input, shape index: {}]
  %s2 = inlined_call_operand.vmem [shape: bf16[128,128], index: 2, kind: input, shape index: {}]
  %s3 = inlined_call_operand.hbm [shape: f32[16,128], index: 3, kind: input, shape index: {}]
  %s4 = inlined_call_operand.hbm [shape: f32[1,128], index: 4, kind: input, shape index: {}]
  %s5 = inlined_call_operand.hbm [shape: f32[1,128], index: 5, kind: input, shape index: {}]
  %s6 = inlined_call_operand.hbm [shape: bf16[2,128,384], index: 6, kind: input, shape index: {}]
  %s7 = inlined_call_operand.vmem [shape: f32[2,1,384], index: 7, kind: input, shape index: {}]
  %s8 = inlined_call_operand.hbm [shape: bf16[2,128,128], index: 8, kind: input, shape index: {}]
  %s9 = inlined_call_operand.vmem [shape: f32[2,1,128], index: 9, kind: input, shape index: {}]
  %s10 = inlined_call_operand.hbm [shape: f32[2,1,128], index: 10, kind: input, shape index: {}]
  %s11 = inlined_call_operand.hbm [shape: f32[2,1,128], index: 11, kind: input, shape index: {}]
  %s12 = inlined_call_operand.hbm [shape: bf16[2,128,256], index: 12, kind: input, shape index: {}]
  %s13 = inlined_call_operand.vmem [shape: f32[2,1,256], index: 13, kind: input, shape index: {}]
  %s14 = inlined_call_operand.hbm [shape: bf16[2,256,128], index: 14, kind: input, shape index: {}]
  %s15 = inlined_call_operand.hbm [shape: f32[2,1,128], index: 15, kind: input, shape index: {}]
  %s16 = inlined_call_operand.hbm [shape: f32[2,1,128], index: 16, kind: input, shape index: {}]
  %s17 = inlined_call_operand.hbm [shape: f32[2,1,128], index: 17, kind: input, shape index: {}]
  %s18 = inlined_call_operand.hbm [shape: bf16[128,128], index: 18, kind: input, shape index: {}]
  %s19 = inlined_call_operand.hbm [shape: f32[1,128], index: 19, kind: input, shape index: {}]
  %s20 = inlined_call_operand.hbm [shape: f32[1,128], index: 20, kind: input, shape index: {}]
  %s21 = inlined_call_operand.<no memory space> [shape: f32[1,1], index: 21, kind: input, shape index: {}]
  %s22 = inlined_call_operand.vmem [shape: f32[2,1], index: 22, kind: output, shape index: {}]
  %s23 = sld [smem:[#allocation0]]
  $region158: #{chemberta_forward.1} parent=0
    _
  %s25 = ssub.s32 1, %s23
  %s26 = scalar_select 0, %s25, %s23
  %v27 = vstv %s21
  %28 = vst [vmem:[#allocation2] sm:$0x1] %v27
  $region1: #{chemberta_forward.1} parent=0
    #allocation3 [shape = 'u8[8192]{0}', space=vmem, size = 0x2000, scoped, tag = 'input window, operand 3, single buffered']
    #allocation4 [shape = 's32[1]{0}', space=sflag, size = 0x4, scoped, tag = 'scoped memory for chemberta_forward.1']
    #allocation5 [shape = 'u8[512]{0}', space=vmem, size = 0x400, scoped, tag = 'input window, operand 4, single buffered']
    #allocation6 [shape = 's32[1]{0}', space=sflag, size = 0x4, scoped, tag = 'scoped memory for chemberta_forward.1']
    #allocation7 [shape = 'u8[512]{0}', space=vmem, size = 0x400, scoped, tag = 'input window, operand 5, single buffered']
    #allocation8 [shape = 'u8[196608]{0}', space=vmem, size = 0x30000, scoped, tag = 'input window, operand 6, single buffered']
    #allocation9 [shape = 's32[1]{0}', space=sflag, size = 0x4, scoped, tag = 'scoped memory for chemberta_forward.1']
    #allocation10 [shape = 'u8[65536]{0}', space=vmem, size = 0x10000, scoped, tag = 'input window, operand 8, single buffered']
    #allocation11 [shape = 'u8[1024]{0}', space=vmem, size = 0x400, scoped, tag = 'input window, operand 10, single buffered']
    #allocation12 [shape = 's32[1]{0}', space=sflag, size = 0x4, scoped, tag = 'scoped memory for chemberta_forward.1']
    #allocation13 [shape = 'u8[1024]{0}', space=vmem, size = 0x400, scoped, tag = 'input window, operand 11, single buffered']
    #allocation14 [shape = 'u8[131072]{0}', space=vmem, size = 0x20000, scoped, tag = 'input window, operand 12, single buffered']
    #allocation15 [shape = 's32[1]{0}', space=sflag, size = 0x4, scoped, tag = 'scoped memory for chemberta_forward.1']
    #allocation16 [shape = 'u8[131072]{0}', space=vmem, size = 0x20000, scoped, tag = 'input window, operand 14, single buffered']
    #allocation17 [shape = 'u8[1024]{0}', space=vmem, size = 0x400, scoped, tag = 'input window, operand 15, single buffered']
    #allocation18 [shape = 's32[1]{0}', space=sflag, size = 0x4, scoped, tag = 'scoped memory for chemberta_forward.1']
    #allocation19 [shape = 'u8[1024]{0}', space=vmem, size = 0x400, scoped, tag = 'input window, operand 16, single buffered']
    #allocation20 [shape = 'u8[1024]{0}', space=vmem, size = 0x400, scoped, tag = 'input window, operand 17, single buffered']
    #allocation21 [shape = 's32[1]{0}', space=sflag, size = 0x4, scoped, tag = 'scoped memory for chemberta_forward.1']
    #allocation22 [shape = 'u8[32768]{0}', space=vmem, size = 0x8000, scoped, tag = 'input window, operand 18, single buffered']
    #allocation23 [shape = 'u8[512]{0}', space=vmem, size = 0x400, scoped, tag = 'input window, operand 19, single buffered']
    #allocation24 [shape = 's32[1]{0}', space=sflag, size = 0x4, scoped, tag = 'scoped memory for chemberta_forward.1']
    #allocation25 [shape = 'u8[512]{0}', space=vmem, size = 0x400, scoped, tag = 'input window, operand 20, single buffered']
    %29 = vsyncpa [#allocation4], 0
    %30 = vsyncpa [#allocation6], 0
    %31 = vsyncpa [#allocation9], 0
    %32 = vsyncpa [#allocation12], 0
    %33 = vsyncpa [#allocation15], 0
    %34 = vsyncpa [#allocation18], 0
    %35 = vsyncpa [#allocation21], 0
    %36 = vsyncpa [#allocation24], 0
    // Predicated region
    $region2: #{chemberta_forward.1} parent=1 // pred_check
      _
    $region3: #{chemberta_forward.1} parent=1 // pred_check_branch
      %38 = sbr.rel (0) target = $region5
    $region4: #{chemberta_forward.1} parent=1 // pred_region
      _
    $region5: #{chemberta_forward.1} parent=1 // pred_fallthru
      _
    // Predicated region
    $region6: #{chemberta_forward.1} parent=1 // pred_check
      _
    $region7: #{chemberta_forward.1} parent=1 // pred_check_branch
      %40 = sbr.rel (0) target = $region9
    $region8: #{chemberta_forward.1} parent=1 // pred_region
      _
    $region9: #{chemberta_forward.1} parent=1 // pred_fallthru
      _
    // Predicated region
    $region10: #{chemberta_forward.1} parent=1 // pred_check
      _
    $region11: #{chemberta_forward.1} parent=1 // pred_check_branch
      %42 = sbr.rel (0) target = $region13
    $region12: #{chemberta_forward.1} parent=1 // pred_region
      _
    $region13: #{chemberta_forward.1} parent=1 // pred_fallthru
      _
    // Predicated region
    $region14: #{chemberta_forward.1} parent=1 // pred_check
      _
    $region15: #{chemberta_forward.1} parent=1 // pred_check_branch
      %44 = sbr.rel (0) target = $region17
    $region16: #{chemberta_forward.1} parent=1 // pred_region
      %s46 = ssub.s32 256, 256
      %47 = vsyncadd [#allocation4], %s46
      %s48 = sshll.u32 [#allocation3], 4
      %s49 = int_to_ptr.vmem [resolvable:$true] %s48
      %54 = dma.hbm_to_vmem [thread:$0]  %s3, 256, %s49, [#allocation4], 128, 128, 8
    $region17: #{chemberta_forward.1} parent=1 // pred_fallthru
      _
    // Predicated region
    $region18: #{chemberta_forward.1} parent=1 // pred_check
      _
    $region19: #{chemberta_forward.1} parent=1 // pred_check_branch
      %56 = sbr.rel (0) target = $region21
    $region20: #{chemberta_forward.1} parent=1 // pred_region
      %s58 = ssub.s32 16, 16
      %59 = vsyncadd [#allocation6], %s58
      %s61 = sshll.u32 [#allocation5], 4
      %s62 = int_to_ptr.vmem [resolvable:$true] %s61
      %64 = dma.hbm_to_vmem [thread:$0]  %s4, 16, %s62, [#allocation6]
    $region21: #{chemberta_forward.1} parent=1 // pred_fallthru
      _
    // Predicated region
    $region22: #{chemberta_forward.1} parent=1 // pred_check
      _
    $region23: #{chemberta_forward.1} parent=1 // pred_check_branch
      %66 = sbr.rel (0) target = $region25
    $region24: #{chemberta_forward.1} parent=1 // pred_region
      %s68 = ssub.s32 16, 16
      %69 = vsyncadd [#allocation6], %s68
      %s71 = sshll.u32 [#allocation7], 4
      %s72 = int_to_ptr.vmem [resolvable:$true] %s71
      %74 = dma.hbm_to_vmem [thread:$0]  %s5, 16, %s72, [#allocation6]
    $region25: #{chemberta_forward.1} parent=1 // pred_fallthru
      _
    // Predicated region
    $region26: #{chemberta_forward.1} parent=1 // pred_check
      _
    $region27: #{chemberta_forward.1} parent=1 // pred_check_branch
      %76 = sbr.rel (0) target = $region29
    $region28: #{chemberta_forward.1} parent=1 // pred_region
      %s78 = ssub.s32 6144, 6144
      %79 = vsyncadd [#allocation9], %s78
      %s80 = sshll.u32 [#allocation8], 4
      %s81 = int_to_ptr.vmem [resolvable:$true] %s80
      %86 = dma.hbm_to_vmem [thread:$0]  %s6, 6144, %s81, [#allocation9], 192, 192, 12
    $region29: #{chemberta_forward.1} parent=1 // pred_fallthru
      _
    // Predicated region
    $region30: #{chemberta_forward.1} parent=1 // pred_check
      _
    $region31: #{chemberta_forward.1} parent=1 // pred_check_branch
      %88 = sbr.rel (0) target = $region33
    $region32: #{chemberta_forward.1} parent=1 // pred_region
      _
    $region33: #{chemberta_forward.1} parent=1 // pred_fallthru
      _
    // Predicated region
    $region34: #{chemberta_forward.1} parent=1 // pred_check
      _
    $region35: #{chemberta_forward.1} parent=1 // pred_check_branch
      %90 = sbr.rel (0) target = $region37
    $region36: #{chemberta_forward.1} parent=1 // pred_region
      %s92 = ssub.s32 2048, 2048
      %93 = vsyncadd [#allocation9], %s92
      %s94 = sshll.u32 [#allocation10], 4
      %s95 = int_to_ptr.vmem [resolvable:$true] %s94
      %100 = dma.hbm_to_vmem [thread:$0]  %s8, 2048, %s95, [#allocation9], 64, 64, 4
    $region37: #{chemberta_forward.1} parent=1 // pred_fallthru
      _
    // Predicated region
    $region38: #{chemberta_forward.1} parent=1 // pred_check
      _
    $region39: #{chemberta_forward.1} parent=1 // pred_check_branch
      %102 = sbr.rel (0) target = $region41
    $region40: #{chemberta_forward.1} parent=1 // pred_region
      _
    $region41: #{chemberta_forward.1} parent=1 // pred_fallthru
      _
    // Predicated region
    $region42: #{chemberta_forward.1} parent=1 // pred_check
      _
    $region43: #{chemberta_forward.1} parent=1 // pred_check_branch
      %104 = sbr.rel (0) target = $region45
    $region44: #{chemberta_forward.1} parent=1 // pred_region
      %s106 = ssub.s32 32, 32
      %107 = vsyncadd [#allocation12], %s106
      %s108 = sshll.u32 [#allocation11], 4
      %s109 = int_to_ptr.vmem [resolvable:$true] %s108
      %114 = dma.hbm_to_vmem [thread:$0]  %s10, 32, %s109, [#allocation12], 16, 16, 1
    $region45: #{chemberta_forward.1} parent=1 // pred_fallthru
      _
    // Predicated region
    $region46: #{chemberta_forward.1} parent=1 // pred_check
      _
    $region47: #{chemberta_forward.1} parent=1 // pred_check_branch
      %116 = sbr.rel (0) target = $region49
    $region48: #{chemberta_forward.1} parent=1 // pred_region
      %s118 = ssub.s32 32, 32
      %119 = vsyncadd [#allocation12], %s118
      %s120 = sshll.u32 [#allocation13], 4
      %s121 = int_to_ptr.vmem [resolvable:$true] %s120
      %126 = dma.hbm_to_vmem [thread:$0]  %s11, 32, %s121, [#allocation12], 16, 16, 1
    $region49: #{chemberta_forward.1} parent=1 // pred_fallthru
      _
    // Predicated region
    $region50: #{chemberta_forward.1} parent=1 // pred_check
      _
    $region51: #{chemberta_forward.1} parent=1 // pred_check_branch
      %128 = sbr.rel (0) target = $region53
    $region52: #{chemberta_forward.1} parent=1 // pred_region
      %s130 = ssub.s32 4096, 4096
      %131 = vsyncadd [#allocation15], %s130
      %s132 = sshll.u32 [#allocation14], 4
      %s133 = int_to_ptr.vmem [resolvable:$true] %s132
      %138 = dma.hbm_to_vmem [thread:$0]  %s12, 4096, %s133, [#allocation15], 128, 128, 8
    $region53: #{chemberta_forward.1} parent=1 // pred_fallthru
      _
    // Predicated region
    $region54: #{chemberta_forward.1} parent=1 // pred_check
      _
    $region55: #{chemberta_forward.1} parent=1 // pred_check_branch
      %140 = sbr.rel (0) target = $region57
    $region56: #{chemberta_forward.1} parent=1 // pred_region
      _
    $region57: #{chemberta_forward.1} parent=1 // pred_fallthru
      _
    // Predicated region
    $region58: #{chemberta_forward.1} parent=1 // pred_check
      _
    $region59: #{chemberta_forward.1} parent=1 // pred_check_branch
      %142 = sbr.rel (0) target = $region61
    $region60: #{chemberta_forward.1} parent=1 // pred_region
      %s144 = ssub.s32 4096, 4096
      %145 = vsyncadd [#allocation15], %s144
      %s146 = sshll.u32 [#allocation16], 4
      %s147 = int_to_ptr.vmem [resolvable:$true] %s146
      %152 = dma.hbm_to_vmem [thread:$0]  %s14, 4096, %s147, [#allocation15], 64, 64, 4
    $region61: #{chemberta_forward.1} parent=1 // pred_fallthru
      _
    // Predicated region
    $region62: #{chemberta_forward.1} parent=1 // pred_check
      _
    $region63: #{chemberta_forward.1} parent=1 // pred_check_branch
      %154 = sbr.rel (0) target = $region65
    $region64: #{chemberta_forward.1} parent=1 // pred_region
      %s156 = ssub.s32 32, 32
      %157 = vsyncadd [#allocation18], %s156
      %s158 = sshll.u32 [#allocation17], 4
      %s159 = int_to_ptr.vmem [resolvable:$true] %s158
      %164 = dma.hbm_to_vmem [thread:$0]  %s15, 32, %s159, [#allocation18], 16, 16, 1
    $region65: #{chemberta_forward.1} parent=1 // pred_fallthru
      _
    // Predicated region
    $region66: #{chemberta_forward.1} parent=1 // pred_check
      _
    $region67: #{chemberta_forward.1} parent=1 // pred_check_branch
      %166 = sbr.rel (0) target = $region69
    $region68: #{chemberta_forward.1} parent=1 // pred_region
      %s168 = ssub.s32 32, 32
      %169 = vsyncadd [#allocation18], %s168
      %s170 = sshll.u32 [#allocation19], 4
      %s171 = int_to_ptr.vmem [resolvable:$true] %s170
      %176 = dma.hbm_to_vmem [thread:$0]  %s16, 32, %s171, [#allocation18], 16, 16, 1
    $region69: #{chemberta_forward.1} parent=1 // pred_fallthru
      _
    // Predicated region
    $region70: #{chemberta_forward.1} parent=1 // pred_check
      _
    $region71: #{chemberta_forward.1} parent=1 // pred_check_branch
      %178 = sbr.rel (0) target = $region73
    $region72: #{chemberta_forward.1} parent=1 // pred_region
      %s180 = ssub.s32 32, 32
      %181 = vsyncadd [#allocation21], %s180
      %s182 = sshll.u32 [#allocation20], 4
      %s183 = int_to_ptr.vmem [resolvable:$true] %s182
      %188 = dma.hbm_to_vmem [thread:$0]  %s17, 32, %s183, [#allocation21], 16, 16, 1
    $region73: #{chemberta_forward.1} parent=1 // pred_fallthru
      _
    // Predicated region
    $region74: #{chemberta_forward.1} parent=1 // pred_check
      _
    $region75: #{chemberta_forward.1} parent=1 // pred_check_branch
      %190 = sbr.rel (0) target = $region77
    $region76: #{chemberta_forward.1} parent=1 // pred_region
      %s192 = ssub.s32 1024, 1024
      %193 = vsyncadd [#allocation21], %s192
      %s194 = sshll.u32 [#allocation22], 4
      %s195 = int_to_ptr.vmem [resolvable:$true] %s194
      %200 = dma.hbm_to_vmem [thread:$0]  %s18, 1024, %s195, [#allocation21], 64, 64, 4
    $region77: #{chemberta_forward.1} parent=1 // pred_fallthru
      _
    // Predicated region
    $region78: #{chemberta_forward.1} parent=1 // pred_check
      _
    $region79: #{chemberta_forward.1} parent=1 // pred_check_branch
      %202 = sbr.rel (0) target = $region81
    $region80: #{chemberta_forward.1} parent=1 // pred_region
      %s204 = ssub.s32 16, 16
      %205 = vsyncadd [#allocation24], %s204
      %s207 = sshll.u32 [#allocation23], 4
      %s208 = int_to_ptr.vmem [resolvable:$true] %s207
      %210 = dma.hbm_to_vmem [thread:$0]  %s19, 16, %s208, [#allocation24]
    $region81: #{chemberta_forward.1} parent=1 // pred_fallthru
      _
    // Predicated region
    $region82: #{chemberta_forward.1} parent=1 // pred_check
      _
    $region83: #{chemberta_forward.1} parent=1 // pred_check_branch
      %212 = sbr.rel (0) target = $region85
    $region84: #{chemberta_forward.1} parent=1 // pred_region
      %s214 = ssub.s32 16, 16
      %215 = vsyncadd [#allocation24], %s214
      %s217 = sshll.u32 [#allocation25], 4
      %s218 = int_to_ptr.vmem [resolvable:$true] %s217
      %220 = dma.hbm_to_vmem [thread:$0]  %s20, 16, %s218, [#allocation24]
    $region85: #{chemberta_forward.1} parent=1 // pred_fallthru
      _
    // Predicated region
    $region86: #{chemberta_forward.1} parent=1 // pred_check
      _
    $region87: #{chemberta_forward.1} parent=1 // pred_check_branch
      %222 = sbr.rel (0) target = $region89
    $region88: #{chemberta_forward.1} parent=1 // pred_region
      _
    $region89: #{chemberta_forward.1} parent=1 // pred_fallthru
      _
    // Predicated region
    $region90: #{chemberta_forward.1} parent=1 // pred_check
      _
    $region91: #{chemberta_forward.1} parent=1 // pred_check_branch
      %224 = sbr.rel (0) target = $region93
    $region92: #{chemberta_forward.1} parent=1 // pred_region
      %225 = dma.done [#allocation4], 256
    $region93: #{chemberta_forward.1} parent=1 // pred_fallthru
      _
    // Predicated region
    $region94: #{chemberta_forward.1} parent=1 // pred_check
      _
    $region95: #{chemberta_forward.1} parent=1 // pred_check_branch
      %227 = sbr.rel (0) target = $region97
    $region96: #{chemberta_forward.1} parent=1 // pred_region
      %228 = dma.done [#allocation6], 16
    $region97: #{chemberta_forward.1} parent=1 // pred_fallthru
      _
    // Predicated region
    $region98: #{chemberta_forward.1} parent=1 // pred_check
      _
    $region99: #{chemberta_forward.1} parent=1 // pred_check_branch
      %230 = sbr.rel (0) target = $region101
    $region100: #{chemberta_forward.1} parent=1 // pred_region
      %231 = dma.done [#allocation6], 16
    $region101: #{chemberta_forward.1} parent=1 // pred_fallthru
      _
    // Predicated region
    $region102: #{chemberta_forward.1} parent=1 // pred_check
      _
    $region103: #{chemberta_forward.1} parent=1 // pred_check_branch
      %233 = sbr.rel (0) target = $region105
    $region104: #{chemberta_forward.1} parent=1 // pred_region
      %234 = dma.done [#allocation9], 6144
    $region105: #{chemberta_forward.1} parent=1 // pred_fallthru
      _
    // Predicated region
    $region106: #{chemberta_forward.1} parent=1 // pred_check
      _
    $region107: #{chemberta_forward.1} parent=1 // pred_check_branch
      %236 = sbr.rel (0) target = $region109
    $region108: #{chemberta_forward.1} parent=1 // pred_region
      %237 = dma.done [#allocation9], 2048
    $region109: #{chemberta_forward.1} parent=1 // pred_fallthru
      _
    // Predicated region
    $region110: #{chemberta_forward.1} parent=1 // pred_check
      _
    $region111: #{chemberta_forward.1} parent=1 // pred_check_branch
      %239 = sbr.rel (0) target = $region113
    $region112: #{chemberta_forward.1} parent=1 // pred_region
      %240 = dma.done [#allocation12], 32
    $region113: #{chemberta_forward.1} parent=1 // pred_fallthru
      _
    // Predicated region
    $region114: #{chemberta_forward.1} parent=1 // pred_check
      _
    $region115: #{chemberta_forward.1} parent=1 // pred_check_branch
      %242 = sbr.rel (0) target = $region117
    $region116: #{chemberta_forward.1} parent=1 // pred_region
      %243 = dma.done [#allocation12], 32
    $region117: #{chemberta_forward.1} parent=1 // pred_fallthru
      _
    // Predicated region
    $region118: #{chemberta_forward.1} parent=1 // pred_check
      _
    $region119: #{chemberta_forward.1} parent=1 // pred_check_branch
      %245 = sbr.rel (0) target = $region121
    $region120: #{chemberta_forward.1} parent=1 // pred_region
      %246 = dma.done [#allocation15], 4096
    $region121: #{chemberta_forward.1} parent=1 // pred_fallthru
      _
    // Predicated region
    $region122: #{chemberta_forward.1} parent=1 // pred_check
      _
    $region123: #{chemberta_forward.1} parent=1 // pred_check_branch
      %248 = sbr.rel (0) target = $region125
    $region124: #{chemberta_forward.1} parent=1 // pred_region
      %249 = dma.done [#allocation15], 4096
    $region125: #{chemberta_forward.1} parent=1 // pred_fallthru
      _
    // Predicated region
    $region126: #{chemberta_forward.1} parent=1 // pred_check
      _
    $region127: #{chemberta_forward.1} parent=1 // pred_check_branch
      %251 = sbr.rel (0) target = $region129
    $region128: #{chemberta_forward.1} parent=1 // pred_region
      %252 = dma.done [#allocation18], 32
    $region129: #{chemberta_forward.1} parent=1 // pred_fallthru
      _
    // Predicated region
    $region130: #{chemberta_forward.1} parent=1 // pred_check
      _
    $region131: #{chemberta_forward.1} parent=1 // pred_check_branch
      %254 = sbr.rel (0) target = $region133
    $region132: #{chemberta_forward.1} parent=1 // pred_region
      %255 = dma.done [#allocation18], 32
    $region133: #{chemberta_forward.1} parent=1 // pred_fallthru
      _
    // Predicated region
    $region134: #{chemberta_forward.1} parent=1 // pred_check
      _
    $region135: #{chemberta_forward.1} parent=1 // pred_check_branch
      %257 = sbr.rel (0) target = $region137
    $region136: #{chemberta_forward.1} parent=1 // pred_region
      %258 = dma.done [#allocation21], 32
    $region137: #{chemberta_forward.1} parent=1 // pred_fallthru
      _
    // Predicated region
    $region138: #{chemberta_forward.1} parent=1 // pred_check
      _
    $region139: #{chemberta_forward.1} parent=1 // pred_check_branch
      %260 = sbr.rel (0) target = $region141
    $region140: #{chemberta_forward.1} parent=1 // pred_region
      %261 = dma.done [#allocation21], 1024
    $region141: #{chemberta_forward.1} parent=1 // pred_fallthru
      _
    // Predicated region
    $region142: #{chemberta_forward.1} parent=1 // pred_check
      _
    $region143: #{chemberta_forward.1} parent=1 // pred_check_branch
      %263 = sbr.rel (0) target = $region145
    $region144: #{chemberta_forward.1} parent=1 // pred_region
      %264 = dma.done [#allocation24], 16
    $region145: #{chemberta_forward.1} parent=1 // pred_fallthru
      _
    // Predicated region
    $region146: #{chemberta_forward.1} parent=1 // pred_check
      _
    $region147: #{chemberta_forward.1} parent=1 // pred_check_branch
      %266 = sbr.rel (0) target = $region149
    $region148: #{chemberta_forward.1} parent=1 // pred_region
      %267 = dma.done [#allocation24], 16
    $region149: #{chemberta_forward.1} parent=1 // pred_fallthru
      _
    %v269 = vld [vmem:[%s0] sm:$0xff]
    %v270 = vld [vmem:[%s0 + $0x8] sm:$0xff]
    %v271 = vlaneseq
    %v272 = vand.u32 %v271, 127
    %273 = vset.pattern.permute.xlu0 0
    %274 = vperm.xlu0 %273, %v269
    %v275 = vpop.permute.xlu0 %274
    %276 = vset.pattern.permute.xlu0 0
    %277 = vperm.xlu0 %276, %v270
    %v278 = vpop.permute.xlu0 %277
    %vm279 = vcmp.eq.s32.totalorder %v275, %v272
    %vm280 = vcmp.eq.s32.totalorder %v278, %v272
    %v281 = vsel %vm279, 1, 0
    %v282 = vsel %vm280, 1, 0
    %v283 = vcvt.s32.f32 %v281
    %v284 = vcvt.s32.f32 %v282
    %v285 = vpack.c.bf16 %v284, %v283
    %v286 = vld [vmem:[%s2] sm:$0xf]
    %v287 = vld [vmem:[%s2 + $0x4] sm:$0xf]
    %v288 = vld [vmem:[%s2 + $0x8] sm:$0xf]
    %v289 = vld [vmem:[%s2 + $0xc] sm:$0xf]
    %v290 = vld [vmem:[%s2 + $0x10] sm:$0xf]
    %v291 = vld [vmem:[%s2 + $0x14] sm:$0xf]
    %v292 = vld [vmem:[%s2 + $0x18] sm:$0xf]
    %v293 = vld [vmem:[%s2 + $0x1c] sm:$0xf]
    %v294 = vld [vmem:[%s2 + $0x20] sm:$0xf]
    %v295 = vld [vmem:[%s2 + $0x24] sm:$0xf]
    %v296 = vld [vmem:[%s2 + $0x28] sm:$0xf]
    %v297 = vld [vmem:[%s2 + $0x2c] sm:$0xf]
    %v298 = vld [vmem:[%s2 + $0x30] sm:$0xf]
    %v299 = vld [vmem:[%s2 + $0x34] sm:$0xf]
    %v300 = vld [vmem:[%s2 + $0x38] sm:$0xf]
    %v301 = vld [vmem:[%s2 + $0x3c] sm:$0xf]
    %v302 = vld [vmem:[#allocation3] sm:$0xff]
    %v303 = vld [vmem:[#allocation3 + $0x8] sm:$0xff]
    %v320 = vunpack.c.l.b16 %v286
    %v321 = vunpack.c.l.b16 %v287
    %v322 = vunpack.c.l.b16 %v288
    %v323 = vunpack.c.l.b16 %v289
    %v324 = vunpack.c.l.b16 %v290
    %v325 = vunpack.c.l.b16 %v291
    %v326 = vunpack.c.l.b16 %v292
    %v327 = vunpack.c.l.b16 %v293
    %v328 = vunpack.c.l.b16 %v294
    %v329 = vunpack.c.l.b16 %v295
    %v330 = vunpack.c.l.b16 %v296
    %v331 = vunpack.c.l.b16 %v297
    %v332 = vunpack.c.l.b16 %v298
    %v333 = vunpack.c.l.b16 %v299
    %v334 = vunpack.c.l.b16 %v300
    %v335 = vunpack.c.l.b16 %v301
    %v336 = vpack.c.b16 %v321, %v320
    %v337 = vpack.c.b16 %v323, %v322
    %v338 = vpack.c.b16 %v325, %v324
    %v339 = vpack.c.b16 %v327, %v326
    %v340 = vpack.c.b16 %v329, %v328
    %v341 = vpack.c.b16 %v331, %v330
    %v342 = vpack.c.b16 %v333, %v332
    %v343 = vpack.c.b16 %v335, %v334
    %352 = vmatprep.subr.bf16.mxu0 0
    %353 = vmatpush1.bf16.msra.mxu0 %v336
    %354 = vmatprep.subr.bf16.mxu0 0
    %355 = vmatpush1.bf16.msra.mxu0 %v337
    %356 = vmatprep.subr.bf16.mxu0 0
    %357 = vmatpush1.bf16.msra.mxu0 %v338
    %358 = vmatprep.subr.bf16.mxu0 0
    %359 = vmatpush1.bf16.msra.mxu0 %v339
    %360 = vmatprep.subr.bf16.mxu0 0
    %361 = vmatpush1.bf16.msra.mxu0 %v340
    %362 = vmatprep.subr.bf16.mxu0 0
    %363 = vmatpush1.bf16.msra.mxu0 %v341
    %364 = vmatprep.subr.bf16.mxu0 0
    %365 = vmatpush1.bf16.msra.mxu0 %v342
    %366 = vmatprep.subr.bf16.mxu0 0
    %367 = vmatpush1.bf16.msra.mxu0 %v343
    %368 = vmatprep.subr.bf16.mxu0 0
    %369 = vmatpush1.bf16.msra.mxu0 0
    %370 = vmatprep.subr.bf16.mxu0 0
    %371 = vmatpush1.bf16.msra.mxu0 0
    %372 = vmatprep.subr.bf16.mxu0 0
    %373 = vmatpush1.bf16.msra.mxu0 0
    %374 = vmatprep.subr.bf16.mxu0 0
    %375 = vmatpush1.bf16.msra.mxu0 0
    %376 = vmatprep.subr.bf16.mxu0 0
    %377 = vmatpush1.bf16.msra.mxu0 0
    %378 = vmatprep.subr.bf16.mxu0 0
    %379 = vmatpush1.bf16.msra.mxu0 0
    %380 = vmatprep.subr.bf16.mxu0 0
    %381 = vmatpush1.bf16.msra.mxu0 0
    %382 = vmatprep.subr.bf16.mxu0 0
    %383 = vmatpush1.bf16.msra.mxu0 0
    %384 = vmatprep.mubr.bf16.mxu0 0
    %385 = vmatmul.mubr.bf16.gmra.mrb[0].mxu0 %v285
    %v386 = vpop.f32.mrb[0].mxu0
    %v387 = vadd.f32 %v302, %v386
    %v388 = vpop.f32.mrb[0].mxu0
    %v389 = vpop.f32.mrb[0].mxu0
    %v390 = vadd.f32 %v303, %v389
    %v391 = vpop.f32.mrb[0].mxu0
    %392 = vdwg.mxu0
    %v393 = vld [vmem:[#allocation5] sm:$0x1]
    %v394 = vld [vmem:[#allocation7] sm:$0x1]
    %395 = vadd.xlane.f32.xlu0 %v387
    %v396 = vpop.xlane.xlu0 %395
    %397 = vadd.xlane.f32.xlu0 %v390
    %v398 = vpop.xlane.xlu0 %397
    %v399 = vrcp.pop 128.0
    %v400 = vmul.f32 %v396, %v399
    %v401 = vmul.f32 %v398, %v399
    %v402 = vsub.f32 %v387, %v400
    %v403 = vsub.f32 %v390, %v401
    %v404 = vmul.f32 %v402, %v402
    %v405 = vmul.f32 %v403, %v403
    %406 = vadd.xlane.f32.xlu0 %v404
    %v407 = vpop.xlane.xlu0 %406
    %408 = vadd.xlane.f32.xlu0 %v405
    %v409 = vpop.xlane.xlu0 %408
    %v410 = vmul.f32 %v407, %v399
    %v411 = vmul.f32 %v409, %v399
    %v412 = vadd.f32 %v410, 1e-12
    %v413 = vadd.f32 %v411, 1e-12
    %v414 = vrsqrt.pop %v412
    %v415 = vrsqrt.pop %v413
    %v416 = vmul.f32 %v402, %v414
    %v417 = vmul.f32 %v403, %v415
    %v419 = vlaneseq
    %v420 = vshrl.u32 %v419, 7
    %v421 = vsub.s32 0, %v420
    %v422 = vrot.slane %v393, %v421
    %v424 = vmul.f32 %v416, %v422
    %v425 = vmul.f32 %v417, %v422
    %v427 = vlaneseq
    %v428 = vshrl.u32 %v427, 7
    %v429 = vsub.s32 0, %v428
    %v430 = vrot.slane %v394, %v429
    %v432 = vadd.f32 %v424, %v430
    %v433 = vadd.f32 %v425, %v430
    %v434 = vld [vmem:[%s1] sm:$0x1]
    %v435 = vld [vmem:[%s1 + $0x1] sm:$0x1]
    %v436 = vcvt.s32.f32 %v434
    %v437 = vcvt.s32.f32 %v435
    %v438 = vsub.f32 1.0, %v436
    %v439 = vsub.f32 1.0, %v437
    %v440 = vmul.f32 %v438, -1e+09
    %v441 = vmul.f32 %v439, -1e+09
    %v444 = vlaneseq
    %v445 = vshrl.u32 %v444, 7
    %v446 = vsub.s32 0, %v445
    %v447 = vrot.slane %v440, %v446
    %v448 = vlaneseq
    %v449 = vshrl.u32 %v448, 7
    %v450 = vsub.s32 0, %v449
    %v451 = vrot.slane %v441, %v450
    %v454 = vld [vmem:[#allocation8] sm:$0xff]
    %v455 = vld [vmem:[#allocation8 + $0x8] sm:$0xf]
    %v456 = vld [vmem:[#allocation8 + $0xc] sm:$0xff]
    %v457 = vld [vmem:[#allocation8 + $0x14] sm:$0xf]
    %v458 = vld [vmem:[#allocation8 + $0x18] sm:$0xff]
    %v459 = vld [vmem:[#allocation8 + $0x20] sm:$0xf]
    %v460 = vld [vmem:[#allocation8 + $0x24] sm:$0xff]
    %v461 = vld [vmem:[#allocation8 + $0x2c] sm:$0xf]
    %v462 = vld [vmem:[#allocation8 + $0x30] sm:$0xff]
    %v463 = vld [vmem:[#allocation8 + $0x38] sm:$0xf]
    %v464 = vld [vmem:[#allocation8 + $0x3c] sm:$0xff]
    %v465 = vld [vmem:[#allocation8 + $0x44] sm:$0xf]
    %v466 = vld [vmem:[#allocation8 + $0x48] sm:$0xff]
    %v467 = vld [vmem:[#allocation8 + $0x50] sm:$0xf]
    %v468 = vld [vmem:[#allocation8 + $0x54] sm:$0xff]
    %v469 = vld [vmem:[#allocation8 + $0x5c] sm:$0xf]
    %v470 = vld [vmem:[#allocation8 + $0x60] sm:$0xff]
    %v471 = vld [vmem:[#allocation8 + $0x68] sm:$0xf]
    %v472 = vld [vmem:[#allocation8 + $0x6c] sm:$0xff]
    %v473 = vld [vmem:[#allocation8 + $0x74] sm:$0xf]
    %v474 = vld [vmem:[#allocation8 + $0x78] sm:$0xff]
    %v475 = vld [vmem:[#allocation8 + $0x80] sm:$0xf]
    %v476 = vld [vmem:[#allocation8 + $0x84] sm:$0xff]
    %v477 = vld [vmem:[#allocation8 + $0x8c] sm:$0xf]
    %v478 = vld [vmem:[#allocation8 + $0x90] sm:$0xff]
    %v479 = vld [vmem:[#allocation8 + $0x98] sm:$0xf]
    %v480 = vld [vmem:[#allocation8 + $0x9c] sm:$0xff]
    %v481 = vld [vmem:[#allocation8 + $0xa4] sm:$0xf]
    %v482 = vld [vmem:[#allocation8 + $0xa8] sm:$0xff]
    %v483 = vld [vmem:[#allocation8 + $0xb0] sm:$0xf]
    %v484 = vld [vmem:[#allocation8 + $0xb4] sm:$0xff]
    %v485 = vld [vmem:[#allocation8 + $0xbc] sm:$0xf]
    %v486 = vld [vmem:[#allocation10] sm:$0xf]
    %v487 = vld [vmem:[#allocation10 + $0x4] sm:$0xf]
    %v488 = vld [vmem:[#allocation10 + $0x8] sm:$0xf]
    %v489 = vld [vmem:[#allocation10 + $0xc] sm:$0xf]
    %v490 = vld [vmem:[#allocation10 + $0x10] sm:$0xf]
    %v491 = vld [vmem:[#allocation10 + $0x14] sm:$0xf]
    %v492 = vld [vmem:[#allocation10 + $0x18] sm:$0xf]
    %v493 = vld [vmem:[#allocation10 + $0x1c] sm:$0xf]
    %v494 = vld [vmem:[#allocation10 + $0x20] sm:$0xf]
    %v495 = vld [vmem:[#allocation10 + $0x24] sm:$0xf]
    %v496 = vld [vmem:[#allocation10 + $0x28] sm:$0xf]
    %v497 = vld [vmem:[#allocation10 + $0x2c] sm:$0xf]
    %v498 = vld [vmem:[#allocation10 + $0x30] sm:$0xf]
    %v499 = vld [vmem:[#allocation10 + $0x34] sm:$0xf]
    %v500 = vld [vmem:[#allocation10 + $0x38] sm:$0xf]
    %v501 = vld [vmem:[#allocation10 + $0x3c] sm:$0xf]
    %v502 = vld [vmem:[%s7] sm:$0x7]
    %v503 = vpack.c.bf16 %v433, %v432
    %v505 = vlaneseq
    %v506 = vshrl.u32 %v505, 7
    %v507 = vsub.s32 0, %v506
    %v508 = vrot.slane %v502, %v507
    %v509 = vlaneseq
    %v510 = vshrl.u32 %v509, 7
    %v511 = vsub.s32 1, %v510
    %v512 = vrot.slane %v502, %v511
    %v513 = vlaneseq
    %v514 = vshrl.u32 %v513, 7
    %v515 = vsub.s32 2, %v514
    %v516 = vrot.slane %v502, %v515
    %v552 = vunpack.c.l.b16 %v454
    %v553 = vunpack.c.h.b16 %v454
    %v554 = vunpack.c.l.b16 %v455
    %v555 = vunpack.c.l.b16 %v456
    %v556 = vunpack.c.h.b16 %v456
    %v557 = vunpack.c.l.b16 %v457
    %v558 = vunpack.c.l.b16 %v458
    %v559 = vunpack.c.h.b16 %v458
    %v560 = vunpack.c.l.b16 %v459
    %v561 = vunpack.c.l.b16 %v460
    %v562 = vunpack.c.h.b16 %v460
    %v563 = vunpack.c.l.b16 %v461
    %v564 = vunpack.c.l.b16 %v462
    %v565 = vunpack.c.h.b16 %v462
    %v566 = vunpack.c.l.b16 %v463
    %v567 = vunpack.c.l.b16 %v464
    %v568 = vunpack.c.h.b16 %v464
    %v569 = vunpack.c.l.b16 %v465
    %v570 = vunpack.c.l.b16 %v466
    %v571 = vunpack.c.h.b16 %v466
    %v572 = vunpack.c.l.b16 %v467
    %v573 = vunpack.c.l.b16 %v468
    %v574 = vunpack.c.h.b16 %v468
    %v575 = vunpack.c.l.b16 %v469
    %v576 = vunpack.c.l.b16 %v470
    %v577 = vunpack.c.h.b16 %v470
    %v578 = vunpack.c.l.b16 %v471
    %v579 = vunpack.c.l.b16 %v472
    %v580 = vunpack.c.h.b16 %v472
    %v581 = vunpack.c.l.b16 %v473
    %v582 = vunpack.c.l.b16 %v474
    %v583 = vunpack.c.h.b16 %v474
    %v584 = vunpack.c.l.b16 %v475
    %v585 = vunpack.c.l.b16 %v476
    %v586 = vunpack.c.h.b16 %v476
    %v587 = vunpack.c.l.b16 %v477
    %v588 = vunpack.c.l.b16 %v478
    %v589 = vunpack.c.h.b16 %v478
    %v590 = vunpack.c.l.b16 %v479
    %v591 = vunpack.c.l.b16 %v480
    %v592 = vunpack.c.h.b16 %v480
    %v593 = vunpack.c.l.b16 %v481
    %v594 = vunpack.c.l.b16 %v482
    %v595 = vunpack.c.h.b16 %v482
    %v596 = vunpack.c.l.b16 %v483
    %v597 = vunpack.c.l.b16 %v484
    %v598 = vunpack.c.h.b16 %v484
    %v599 = vunpack.c.l.b16 %v485
    %v600 = vpack.c.b16 %v555, %v552
    %v601 = vpack.c.b16 %v556, %v553
    %v602 = vpack.c.b16 %v557, %v554
    %v603 = vpack.c.b16 %v561, %v558
    %v604 = vpack.c.b16 %v562, %v559
    %v605 = vpack.c.b16 %v563, %v560
    %v606 = vpack.c.b16 %v567, %v564
    %v607 = vpack.c.b16 %v568, %v565
    %v608 = vpack.c.b16 %v569, %v566
    %v609 = vpack.c.b16 %v573, %v570
    %v610 = vpack.c.b16 %v574, %v571
    %v611 = vpack.c.b16 %v575, %v572
    %v612 = vpack.c.b16 %v579, %v576
    %v613 = vpack.c.b16 %v580, %v577
    %v614 = vpack.c.b16 %v581, %v578
    %v615 = vpack.c.b16 %v585, %v582
    %v616 = vpack.c.b16 %v586, %v583
    %v617 = vpack.c.b16 %v587, %v584
    %v618 = vpack.c.b16 %v591, %v588
    %v619 = vpack.c.b16 %v592, %v589
    %v620 = vpack.c.b16 %v593, %v590
    %v621 = vpack.c.b16 %v597, %v594
    %v622 = vpack.c.b16 %v598, %v595
    %v623 = vpack.c.b16 %v599, %v596
    %648 = vmatprep.subr.bf16.mxu0 %v601
    %649 = vmatpush1.bf16.msra.mxu0 %v600
    %650 = vmatprep.subr.bf16.mxu0 %v604
    %651 = vmatpush1.bf16.msra.mxu0 %v603
    %652 = vmatprep.subr.bf16.mxu0 %v607
    %653 = vmatpush1.bf16.msra.mxu0 %v606
    %654 = vmatprep.subr.bf16.mxu0 %v610
    %655 = vmatpush1.bf16.msra.mxu0 %v609
    %656 = vmatprep.subr.bf16.mxu0 %v613
    %657 = vmatpush1.bf16.msra.mxu0 %v612
    %658 = vmatprep.subr.bf16.mxu0 %v616
    %659 = vmatpush1.bf16.msra.mxu0 %v615
    %660 = vmatprep.subr.bf16.mxu0 %v619
    %661 = vmatpush1.bf16.msra.mxu0 %v618
    %662 = vmatprep.subr.bf16.mxu0 %v622
    %663 = vmatpush1.bf16.msra.mxu0 %v621
    %664 = vmatprep.subr.bf16.mxu0 0
    %665 = vmatpush1.bf16.msra.mxu0 0
    %666 = vmatprep.subr.bf16.mxu0 0
    %667 = vmatpush1.bf16.msra.mxu0 0
    %668 = vmatprep.subr.bf16.mxu0 0
    %669 = vmatpush1.bf16.msra.mxu0 0
    %670 = vmatprep.subr.bf16.mxu0 0
    %671 = vmatpush1.bf16.msra.mxu0 0
    %672 = vmatprep.subr.bf16.mxu0 0
    %673 = vmatpush1.bf16.msra.mxu0 0
    %674 = vmatprep.subr.bf16.mxu0 0
    %675 = vmatpush1.bf16.msra.mxu0 0
    %676 = vmatprep.subr.bf16.mxu0 0
    %677 = vmatpush1.bf16.msra.mxu0 0
    %678 = vmatprep.subr.bf16.mxu0 0
    %679 = vmatpush1.bf16.msra.mxu0 0
    %680 = vmatprep.mubr.bf16.mxu0 0
    %681 = vmatmul.mubr.bf16.gmra.mrb[0].mxu0 %v503
    %v682 = vpop.f32.mrb[0].mxu0
    %v683 = vadd.f32 %v508, %v682
    %v684 = vpop.f32.mrb[0].mxu0
    %v685 = vadd.f32 %v512, %v684
    %v686 = vpop.f32.mrb[0].mxu0
    %v687 = vadd.f32 %v508, %v686
    %v688 = vpop.f32.mrb[0].mxu0
    %v689 = vadd.f32 %v512, %v688
    %690 = vdwg.mxu0
    %691 = vmatprep.subr.bf16.mxu0 0
    %692 = vmatpush1.bf16.msra.mxu0 %v602
    %693 = vmatprep.subr.bf16.mxu0 0
    %694 = vmatpush1.bf16.msra.mxu0 %v605
    %695 = vmatprep.subr.bf16.mxu0 0
    %696 = vmatpush1.bf16.msra.mxu0 %v608
    %697 = vmatprep.subr.bf16.mxu0 0
    %698 = vmatpush1.bf16.msra.mxu0 %v611
    %699 = vmatprep.subr.bf16.mxu0 0
    %700 = vmatpush1.bf16.msra.mxu0 %v614
    %701 = vmatprep.subr.bf16.mxu0 0
    %702 = vmatpush1.bf16.msra.mxu0 %v617
    %703 = vmatprep.subr.bf16.mxu0 0
    %704 = vmatpush1.bf16.msra.mxu0 %v620
    %705 = vmatprep.subr.bf16.mxu0 0
    %706 = vmatpush1.bf16.msra.mxu0 %v623
    %707 = vmatprep.subr.bf16.mxu0 0
    %708 = vmatpush1.bf16.msra.mxu0 0
    %709 = vmatprep.subr.bf16.mxu0 0
    %710 = vmatpush1.bf16.msra.mxu0 0
    %711 = vmatprep.subr.bf16.mxu0 0
    %712 = vmatpush1.bf16.msra.mxu0 0
    %713 = vmatprep.subr.bf16.mxu0 0
    %714 = vmatpush1.bf16.msra.mxu0 0
    %715 = vmatprep.subr.bf16.mxu0 0
    %716 = vmatpush1.bf16.msra.mxu0 0
    %717 = vmatprep.subr.bf16.mxu0 0
    %718 = vmatpush1.bf16.msra.mxu0 0
    %719 = vmatprep.subr.bf16.mxu0 0
    %720 = vmatpush1.bf16.msra.mxu0 0
    %721 = vmatprep.subr.bf16.mxu0 0
    %722 = vmatpush1.bf16.msra.mxu0 0
    %723 = vmatprep.mubr.bf16.mxu0 0
    %724 = vmatmul.mubr.bf16.gmra.mrb[0].mxu0 %v503
    %v725 = vpop.f32.mrb[0].mxu0
    %v726 = vadd.f32 %v516, %v725
    %v727 = vpop.f32.mrb[0].mxu0
    %v728 = vpop.f32.mrb[0].mxu0
    %v729 = vadd.f32 %v516, %v728
    %v730 = vpop.f32.mrb[0].mxu0
    %731 = vdwg.mxu0
    %v732 = vpack.c.bf16 %v683, %v683
    %v733 = vpack.c.bf16 %v687, %v687
    %v734 = vpack.c.bf16 %v685, %v685
    %v735 = vpack.c.bf16 %v689, %v689
    %v736 = vpack.c.bf16 %v726, %v726
    %v737 = vpack.c.bf16 %v729, %v729
    %vm738 = vcmask 261120
    %v740 = vsel %vm738, %v732, 0
    %v743 = vsel %vm738, %v734, 0
    %745 = vmatprep.subr.bf16.mxu0 0
    %746 = vmatpush1.bf16.xpose.msra.mxu0 %v743
    %747 = vmatprep.subr.bf16.mxu0 0
    %748 = vmatpush1.bf16.xpose.msra.mxu0 0
    %749 = vmatprep.subr.bf16.mxu0 0
    %750 = vmatpush1.bf16.xpose.msra.mxu0 0
    %751 = vmatprep.subr.bf16.mxu0 0
    %752 = vmatpush1.bf16.xpose.msra.mxu0 0
    %753 = vmatprep.subr.bf16.mxu0 0
    %754 = vmatpush1.bf16.xpose.msra.mxu0 0
    %755 = vmatprep.subr.bf16.mxu0 0
    %756 = vmatpush1.bf16.xpose.msra.mxu0 0
    %757 = vmatprep.subr.bf16.mxu0 0
    %758 = vmatpush1.bf16.xpose.msra.mxu0 0
    %759 = vmatprep.subr.bf16.mxu0 0
    %760 = vmatpush1.bf16.xpose.msra.mxu0 0
    %761 = vmatprep.subr.bf16.mxu0 0
    %762 = vmatpush1.bf16.xpose.msra.mxu0 0
    %763 = vmatprep.subr.bf16.mxu0 0
    %764 = vmatpush1.bf16.xpose.msra.mxu0 0
    %765 = vmatprep.subr.bf16.mxu0 0
    %766 = vmatpush1.bf16.xpose.msra.mxu0 0
    %767 = vmatprep.subr.bf16.mxu0 0
    %768 = vmatpush1.bf16.xpose.msra.mxu0 0
    %769 = vmatprep.subr.bf16.mxu0 0
    %770 = vmatpush1.bf16.xpose.msra.mxu0 0
    %771 = vmatprep.subr.bf16.mxu0 0
    %772 = vmatpush1.bf16.xpose.msra.mxu0 0
    %773 = vmatprep.subr.bf16.mxu0 0
    %774 = vmatpush1.bf16.xpose.msra.mxu0 0
    %775 = vmatprep.subr.bf16.mxu0 0
    %776 = vmatpush1.bf16.xpose.msra.mxu0 0
    %777 = vmatprep.mubr.bf16.mxu0 0
    %778 = vmatmul.mubr.bf16.gmra.mrb[0].mxu0 %v740
    %v779 = vpop.f32.mrb[0].mxu0
    %v780 = vadd.f32 %v447, %v779
    %v781 = vpop.f32.mrb[0].mxu0
    %v782 = vpop.f32.mrb[0].mxu0
    %v783 = vpop.f32.mrb[0].mxu0
    %784 = vdwg.mxu0
    %v786 = vsel %vm738, %v733, 0
    %v789 = vsel %vm738, %v735, 0
    %791 = vmatprep.subr.bf16.mxu0 0
    %792 = vmatpush1.bf16.xpose.msra.mxu0 %v789
    %793 = vmatprep.subr.bf16.mxu0 0
    %794 = vmatpush1.bf16.xpose.msra.mxu0 0
    %795 = vmatprep.subr.bf16.mxu0 0
    %796 = vmatpush1.bf16.xpose.msra.mxu0 0
    %797 = vmatprep.subr.bf16.mxu0 0
    %798 = vmatpush1.bf16.xpose.msra.mxu0 0
    %799 = vmatprep.subr.bf16.mxu0 0
    %800 = vmatpush1.bf16.xpose.msra.mxu0 0
    %801 = vmatprep.subr.bf16.mxu0 0
    %802 = vmatpush1.bf16.xpose.msra.mxu0 0
    %803 = vmatprep.subr.bf16.mxu0 0
    %804 = vmatpush1.bf16.xpose.msra.mxu0 0
    %805 = vmatprep.subr.bf16.mxu0 0
    %806 = vmatpush1.bf16.xpose.msra.mxu0 0
    %807 = vmatprep.subr.bf16.mxu0 0
    %808 = vmatpush1.bf16.xpose.msra.mxu0 0
    %809 = vmatprep.subr.bf16.mxu0 0
    %810 = vmatpush1.bf16.xpose.msra.mxu0 0
    %811 = vmatprep.subr.bf16.mxu0 0
    %812 = vmatpush1.bf16.xpose.msra.mxu0 0
    %813 = vmatprep.subr.bf16.mxu0 0
    %814 = vmatpush1.bf16.xpose.msra.mxu0 0
    %815 = vmatprep.subr.bf16.mxu0 0
    %816 = vmatpush1.bf16.xpose.msra.mxu0 0
    %817 = vmatprep.subr.bf16.mxu0 0
    %818 = vmatpush1.bf16.xpose.msra.mxu0 0
    %819 = vmatprep.subr.bf16.mxu0 0
    %820 = vmatpush1.bf16.xpose.msra.mxu0 0
    %821 = vmatprep.subr.bf16.mxu0 0
    %822 = vmatpush1.bf16.xpose.msra.mxu0 0
    %823 = vmatprep.mubr.bf16.mxu0 0
    %824 = vmatmul.mubr.bf16.gmra.mrb[0].mxu0 %v786
    %v825 = vpop.f32.mrb[0].mxu0
    %v826 = vadd.f32 %v451, %v825
    %v827 = vpop.f32.mrb[0].mxu0
    %v828 = vpop.f32.mrb[0].mxu0
    %v829 = vpop.f32.mrb[0].mxu0
    %830 = vdwg.mxu0
    %vm831 = vcmask 64512
    %v832 = vsel %vm831, %v780, -inf
    %833 = vmax.xlane.f32.xlu0 %v832
    %v834 = vpop.xlane.xlu0 %833
    %v835 = vsel %vm831, %v826, -inf
    %836 = vmax.xlane.f32.xlu0 %v835
    %v837 = vpop.xlane.xlu0 %836
    %v838 = vsub.f32 %v780, %v834
    %v839 = vsub.f32 %v826, %v837
    %v840 = vmul.f32 %v838, 1.442695
    %v841 = vpow.pop %v840
    %v842 = vmul.f32 %v839, 1.442695
    %v843 = vpow.pop %v842
    %v844 = vsel %vm831, %v841, 0.0
    %845 = vadd.xlane.f32.xlu0 %v844
    %v846 = vpop.xlane.xlu0 %845
    %v847 = vsel %vm831, %v843, 0.0
    %848 = vadd.xlane.f32.xlu0 %v847
    %v849 = vpop.xlane.xlu0 %848
    %v850 = vrcp.pop %v846
    %v851 = vrcp.pop %v849
    %v852 = vmul.f32 %v841, %v850
    %v853 = vmul.f32 %v843, %v851
    %v854 = vpack.c.bf16 %v852, %v852
    %v855 = vpack.c.bf16 %v853, %v853
    %v857 = vsel %vm831, %v854, 0
    %vm859 = vcmask 1043456
    %v861 = vsel %vm859, %v736, 0
    %863 = vmatprep.subr.bf16.mxu0 0
    %864 = vmatpush1.bf16.msra.mxu0 %v861
    %865 = vmatprep.subr.bf16.mxu0 0
    %866 = vmatpush1.bf16.msra.mxu0 0
    %867 = vmatprep.subr.bf16.mxu0 0
    %868 = vmatpush1.bf16.msra.mxu0 0
    %869 = vmatprep.subr.bf16.mxu0 0
    %870 = vmatpush1.bf16.msra.mxu0 0
    %871 = vmatprep.subr.bf16.mxu0 0
    %872 = vmatpush1.bf16.msra.mxu0 0
    %873 = vmatprep.subr.bf16.mxu0 0
    %874 = vmatpush1.bf16.msra.mxu0 0
    %875 = vmatprep.subr.bf16.mxu0 0
    %876 = vmatpush1.bf16.msra.mxu0 0
    %877 = vmatprep.subr.bf16.mxu0 0
    %878 = vmatpush1.bf16.msra.mxu0 0
    %879 = vmatprep.subr.bf16.mxu0 0
    %880 = vmatpush1.bf16.msra.mxu0 0
    %881 = vmatprep.subr.bf16.mxu0 0
    %882 = vmatpush1.bf16.msra.mxu0 0
    %883 = vmatprep.subr.bf16.mxu0 0
    %884 = vmatpush1.bf16.msra.mxu0 0
    %885 = vmatprep.subr.bf16.mxu0 0
    %886 = vmatpush1.bf16.msra.mxu0 0
    %887 = vmatprep.subr.bf16.mxu0 0
    %888 = vmatpush1.bf16.msra.mxu0 0
    %889 = vmatprep.subr.bf16.mxu0 0
    %890 = vmatpush1.bf16.msra.mxu0 0
    %891 = vmatprep.subr.bf16.mxu0 0
    %892 = vmatpush1.bf16.msra.mxu0 0
    %893 = vmatprep.subr.bf16.mxu0 0
    %894 = vmatpush1.bf16.msra.mxu0 0
    %895 = vmatprep.mubr.bf16.mxu0 0
    %896 = vmatmul.mubr.bf16.gmra.mrb[0].mxu0 %v857
    %v897 = vpop.f32.mrb[0].mxu0
    %v898 = vadd.f32 0.0, %v897
    %v899 = vpop.f32.mrb[0].mxu0
    %v900 = vpop.f32.mrb[0].mxu0
    %v901 = vpop.f32.mrb[0].mxu0
    %902 = vdwg.mxu0
    %v904 = vsel %vm831, %v855, 0
    %v907 = vsel %vm859, %v737, 0
    %909 = vmatprep.subr.bf16.mxu0 0
    %910 = vmatpush1.bf16.msra.mxu0 %v907
    %911 = vmatprep.subr.bf16.mxu0 0
    %912 = vmatpush1.bf16.msra.mxu0 0
    %913 = vmatprep.subr.bf16.mxu0 0
    %914 = vmatpush1.bf16.msra.mxu0 0
    %915 = vmatprep.subr.bf16.mxu0 0
    %916 = vmatpush1.bf16.msra.mxu0 0
    %917 = vmatprep.subr.bf16.mxu0 0
    %918 = vmatpush1.bf16.msra.mxu0 0
    %919 = vmatprep.subr.bf16.mxu0 0
    %920 = vmatpush1.bf16.msra.mxu0 0
    %921 = vmatprep.subr.bf16.mxu0 0
    %922 = vmatpush1.bf16.msra.mxu0 0
    %923 = vmatprep.subr.bf16.mxu0 0
    %924 = vmatpush1.bf16.msra.mxu0 0
    %925 = vmatprep.subr.bf16.mxu0 0
    %926 = vmatpush1.bf16.msra.mxu0 0
    %927 = vmatprep.subr.bf16.mxu0 0
    %928 = vmatpush1.bf16.msra.mxu0 0
    %929 = vmatprep.subr.bf16.mxu0 0
    %930 = vmatpush1.bf16.msra.mxu0 0
    %931 = vmatprep.subr.bf16.mxu0 0
    %932 = vmatpush1.bf16.msra.mxu0 0
    %933 = vmatprep.subr.bf16.mxu0 0
    %934 = vmatpush1.bf16.msra.mxu0 0
    %935 = vmatprep.subr.bf16.mxu0 0
    %936 = vmatpush1.bf16.msra.mxu0 0
    %937 = vmatprep.subr.bf16.mxu0 0
    %938 = vmatpush1.bf16.msra.mxu0 0
    %939 = vmatprep.subr.bf16.mxu0 0
    %940 = vmatpush1.bf16.msra.mxu0 0
    %941 = vmatprep.mubr.bf16.mxu0 0
    %942 = vmatmul.mubr.bf16.gmra.mrb[0].mxu0 %v904
    %v943 = vpop.f32.mrb[0].mxu0
    %v944 = vadd.f32 0.0, %v943
    %v945 = vpop.f32.mrb[0].mxu0
    %v946 = vpop.f32.mrb[0].mxu0
    %v947 = vpop.f32.mrb[0].mxu0
    %948 = vdwg.mxu0
    %v949 = vpack.c.bf16 %v944, %v898
    %951 = vrot.lane.b32.xlu0 %v732, 96
    %v952 = vpop.permute.xlu0 %951
    %954 = vrot.lane.b32.xlu0 %v734, 96
    %v955 = vpop.permute.xlu0 %954
    %v957 = vsel %vm738, %v952, 0
    %v960 = vsel %vm738, %v955, 0
    %962 = vmatprep.subr.bf16.mxu0 0
    %963 = vmatpush1.bf16.xpose.msra.mxu0 %v960
    %964 = vmatprep.subr.bf16.mxu0 0
    %965 = vmatpush1.bf16.xpose.msra.mxu0 0
    %966 = vmatprep.subr.bf16.mxu0 0
    %967 = vmatpush1.bf16.xpose.msra.mxu0 0
    %968 = vmatprep.subr.bf16.mxu0 0
    %969 = vmatpush1.bf16.xpose.msra.mxu0 0
    %970 = vmatprep.subr.bf16.mxu0 0
    %971 = vmatpush1.bf16.xpose.msra.mxu0 0
    %972 = vmatprep.subr.bf16.mxu0 0
    %973 = vmatpush1.bf16.xpose.msra.mxu0 0
    %974 = vmatprep.subr.bf16.mxu0 0
    %975 = vmatpush1.bf16.xpose.msra.mxu0 0
    %976 = vmatprep.subr.bf16.mxu0 0
    %977 = vmatpush1.bf16.xpose.msra.mxu0 0
    %978 = vmatprep.subr.bf16.mxu0 0
    %979 = vmatpush1.bf16.xpose.msra.mxu0 0
    %980 = vmatprep.subr.bf16.mxu0 0
    %981 = vmatpush1.bf16.xpose.msra.mxu0 0
    %982 = vmatprep.subr.bf16.mxu0 0
    %983 = vmatpush1.bf16.xpose.msra.mxu0 0
    %984 = vmatprep.subr.bf16.mxu0 0
    %985 = vmatpush1.bf16.xpose.msra.mxu0 0
    %986 = vmatprep.subr.bf16.mxu0 0
    %987 = vmatpush1.bf16.xpose.msra.mxu0 0
    %988 = vmatprep.subr.bf16.mxu0 0
    %989 = vmatpush1.bf16.xpose.msra.mxu0 0
    %990 = vmatprep.subr.bf16.mxu0 0
    %991 = vmatpush1.bf16.xpose.msra.mxu0 0
    %992 = vmatprep.subr.bf16.mxu0 0
    %993 = vmatpush1.bf16.xpose.msra.mxu0 0
    %994 = vmatprep.mubr.bf16.mxu0 0
    %995 = vmatmul.mubr.bf16.gmra.mrb[0].mxu0 %v957
    %v996 = vpop.f32.mrb[0].mxu0
    %v997 = vadd.f32 %v447, %v996
    %v998 = vpop.f32.mrb[0].mxu0
    %v999 = vpop.f32.mrb[0].mxu0
    %v1000 = vpop.f32.mrb[0].mxu0
    %1001 = vdwg.mxu0
    %1003 = vrot.lane.b32.xlu0 %v733, 96
    %v1004 = vpop.permute.xlu0 %1003
    %1006 = vrot.lane.b32.xlu0 %v735, 96
    %v1007 = vpop.permute.xlu0 %1006
    %v1009 = vsel %vm738, %v1004, 0
    %v1012 = vsel %vm738, %v1007, 0
    %1014 = vmatprep.subr.bf16.mxu0 0
    %1015 = vmatpush1.bf16.xpose.msra.mxu0 %v1012
    %1016 = vmatprep.subr.bf16.mxu0 0
    %1017 = vmatpush1.bf16.xpose.msra.mxu0 0
    %1018 = vmatprep.subr.bf16.mxu0 0
    %1019 = vmatpush1.bf16.xpose.msra.mxu0 0
    %1020 = vmatprep.subr.bf16.mxu0 0
    %1021 = vmatpush1.bf16.xpose.msra.mxu0 0
    %1022 = vmatprep.subr.bf16.mxu0 0
    %1023 = vmatpush1.bf16.xpose.msra.mxu0 0
    %1024 = vmatprep.subr.bf16.mxu0 0
    %1025 = vmatpush1.bf16.xpose.msra.mxu0 0
    %1026 = vmatprep.subr.bf16.mxu0 0
    %1027 = vmatpush1.bf16.xpose.msra.mxu0 0
    %1028 = vmatprep.subr.bf16.mxu0 0
    %1029 = vmatpush1.bf16.xpose.msra.mxu0 0
    %1030 = vmatprep.subr.bf16.mxu0 0
    %1031 = vmatpush1.bf16.xpose.msra.mxu0 0
    %1032 = vmatprep.subr.bf16.mxu0 0
    %1033 = vmatpush1.bf16.xpose.msra.mxu0 0
    %1034 = vmatprep.subr.bf16.mxu0 0
    %1035 = vmatpush1.bf16.xpose.msra.mxu0 0
    %1036 = vmatprep.subr.bf16.mxu0 0
    %1037 = vmatpush1.bf16.xpose.msra.mxu0 0
    %1038 = vmatprep.subr.bf16.mxu0 0
    %1039 = vmatpush1.bf16.xpose.msra.mxu0 0
    %1040 = vmatprep.subr.bf16.mxu0 0
    %1041 = vmatpush1.bf16.xpose.msra.mxu0 0
    %1042 = vmatprep.subr.bf16.mxu0 0
    %1043 = vmatpush1.bf16.xpose.msra.mxu0 0
    %1044 = vmatprep.subr.bf16.mxu0 0
    %1045 = vmatpush1.bf16.xpose.msra.mxu0 0
    %1046 = vmatprep.mubr.bf16.mxu0 0
    %1047 = vmatmul.mubr.bf16.gmra.mrb[0].mxu0 %v1009
    %v1048 = vpop.f32.mrb[0].mxu0
    %v1049 = vadd.f32 %v451, %v1048
    %v1050 = vpop.f32.mrb[0].mxu0
    %v1051 = vpop.f32.mrb[0].mxu0
    %v1052 = vpop.f32.mrb[0].mxu0
    %1053 = vdwg.mxu0
    %v1054 = vsel %vm831, %v997, -inf
    %1055 = vmax.xlane.f32.xlu0 %v1054
    %v1056 = vpop.xlane.xlu0 %1055
    %v1057 = vsel %vm831, %v1049, -inf
    %1058 = vmax.xlane.f32.xlu0 %v1057
    %v1059 = vpop.xlane.xlu0 %1058
    %v1060 = vsub.f32 %v997, %v1056
    %v1061 = vsub.f32 %v1049, %v1059
    %v1062 = vmul.f32 %v1060, 1.442695
    %v1063 = vpow.pop %v1062
    %v1064 = vmul.f32 %v1061, 1.442695
    %v1065 = vpow.pop %v1064
    %v1066 = vsel %vm831, %v1063, 0.0
    %1067 = vadd.xlane.f32.xlu0 %v1066
    %v1068 = vpop.xlane.xlu0 %1067
    %v1069 = vsel %vm831, %v1065, 0.0
    %1070 = vadd.xlane.f32.xlu0 %v1069
    %v1071 = vpop.xlane.xlu0 %1070
    %v1072 = vrcp.pop %v1068
    %v1073 = vrcp.pop %v1071
    %v1074 = vmul.f32 %v1063, %v1072
    %v1075 = vmul.f32 %v1065, %v1073
    %v1076 = vpack.c.bf16 %v1074, %v1074
    %v1077 = vpack.c.bf16 %v1075, %v1075
    %1079 = vrot.lane.b32.xlu0 %v736, 96
    %v1080 = vpop.permute.xlu0 %1079
    %v1082 = vsel %vm831, %v1076, 0
    %v1085 = vsel %vm859, %v1080, 0
    %1087 = vmatprep.subr.bf16.mxu0 0
    %1088 = vmatpush1.bf16.msra.mxu0 %v1085
    %1089 = vmatprep.subr.bf16.mxu0 0
    %1090 = vmatpush1.bf16.msra.mxu0 0
    %1091 = vmatprep.subr.bf16.mxu0 0
    %1092 = vmatpush1.bf16.msra.mxu0 0
    %1093 = vmatprep.subr.bf16.mxu0 0
    %1094 = vmatpush1.bf16.msra.mxu0 0
    %1095 = vmatprep.subr.bf16.mxu0 0
    %1096 = vmatpush1.bf16.msra.mxu0 0
    %1097 = vmatprep.subr.bf16.mxu0 0
    %1098 = vmatpush1.bf16.msra.mxu0 0
    %1099 = vmatprep.subr.bf16.mxu0 0
    %1100 = vmatpush1.bf16.msra.mxu0 0
    %1101 = vmatprep.subr.bf16.mxu0 0
    %1102 = vmatpush1.bf16.msra.mxu0 0
    %1103 = vmatprep.subr.bf16.mxu0 0
    %1104 = vmatpush1.bf16.msra.mxu0 0
    %1105 = vmatprep.subr.bf16.mxu0 0
    %1106 = vmatpush1.bf16.msra.mxu0 0
    %1107 = vmatprep.subr.bf16.mxu0 0
    %1108 = vmatpush1.bf16.msra.mxu0 0
    %1109 = vmatprep.subr.bf16.mxu0 0
    %1110 = vmatpush1.bf16.msra.mxu0 0
    %1111 = vmatprep.subr.bf16.mxu0 0
    %1112 = vmatpush1.bf16.msra.mxu0 0
    %1113 = vmatprep.subr.bf16.mxu0 0
    %1114 = vmatpush1.bf16.msra.mxu0 0
    %1115 = vmatprep.subr.bf16.mxu0 0
    %1116 = vmatpush1.bf16.msra.mxu0 0
    %1117 = vmatprep.subr.bf16.mxu0 0
    %1118 = vmatpush1.bf16.msra.mxu0 0
    %1119 = vmatprep.mubr.bf16.mxu0 0
    %1120 = vmatmul.mubr.bf16.gmra.mrb[0].mxu0 %v1082
    %v1121 = vpop.f32.mrb[0].mxu0
    %v1122 = vadd.f32 0.0, %v1121
    %v1123 = vpop.f32.mrb[0].mxu0
    %v1124 = vpop.f32.mrb[0].mxu0
    %v1125 = vpop.f32.mrb[0].mxu0
    %1126 = vdwg.mxu0
    %1128 = vrot.lane.b32.xlu0 %v737, 96
    %v1129 = vpop.permute.xlu0 %1128
    %v1131 = vsel %vm831, %v1077, 0
    %v1134 = vsel %vm859, %v1129, 0
    %1136 = vmatprep.subr.bf16.mxu0 0
    %1137 = vmatpush1.bf16.msra.mxu0 %v1134
    %1138 = vmatprep.subr.bf16.mxu0 0
    %1139 = vmatpush1.bf16.msra.mxu0 0
    %1140 = vmatprep.subr.bf16.mxu0 0
    %1141 = vmatpush1.bf16.msra.mxu0 0
    %1142 = vmatprep.subr.bf16.mxu0 0
    %1143 = vmatpush1.bf16.msra.mxu0 0
    %1144 = vmatprep.subr.bf16.mxu0 0
    %1145 = vmatpush1.bf16.msra.mxu0 0
    %1146 = vmatprep.subr.bf16.mxu0 0
    %1147 = vmatpush1.bf16.msra.mxu0 0
    %1148 = vmatprep.subr.bf16.mxu0 0
    %1149 = vmatpush1.bf16.msra.mxu0 0
    %1150 = vmatprep.subr.bf16.mxu0 0
    %1151 = vmatpush1.bf16.msra.mxu0 0
    %1152 = vmatprep.subr.bf16.mxu0 0
    %1153 = vmatpush1.bf16.msra.mxu0 0
    %1154 = vmatprep.subr.bf16.mxu0 0
    %1155 = vmatpush1.bf16.msra.mxu0 0
    %1156 = vmatprep.subr.bf16.mxu0 0
    %1157 = vmatpush1.bf16.msra.mxu0 0
    %1158 = vmatprep.subr.bf16.mxu0 0
    %1159 = vmatpush1.bf16.msra.mxu0 0
    %1160 = vmatprep.subr.bf16.mxu0 0
    %1161 = vmatpush1.bf16.msra.mxu0 0
    %1162 = vmatprep.subr.bf16.mxu0 0
    %1163 = vmatpush1.bf16.msra.mxu0 0
    %1164 = vmatprep.subr.bf16.mxu0 0
    %1165 = vmatpush1.bf16.msra.mxu0 0
    %1166 = vmatprep.subr.bf16.mxu0 0
    %1167 = vmatpush1.bf16.msra.mxu0 0
    %1168 = vmatprep.mubr.bf16.mxu0 0
    %1169 = vmatmul.mubr.bf16.gmra.mrb[0].mxu0 %v1131
    %v1170 = vpop.f32.mrb[0].mxu0
    %v1171 = vadd.f32 0.0, %v1170
    %v1172 = vpop.f32.mrb[0].mxu0
    %v1173 = vpop.f32.mrb[0].mxu0
    %v1174 = vpop.f32.mrb[0].mxu0
    %1175 = vdwg.mxu0
    %v1176 = vpack.c.bf16 %v1171, %v1122
    %v1181 = vunpack.c.l.b16 %v490
    %v1182 = vunpack.c.l.b16 %v491
    %v1183 = vunpack.c.l.b16 %v492
    %v1184 = vunpack.c.l.b16 %v493
    %v1185 = vpack.c.b16 %v1182, %v1181
    %v1186 = vpack.c.b16 %v1184, %v1183
    %v1190 = vsel %vm738, %v1176, 0
    %1192 = vmatprep.subr.bf16.mxu0 0
    %1193 = vmatpush1.bf16.msra.mxu0 %v1185
    %1194 = vmatprep.subr.bf16.mxu0 0
    %1195 = vmatpush1.bf16.msra.mxu0 %v1186
    %1196 = vmatprep.subr.bf16.mxu0 0
    %1197 = vmatpush1.bf16.msra.mxu0 0
    %1198 = vmatprep.subr.bf16.mxu0 0
    %1199 = vmatpush1.bf16.msra.mxu0 0
    %1200 = vmatprep.subr.bf16.mxu0 0
    %1201 = vmatpush1.bf16.msra.mxu0 0
    %1202 = vmatprep.subr.bf16.mxu0 0
    %1203 = vmatpush1.bf16.msra.mxu0 0
    %1204 = vmatprep.subr.bf16.mxu0 0
    %1205 = vmatpush1.bf16.msra.mxu0 0
    %1206 = vmatprep.subr.bf16.mxu0 0
    %1207 = vmatpush1.bf16.msra.mxu0 0
    %1208 = vmatprep.subr.bf16.mxu0 0
    %1209 = vmatpush1.bf16.msra.mxu0 0
    %1210 = vmatprep.subr.bf16.mxu0 0
    %1211 = vmatpush1.bf16.msra.mxu0 0
    %1212 = vmatprep.subr.bf16.mxu0 0
    %1213 = vmatpush1.bf16.msra.mxu0 0
    %1214 = vmatprep.subr.bf16.mxu0 0
    %1215 = vmatpush1.bf16.msra.mxu0 0
    %1216 = vmatprep.subr.bf16.mxu0 0
    %1217 = vmatpush1.bf16.msra.mxu0 0
    %1218 = vmatprep.subr.bf16.mxu0 0
    %1219 = vmatpush1.bf16.msra.mxu0 0
    %1220 = vmatprep.subr.bf16.mxu0 0
    %1221 = vmatpush1.bf16.msra.mxu0 0
    %1222 = vmatprep.subr.bf16.mxu0 0
    %1223 = vmatpush1.bf16.msra.mxu0 0
    %1224 = vmatprep.mubr.bf16.mxu0 0
    %1225 = vmatmul.mubr.bf16.gmra.mrb[0].mxu0 %v1190
    %v1226 = vpop.f32.mrb[0].mxu0
    %v1227 = vadd.f32 0.0, %v1226
    %v1228 = vpop.f32.mrb[0].mxu0
    %v1229 = vpop.f32.mrb[0].mxu0
    %v1230 = vadd.f32 0.0, %v1229
    %v1231 = vpop.f32.mrb[0].mxu0
    %1232 = vdwg.mxu0
    %v1237 = vunpack.c.l.b16 %v486
    %v1238 = vunpack.c.l.b16 %v487
    %v1239 = vunpack.c.l.b16 %v488
    %v1240 = vunpack.c.l.b16 %v489
    %v1241 = vpack.c.b16 %v1238, %v1237
    %v1242 = vpack.c.b16 %v1240, %v1239
    %v1246 = vsel %vm738, %v949, 0
    %1248 = vmatprep.subr.bf16.mxu0 0
    %1249 = vmatpush1.bf16.msra.mxu0 %v1241
    %1250 = vmatprep.subr.bf16.mxu0 0
    %1251 = vmatpush1.bf16.msra.mxu0 %v1242
    %1252 = vmatprep.subr.bf16.mxu0 0
    %1253 = vmatpush1.bf16.msra.mxu0 0
    %1254 = vmatprep.subr.bf16.mxu0 0
    %1255 = vmatpush1.bf16.msra.mxu0 0
    %1256 = vmatprep.subr.bf16.mxu0 0
    %1257 = vmatpush1.bf16.msra.mxu0 0
    %1258 = vmatprep.subr.bf16.mxu0 0
    %1259 = vmatpush1.bf16.msra.mxu0 0
    %1260 = vmatprep.subr.bf16.mxu0 0
    %1261 = vmatpush1.bf16.msra.mxu0 0
    %1262 = vmatprep.subr.bf16.mxu0 0
    %1263 = vmatpush1.bf16.msra.mxu0 0
    %1264 = vmatprep.subr.bf16.mxu0 0
    %1265 = vmatpush1.bf16.msra.mxu0 0
    %1266 = vmatprep.subr.bf16.mxu0 0
    %1267 = vmatpush1.bf16.msra.mxu0 0
    %1268 = vmatprep.subr.bf16.mxu0 0
    %1269 = vmatpush1.bf16.msra.mxu0 0
    %1270 = vmatprep.subr.bf16.mxu0 0
    %1271 = vmatpush1.bf16.msra.mxu0 0
    %1272 = vmatprep.subr.bf16.mxu0 0
    %1273 = vmatpush1.bf16.msra.mxu0 0
    %1274 = vmatprep.subr.bf16.mxu0 0
    %1275 = vmatpush1.bf16.msra.mxu0 0
    %1276 = vmatprep.subr.bf16.mxu0 0
    %1277 = vmatpush1.bf16.msra.mxu0 0
    %1278 = vmatprep.subr.bf16.mxu0 0
    %1279 = vmatpush1.bf16.msra.mxu0 0
    %1280 = vmatprep.mubr.bf16.mxu0 0
    %1281 = vmatmul.mubr.bf16.gmra.mrb[0].mxu0 %v1246
    %v1282 = vpop.f32.mrb[0].mxu0
    %v1283 = vadd.f32 %v1227, %v1282
    %v1284 = vpop.f32.mrb[0].mxu0
    %v1285 = vpop.f32.mrb[0].mxu0
    %v1286 = vadd.f32 %v1230, %v1285
    %v1287 = vpop.f32.mrb[0].mxu0
    %1288 = vdwg.mxu0
    %1289 = vrot.lane.b32.xlu0 %v732, 64
    %v1290 = vpop.permute.xlu0 %1289
    %1291 = vrot.lane.b32.xlu0 %v734, 64
    %v1292 = vpop.permute.xlu0 %1291
    %v1294 = vsel %vm738, %v1290, 0
    %v1297 = vsel %vm738, %v1292, 0
    %1299 = vmatprep.subr.bf16.mxu0 0
    %1300 = vmatpush1.bf16.xpose.msra.mxu0 %v1297
    %1301 = vmatprep.subr.bf16.mxu0 0
    %1302 = vmatpush1.bf16.xpose.msra.mxu0 0
    %1303 = vmatprep.subr.bf16.mxu0 0
    %1304 = vmatpush1.bf16.xpose.msra.mxu0 0
    %1305 = vmatprep.subr.bf16.mxu0 0
    %1306 = vmatpush1.bf16.xpose.msra.mxu0 0
    %1307 = vmatprep.subr.bf16.mxu0 0
    %1308 = vmatpush1.bf16.xpose.msra.mxu0 0
    %1309 = vmatprep.subr.bf16.mxu0 0
    %1310 = vmatpush1.bf16.xpose.msra.mxu0 0
    %1311 = vmatprep.subr.bf16.mxu0 0
    %1312 = vmatpush1.bf16.xpose.msra.mxu0 0
    %1313 = vmatprep.subr.bf16.mxu0 0
    %1314 = vmatpush1.bf16.xpose.msra.mxu0 0
    %1315 = vmatprep.subr.bf16.mxu0 0
    %1316 = vmatpush1.bf16.xpose.msra.mxu0 0
    %1317 = vmatprep.subr.bf16.mxu0 0
    %1318 = vmatpush1.bf16.xpose.msra.mxu0 0
    %1319 = vmatprep.subr.bf16.mxu0 0
    %1320 = vmatpush1.bf16.xpose.msra.mxu0 0
    %1321 = vmatprep.subr.bf16.mxu0 0
    %1322 = vmatpush1.bf16.xpose.msra.mxu0 0
    %1323 = vmatprep.subr.bf16.mxu0 0
    %1324 = vmatpush1.bf16.xpose.msra.mxu0 0
    %1325 = vmatprep.subr.bf16.mxu0 0
    %1326 = vmatpush1.bf16.xpose.msra.mxu0 0
    %1327 = vmatprep.subr.bf16.mxu0 0
    %1328 = vmatpush1.bf16.xpose.msra.mxu0 0
    %1329 = vmatprep.subr.bf16.mxu0 0
    %1330 = vmatpush1.bf16.xpose.msra.mxu0 0
    %1331 = vmatprep.mubr.bf16.mxu0 0
    %1332 = vmatmul.mubr.bf16.gmra.mrb[0].mxu0 %v1294
    %v1333 = vpop.f32.mrb[0].mxu0
    %v1334 = vadd.f32 %v447, %v1333
    %v1335 = vpop.f32.mrb[0].mxu0
    %v1336 = vpop.f32.mrb[0].mxu0
    %v1337 = vpop.f32.mrb[0].mxu0
    %1338 = vdwg.mxu0
    %1339 = vrot.lane.b32.xlu0 %v733, 64
    %v1340 = vpop.permute.xlu0 %1339
    %1341 = vrot.lane.b32.xlu0 %v735, 64
    %v1342 = vpop.permute.xlu0 %1341
    %v1344 = vsel %vm738, %v1340, 0
    %v1347 = vsel %vm738, %v1342, 0
    %1349 = vmatprep.subr.bf16.mxu0 0
    %1350 = vmatpush1.bf16.xpose.msra.mxu0 %v1347
    %1351 = vmatprep.subr.bf16.mxu0 0
    %1352 = vmatpush1.bf16.xpose.msra.mxu0 0
    %1353 = vmatprep.subr.bf16.mxu0 0
    %1354 = vmatpush1.bf16.xpose.msra.mxu0 0
    %1355 = vmatprep.subr.bf16.mxu0 0
    %1356 = vmatpush1.bf16.xpose.msra.mxu0 0
    %1357 = vmatprep.subr.bf16.mxu0 0
    %1358 = vmatpush1.bf16.xpose.msra.mxu0 0
    %1359 = vmatprep.subr.bf16.mxu0 0
    %1360 = vmatpush1.bf16.xpose.msra.mxu0 0
    %1361 = vmatprep.subr.bf16.mxu0 0
    %1362 = vmatpush1.bf16.xpose.msra.mxu0 0
    %1363 = vmatprep.subr.bf16.mxu0 0
    %1364 = vmatpush1.bf16.xpose.msra.mxu0 0
    %1365 = vmatprep.subr.bf16.mxu0 0
    %1366 = vmatpush1.bf16.xpose.msra.mxu0 0
    %1367 = vmatprep.subr.bf16.mxu0 0
    %1368 = vmatpush1.bf16.xpose.msra.mxu0 0
    %1369 = vmatprep.subr.bf16.mxu0 0
    %1370 = vmatpush1.bf16.xpose.msra.mxu0 0
    %1371 = vmatprep.subr.bf16.mxu0 0
    %1372 = vmatpush1.bf16.xpose.msra.mxu0 0
    %1373 = vmatprep.subr.bf16.mxu0 0
    %1374 = vmatpush1.bf16.xpose.msra.mxu0 0
    %1375 = vmatprep.subr.bf16.mxu0 0
    %1376 = vmatpush1.bf16.xpose.msra.mxu0 0
    %1377 = vmatprep.subr.bf16.mxu0 0
    %1378 = vmatpush1.bf16.xpose.msra.mxu0 0
    %1379 = vmatprep.subr.bf16.mxu0 0
    %1380 = vmatpush1.bf16.xpose.msra.mxu0 0
    %1381 = vmatprep.mubr.bf16.mxu0 0
    %1382 = vmatmul.mubr.bf16.gmra.mrb[0].mxu0 %v1344
    %v1383 = vpop.f32.mrb[0].mxu0
    %v1384 = vadd.f32 %v451, %v1383
    %v1385 = vpop.f32.mrb[0].mxu0
    %v1386 = vpop.f32.mrb[0].mxu0
    %v1387 = vpop.f32.mrb[0].mxu0
    %1388 = vdwg.mxu0
    %v1389 = vsel %vm831, %v1334, -inf
    %1390 = vmax.xlane.f32.xlu0 %v1389
    %v1391 = vpop.xlane.xlu0 %1390
    %v1392 = vsel %vm831, %v1384, -inf
    %1393 = vmax.xlane.f32.xlu0 %v1392
    %v1394 = vpop.xlane.xlu0 %1393
    %v1395 = vsub.f32 %v1334, %v1391
    %v1396 = vsub.f32 %v1384, %v1394
    %v1397 = vmul.f32 %v1395, 1.442695
    %v1398 = vpow.pop %v1397
    %v1399 = vmul.f32 %v1396, 1.442695
    %v1400 = vpow.pop %v1399
    %v1401 = vsel %vm831, %v1398, 0.0
    %1402 = vadd.xlane.f32.xlu0 %v1401
    %v1403 = vpop.xlane.xlu0 %1402
    %v1404 = vsel %vm831, %v1400, 0.0
    %1405 = vadd.xlane.f32.xlu0 %v1404
    %v1406 = vpop.xlane.xlu0 %1405
    %v1407 = vrcp.pop %v1403
    %v1408 = vrcp.pop %v1406
    %v1409 = vmul.f32 %v1398, %v1407
    %v1410 = vmul.f32 %v1400, %v1408
    %v1411 = vpack.c.bf16 %v1409, %v1409
    %v1412 = vpack.c.bf16 %v1410, %v1410
    %1413 = vrot.lane.b32.xlu0 %v736, 64
    %v1414 = vpop.permute.xlu0 %1413
    %v1416 = vsel %vm831, %v1411, 0
    %v1419 = vsel %vm859, %v1414, 0
    %1421 = vmatprep.subr.bf16.mxu0 0
    %1422 = vmatpush1.bf16.msra.mxu0 %v1419
    %1423 = vmatprep.subr.bf16.mxu0 0
    %1424 = vmatpush1.bf16.msra.mxu0 0
    %1425 = vmatprep.subr.bf16.mxu0 0
    %1426 = vmatpush1.bf16.msra.mxu0 0
    %1427 = vmatprep.subr.bf16.mxu0 0
    %1428 = vmatpush1.bf16.msra.mxu0 0
    %1429 = vmatprep.subr.bf16.mxu0 0
    %1430 = vmatpush1.bf16.msra.mxu0 0
    %1431 = vmatprep.subr.bf16.mxu0 0
    %1432 = vmatpush1.bf16.msra.mxu0 0
    %1433 = vmatprep.subr.bf16.mxu0 0
    %1434 = vmatpush1.bf16.msra.mxu0 0
    %1435 = vmatprep.subr.bf16.mxu0 0
    %1436 = vmatpush1.bf16.msra.mxu0 0
    %1437 = vmatprep.subr.bf16.mxu0 0
    %1438 = vmatpush1.bf16.msra.mxu0 0
    %1439 = vmatprep.subr.bf16.mxu0 0
    %1440 = vmatpush1.bf16.msra.mxu0 0
    %1441 = vmatprep.subr.bf16.mxu0 0
    %1442 = vmatpush1.bf16.msra.mxu0 0
    %1443 = vmatprep.subr.bf16.mxu0 0
    %1444 = vmatpush1.bf16.msra.mxu0 0
    %1445 = vmatprep.subr.bf16.mxu0 0
    %1446 = vmatpush1.bf16.msra.mxu0 0
    %1447 = vmatprep.subr.bf16.mxu0 0
    %1448 = vmatpush1.bf16.msra.mxu0 0
    %1449 = vmatprep.subr.bf16.mxu0 0
    %1450 = vmatpush1.bf16.msra.mxu0 0
    %1451 = vmatprep.subr.bf16.mxu0 0
    %1452 = vmatpush1.bf16.msra.mxu0 0
    %1453 = vmatprep.mubr.bf16.mxu0 0
    %1454 = vmatmul.mubr.bf16.gmra.mrb[0].mxu0 %v1416
    %v1455 = vpop.f32.mrb[0].mxu0
    %v1456 = vadd.f32 0.0, %v1455
    %v1457 = vpop.f32.mrb[0].mxu0
    %v1458 = vpop.f32.mrb[0].mxu0
    %v1459 = vpop.f32.mrb[0].mxu0
    %1460 = vdwg.mxu0
    %1461 = vrot.lane.b32.xlu0 %v737, 64
    %v1462 = vpop.permute.xlu0 %1461
    %v1464 = vsel %vm831, %v1412, 0
    %v1467 = vsel %vm859, %v1462, 0
    %1469 = vmatprep.subr.bf16.mxu0 0
    %1470 = vmatpush1.bf16.msra.mxu0 %v1467
    %1471 = vmatprep.subr.bf16.mxu0 0
    %1472 = vmatpush1.bf16.msra.mxu0 0
    %1473 = vmatprep.subr.bf16.mxu0 0
    %1474 = vmatpush1.bf16.msra.mxu0 0
    %1475 = vmatprep.subr.bf16.mxu0 0
    %1476 = vmatpush1.bf16.msra.mxu0 0
    %1477 = vmatprep.subr.bf16.mxu0 0
    %1478 = vmatpush1.bf16.msra.mxu0 0
    %1479 = vmatprep.subr.bf16.mxu0 0
    %1480 = vmatpush1.bf16.msra.mxu0 0
    %1481 = vmatprep.subr.bf16.mxu0 0
    %1482 = vmatpush1.bf16.msra.mxu0 0
    %1483 = vmatprep.subr.bf16.mxu0 0
    %1484 = vmatpush1.bf16.msra.mxu0 0
    %1485 = vmatprep.subr.bf16.mxu0 0
    %1486 = vmatpush1.bf16.msra.mxu0 0
    %1487 = vmatprep.subr.bf16.mxu0 0
    %1488 = vmatpush1.bf16.msra.mxu0 0
    %1489 = vmatprep.subr.bf16.mxu0 0
    %1490 = vmatpush1.bf16.msra.mxu0 0
    %1491 = vmatprep.subr.bf16.mxu0 0
    %1492 = vmatpush1.bf16.msra.mxu0 0
    %1493 = vmatprep.subr.bf16.mxu0 0
    %1494 = vmatpush1.bf16.msra.mxu0 0
    %1495 = vmatprep.subr.bf16.mxu0 0
    %1496 = vmatpush1.bf16.msra.mxu0 0
    %1497 = vmatprep.subr.bf16.mxu0 0
    %1498 = vmatpush1.bf16.msra.mxu0 0
    %1499 = vmatprep.subr.bf16.mxu0 0
    %1500 = vmatpush1.bf16.msra.mxu0 0
    %1501 = vmatprep.mubr.bf16.mxu0 0
    %1502 = vmatmul.mubr.bf16.gmra.mrb[0].mxu0 %v1464
    %v1503 = vpop.f32.mrb[0].mxu0
    %v1504 = vadd.f32 0.0, %v1503
    %v1505 = vpop.f32.mrb[0].mxu0
    %v1506 = vpop.f32.mrb[0].mxu0
    %v1507 = vpop.f32.mrb[0].mxu0
    %1508 = vdwg.mxu0
    %v1509 = vpack.c.bf16 %v1504, %v1456
    %v1514 = vunpack.c.l.b16 %v494
    %v1515 = vunpack.c.l.b16 %v495
    %v1516 = vunpack.c.l.b16 %v496
    %v1517 = vunpack.c.l.b16 %v497
    %v1518 = vpack.c.b16 %v1515, %v1514
    %v1519 = vpack.c.b16 %v1517, %v1516
    %v1523 = vsel %vm738, %v1509, 0
    %1525 = vmatprep.subr.bf16.mxu0 0
    %1526 = vmatpush1.bf16.msra.mxu0 %v1518
    %1527 = vmatprep.subr.bf16.mxu0 0
    %1528 = vmatpush1.bf16.msra.mxu0 %v1519
    %1529 = vmatprep.subr.bf16.mxu0 0
    %1530 = vmatpush1.bf16.msra.mxu0 0
    %1531 = vmatprep.subr.bf16.mxu0 0
    %1532 = vmatpush1.bf16.msra.mxu0 0
    %1533 = vmatprep.subr.bf16.mxu0 0
    %1534 = vmatpush1.bf16.msra.mxu0 0
    %1535 = vmatprep.subr.bf16.mxu0 0
    %1536 = vmatpush1.bf16.msra.mxu0 0
    %1537 = vmatprep.subr.bf16.mxu0 0
    %1538 = vmatpush1.bf16.msra.mxu0 0
    %1539 = vmatprep.subr.bf16.mxu0 0
    %1540 = vmatpush1.bf16.msra.mxu0 0
    %1541 = vmatprep.subr.bf16.mxu0 0
    %1542 = vmatpush1.bf16.msra.mxu0 0
    %1543 = vmatprep.subr.bf16.mxu0 0
    %1544 = vmatpush1.bf16.msra.mxu0 0
    %1545 = vmatprep.subr.bf16.mxu0 0
    %1546 = vmatpush1.bf16.msra.mxu0 0
    %1547 = vmatprep.subr.bf16.mxu0 0
    %1548 = vmatpush1.bf16.msra.mxu0 0
    %1549 = vmatprep.subr.bf16.mxu0 0
    %1550 = vmatpush1.bf16.msra.mxu0 0
    %1551 = vmatprep.subr.bf16.mxu0 0
    %1552 = vmatpush1.bf16.msra.mxu0 0
    %1553 = vmatprep.subr.bf16.mxu0 0
    %1554 = vmatpush1.bf16.msra.mxu0 0
    %1555 = vmatprep.subr.bf16.mxu0 0
    %1556 = vmatpush1.bf16.msra.mxu0 0
    %1557 = vmatprep.mubr.bf16.mxu0 0
    %1558 = vmatmul.mubr.bf16.gmra.mrb[0].mxu0 %v1523
    %v1559 = vpop.f32.mrb[0].mxu0
    %v1560 = vadd.f32 0.0, %v1559
    %v1561 = vpop.f32.mrb[0].mxu0
    %v1562 = vpop.f32.mrb[0].mxu0
    %v1563 = vadd.f32 0.0, %v1562
    %v1564 = vpop.f32.mrb[0].mxu0
    %1565 = vdwg.mxu0
    %v1566 = vadd.f32 %v1283, %v1560
    %v1567 = vadd.f32 %v1286, %v1563
    %1568 = vrot.lane.b32.xlu0 %v732, 32
    %v1569 = vpop.permute.xlu0 %1568
    %1570 = vrot.lane.b32.xlu0 %v734, 32
    %v1571 = vpop.permute.xlu0 %1570
    %v1573 = vsel %vm738, %v1569, 0
    %v1576 = vsel %vm738, %v1571, 0
    %1578 = vmatprep.subr.bf16.mxu0 0
    %1579 = vmatpush1.bf16.xpose.msra.mxu0 %v1576
    %1580 = vmatprep.subr.bf16.mxu0 0
    %1581 = vmatpush1.bf16.xpose.msra.mxu0 0
    %1582 = vmatprep.subr.bf16.mxu0 0
    %1583 = vmatpush1.bf16.xpose.msra.mxu0 0
    %1584 = vmatprep.subr.bf16.mxu0 0
    %1585 = vmatpush1.bf16.xpose.msra.mxu0 0
    %1586 = vmatprep.subr.bf16.mxu0 0
    %1587 = vmatpush1.bf16.xpose.msra.mxu0 0
    %1588 = vmatprep.subr.bf16.mxu0 0
    %1589 = vmatpush1.bf16.xpose.msra.mxu0 0
    %1590 = vmatprep.subr.bf16.mxu0 0
    %1591 = vmatpush1.bf16.xpose.msra.mxu0 0
    %1592 = vmatprep.subr.bf16.mxu0 0
    %1593 = vmatpush1.bf16.xpose.msra.mxu0 0
    %1594 = vmatprep.subr.bf16.mxu0 0
    %1595 = vmatpush1.bf16.xpose.msra.mxu0 0
    %1596 = vmatprep.subr.bf16.mxu0 0
    %1597 = vmatpush1.bf16.xpose.msra.mxu0 0
    %1598 = vmatprep.subr.bf16.mxu0 0
    %1599 = vmatpush1.bf16.xpose.msra.mxu0 0
    %1600 = vmatprep.subr.bf16.mxu0 0
    %1601 = vmatpush1.bf16.xpose.msra.mxu0 0
    %1602 = vmatprep.subr.bf16.mxu0 0
    %1603 = vmatpush1.bf16.xpose.msra.mxu0 0
    %1604 = vmatprep.subr.bf16.mxu0 0
    %1605 = vmatpush1.bf16.xpose.msra.mxu0 0
    %1606 = vmatprep.subr.bf16.mxu0 0
    %1607 = vmatpush1.bf16.xpose.msra.mxu0 0
    %1608 = vmatprep.subr.bf16.mxu0 0
    %1609 = vmatpush1.bf16.xpose.msra.mxu0 0
    %1610 = vmatprep.mubr.bf16.mxu0 0
    %1611 = vmatmul.mubr.bf16.gmra.mrb[0].mxu0 %v1573
    %v1612 = vpop.f32.mrb[0].mxu0
    %v1613 = vadd.f32 %v447, %v1612
    %v1614 = vpop.f32.mrb[0].mxu0
    %v1615 = vpop.f32.mrb[0].mxu0
    %v1616 = vpop.f32.mrb[0].mxu0
    %1617 = vdwg.mxu0
    %1618 = vrot.lane.b32.xlu0 %v733, 32
    %v1619 = vpop.permute.xlu0 %1618
    %1620 = vrot.lane.b32.xlu0 %v735, 32
    %v1621 = vpop.permute.xlu0 %1620
    %v1623 = vsel %vm738, %v1619, 0
    %v1626 = vsel %vm738, %v1621, 0
    %1628 = vmatprep.subr.bf16.mxu0 0
    %1629 = vmatpush1.bf16.xpose.msra.mxu0 %v1626
    %1630 = vmatprep.subr.bf16.mxu0 0
    %1631 = vmatpush1.bf16.xpose.msra.mxu0 0
    %1632 = vmatprep.subr.bf16.mxu0 0
    %1633 = vmatpush1.bf16.xpose.msra.mxu0 0
    %1634 = vmatprep.subr.bf16.mxu0 0
    %1635 = vmatpush1.bf16.xpose.msra.mxu0 0
    %1636 = vmatprep.subr.bf16.mxu0 0
    %1637 = vmatpush1.bf16.xpose.msra.mxu0 0
    %1638 = vmatprep.subr.bf16.mxu0 0
    %1639 = vmatpush1.bf16.xpose.msra.mxu0 0
    %1640 = vmatprep.subr.bf16.mxu0 0
    %1641 = vmatpush1.bf16.xpose.msra.mxu0 0
    %1642 = vmatprep.subr.bf16.mxu0 0
    %1643 = vmatpush1.bf16.xpose.msra.mxu0 0
    %1644 = vmatprep.subr.bf16.mxu0 0
    %1645 = vmatpush1.bf16.xpose.msra.mxu0 0
    %1646 = vmatprep.subr.bf16.mxu0 0
    %1647 = vmatpush1.bf16.xpose.msra.mxu0 0
    %1648 = vmatprep.subr.bf16.mxu0 0
    %1649 = vmatpush1.bf16.xpose.msra.mxu0 0
    %1650 = vmatprep.subr.bf16.mxu0 0
    %1651 = vmatpush1.bf16.xpose.msra.mxu0 0
    %1652 = vmatprep.subr.bf16.mxu0 0
    %1653 = vmatpush1.bf16.xpose.msra.mxu0 0
    %1654 = vmatprep.subr.bf16.mxu0 0
    %1655 = vmatpush1.bf16.xpose.msra.mxu0 0
    %1656 = vmatprep.subr.bf16.mxu0 0
    %1657 = vmatpush1.bf16.xpose.msra.mxu0 0
    %1658 = vmatprep.subr.bf16.mxu0 0
    %1659 = vmatpush1.bf16.xpose.msra.mxu0 0
    %1660 = vmatprep.mubr.bf16.mxu0 0
    %1661 = vmatmul.mubr.bf16.gmra.mrb[0].mxu0 %v1623
    %v1662 = vpop.f32.mrb[0].mxu0
    %v1663 = vadd.f32 %v451, %v1662
    %v1664 = vpop.f32.mrb[0].mxu0
    %v1665 = vpop.f32.mrb[0].mxu0
    %v1666 = vpop.f32.mrb[0].mxu0
    %1667 = vdwg.mxu0
    %v1668 = vsel %vm831, %v1613, -inf
    %1669 = vmax.xlane.f32.xlu0 %v1668
    %v1670 = vpop.xlane.xlu0 %1669
    %v1671 = vsel %vm831, %v1663, -inf
    %1672 = vmax.xlane.f32.xlu0 %v1671
    %v1673 = vpop.xlane.xlu0 %1672
    %v1674 = vsub.f32 %v1613, %v1670
    %v1675 = vsub.f32 %v1663, %v1673
    %v1676 = vmul.f32 %v1674, 1.442695
    %v1677 = vpow.pop %v1676
    %v1678 = vmul.f32 %v1675, 1.442695
    %v1679 = vpow.pop %v1678
    %v1680 = vsel %vm831, %v1677, 0.0
    %1681 = vadd.xlane.f32.xlu0 %v1680
    %v1682 = vpop.xlane.xlu0 %1681
    %v1683 = vsel %vm831, %v1679, 0.0
    %1684 = vadd.xlane.f32.xlu0 %v1683
    %v1685 = vpop.xlane.xlu0 %1684
    %v1686 = vrcp.pop %v1682
    %v1687 = vrcp.pop %v1685
    %v1688 = vmul.f32 %v1677, %v1686
    %v1689 = vmul.f32 %v1679, %v1687
    %v1690 = vpack.c.bf16 %v1688, %v1688
    %v1691 = vpack.c.bf16 %v1689, %v1689
    %1692 = vrot.lane.b32.xlu0 %v736, 32
    %v1693 = vpop.permute.xlu0 %1692
    %v1695 = vsel %vm831, %v1690, 0
    %v1698 = vsel %vm859, %v1693, 0
    %1700 = vmatprep.subr.bf16.mxu0 0
    %1701 = vmatpush1.bf16.msra.mxu0 %v1698
    %1702 = vmatprep.subr.bf16.mxu0 0
    %1703 = vmatpush1.bf16.msra.mxu0 0
    %1704 = vmatprep.subr.bf16.mxu0 0
    %1705 = vmatpush1.bf16.msra.mxu0 0
    %1706 = vmatprep.subr.bf16.mxu0 0
    %1707 = vmatpush1.bf16.msra.mxu0 0
    %1708 = vmatprep.subr.bf16.mxu0 0
    %1709 = vmatpush1.bf16.msra.mxu0 0
    %1710 = vmatprep.subr.bf16.mxu0 0
    %1711 = vmatpush1.bf16.msra.mxu0 0
    %1712 = vmatprep.subr.bf16.mxu0 0
    %1713 = vmatpush1.bf16.msra.mxu0 0
    %1714 = vmatprep.subr.bf16.mxu0 0
    %1715 = vmatpush1.bf16.msra.mxu0 0
    %1716 = vmatprep.subr.bf16.mxu0 0
    %1717 = vmatpush1.bf16.msra.mxu0 0
    %1718 = vmatprep.subr.bf16.mxu0 0
    %1719 = vmatpush1.bf16.msra.mxu0 0
    %1720 = vmatprep.subr.bf16.mxu0 0
    %1721 = vmatpush1.bf16.msra.mxu0 0
    %1722 = vmatprep.subr.bf16.mxu0 0
    %1723 = vmatpush1.bf16.msra.mxu0 0
    %1724 = vmatprep.subr.bf16.mxu0 0
    %1725 = vmatpush1.bf16.msra.mxu0 0
    %1726 = vmatprep.subr.bf16.mxu0 0
    %1727 = vmatpush1.bf16.msra.mxu0 0
    %1728 = vmatprep.subr.bf16.mxu0 0
    %1729 = vmatpush1.bf16.msra.mxu0 0
    %1730 = vmatprep.subr.bf16.mxu0 0
    %1731 = vmatpush1.bf16.msra.mxu0 0
    %1732 = vmatprep.mubr.bf16.mxu0 0
    %1733 = vmatmul.mubr.bf16.gmra.mrb[0].mxu0 %v1695
    %v1734 = vpop.f32.mrb[0].mxu0
    %v1735 = vadd.f32 0.0, %v1734
    %v1736 = vpop.f32.mrb[0].mxu0
    %v1737 = vpop.f32.mrb[0].mxu0
    %v1738 = vpop.f32.mrb[0].mxu0
    %1739 = vdwg.mxu0
    %1740 = vrot.lane.b32.xlu0 %v737, 32
    %v1741 = vpop.permute.xlu0 %1740
    %v1743 = vsel %vm831, %v1691, 0
    %v1746 = vsel %vm859, %v1741, 0
    %1748 = vmatprep.subr.bf16.mxu0 0
    %1749 = vmatpush1.bf16.msra.mxu0 %v1746
    %1750 = vmatprep.subr.bf16.mxu0 0
    %1751 = vmatpush1.bf16.msra.mxu0 0
    %1752 = vmatprep.subr.bf16.mxu0 0
    %1753 = vmatpush1.bf16.msra.mxu0 0
    %1754 = vmatprep.subr.bf16.mxu0 0
    %1755 = vmatpush1.bf16.msra.mxu0 0
    %1756 = vmatprep.subr.bf16.mxu0 0
    %1757 = vmatpush1.bf16.msra.mxu0 0
    %1758 = vmatprep.subr.bf16.mxu0 0
    %1759 = vmatpush1.bf16.msra.mxu0 0
    %1760 = vmatprep.subr.bf16.mxu0 0
    %1761 = vmatpush1.bf16.msra.mxu0 0
    %1762 = vmatprep.subr.bf16.mxu0 0
    %1763 = vmatpush1.bf16.msra.mxu0 0
    %1764 = vmatprep.subr.bf16.mxu0 0
    %1765 = vmatpush1.bf16.msra.mxu0 0
    %1766 = vmatprep.subr.bf16.mxu0 0
    %1767 = vmatpush1.bf16.msra.mxu0 0
    %1768 = vmatprep.subr.bf16.mxu0 0
    %1769 = vmatpush1.bf16.msra.mxu0 0
    %1770 = vmatprep.subr.bf16.mxu0 0
    %1771 = vmatpush1.bf16.msra.mxu0 0
    %1772 = vmatprep.subr.bf16.mxu0 0
    %1773 = vmatpush1.bf16.msra.mxu0 0
    %1774 = vmatprep.subr.bf16.mxu0 0
    %1775 = vmatpush1.bf16.msra.mxu0 0
    %1776 = vmatprep.subr.bf16.mxu0 0
    %1777 = vmatpush1.bf16.msra.mxu0 0
    %1778 = vmatprep.subr.bf16.mxu0 0
    %1779 = vmatpush1.bf16.msra.mxu0 0
    %1780 = vmatprep.mubr.bf16.mxu0 0
    %1781 = vmatmul.mubr.bf16.gmra.mrb[0].mxu0 %v1743
    %v1782 = vpop.f32.mrb[0].mxu0
    %v1783 = vadd.f32 0.0, %v1782
    %v1784 = vpop.f32.mrb[0].mxu0
    %v1785 = vpop.f32.mrb[0].mxu0
    %v1786 = vpop.f32.mrb[0].mxu0
    %1787 = vdwg.mxu0
    %v1788 = vpack.c.bf16 %v1783, %v1735
    %v1793 = vunpack.c.l.b16 %v498
    %v1794 = vunpack.c.l.b16 %v499
    %v1795 = vunpack.c.l.b16 %v500
    %v1796 = vunpack.c.l.b16 %v501
    %v1797 = vpack.c.b16 %v1794, %v1793
    %v1798 = vpack.c.b16 %v1796, %v1795
    %v1802 = vsel %vm738, %v1788, 0
    %1804 = vmatprep.subr.bf16.mxu0 0
    %1805 = vmatpush1.bf16.msra.mxu0 %v1797
    %1806 = vmatprep.subr.bf16.mxu0 0
    %1807 = vmatpush1.bf16.msra.mxu0 %v1798
    %1808 = vmatprep.subr.bf16.mxu0 0
    %1809 = vmatpush1.bf16.msra.mxu0 0
    %1810 = vmatprep.subr.bf16.mxu0 0
    %1811 = vmatpush1.bf16.msra.mxu0 0
    %1812 = vmatprep.subr.bf16.mxu0 0
    %1813 = vmatpush1.bf16.msra.mxu0 0
    %1814 = vmatprep.subr.bf16.mxu0 0
    %1815 = vmatpush1.bf16.msra.mxu0 0
    %1816 = vmatprep.subr.bf16.mxu0 0
    %1817 = vmatpush1.bf16.msra.mxu0 0
    %1818 = vmatprep.subr.bf16.mxu0 0
    %1819 = vmatpush1.bf16.msra.mxu0 0
    %1820 = vmatprep.subr.bf16.mxu0 0
    %1821 = vmatpush1.bf16.msra.mxu0 0
    %1822 = vmatprep.subr.bf16.mxu0 0
    %1823 = vmatpush1.bf16.msra.mxu0 0
    %1824 = vmatprep.subr.bf16.mxu0 0
    %1825 = vmatpush1.bf16.msra.mxu0 0
    %1826 = vmatprep.subr.bf16.mxu0 0
    %1827 = vmatpush1.bf16.msra.mxu0 0
    %1828 = vmatprep.subr.bf16.mxu0 0
    %1829 = vmatpush1.bf16.msra.mxu0 0
    %1830 = vmatprep.subr.bf16.mxu0 0
    %1831 = vmatpush1.bf16.msra.mxu0 0
    %1832 = vmatprep.subr.bf16.mxu0 0
    %1833 = vmatpush1.bf16.msra.mxu0 0
    %1834 = vmatprep.subr.bf16.mxu0 0
    %1835 = vmatpush1.bf16.msra.mxu0 0
    %1836 = vmatprep.mubr.bf16.mxu0 0
    %1837 = vmatmul.mubr.bf16.gmra.mrb[0].mxu0 %v1802
    %v1838 = vpop.f32.mrb[0].mxu0
    %v1839 = vadd.f32 0.0, %v1838
    %v1840 = vpop.f32.mrb[0].mxu0
    %v1841 = vpop.f32.mrb[0].mxu0
    %v1842 = vadd.f32 0.0, %v1841
    %v1843 = vpop.f32.mrb[0].mxu0
    %1844 = vdwg.mxu0
    %v1845 = vadd.f32 %v1566, %v1839
    %v1846 = vadd.f32 %v1567, %v1842
    %v1847 = vld [vmem:[%s9] sm:$0x1]
    %v1849 = vlaneseq
    %v1850 = vshrl.u32 %v1849, 7
    %v1851 = vsub.s32 0, %v1850
    %v1852 = vrot.slane %v1847, %v1851
    %v1854 = vadd.f32 %v1845, %v1852
    %v1855 = vadd.f32 %v1846, %v1852
    %v1856 = vadd.f32 %v1854, %v432
    %v1857 = vadd.f32 %v1855, %v433
    %v1858 = vld [vmem:[#allocation11] sm:$0x1]
    %v1859 = vld [vmem:[#allocation13] sm:$0x1]
    %1860 = vadd.xlane.f32.xlu0 %v1856
    %v1861 = vpop.xlane.xlu0 %1860
    %1862 = vadd.xlane.f32.xlu0 %v1857
    %v1863 = vpop.xlane.xlu0 %1862
    %v1864 = vmul.f32 %v1861, %v399
    %v1865 = vmul.f32 %v1863, %v399
    %v1866 = vsub.f32 %v1856, %v1864
    %v1867 = vsub.f32 %v1857, %v1865
    %v1868 = vmul.f32 %v1866, %v1866
    %v1869 = vmul.f32 %v1867, %v1867
    %1870 = vadd.xlane.f32.xlu0 %v1868
    %v1871 = vpop.xlane.xlu0 %1870
    %1872 = vadd.xlane.f32.xlu0 %v1869
    %v1873 = vpop.xlane.xlu0 %1872
    %v1874 = vmul.f32 %v1871, %v399
    %v1875 = vmul.f32 %v1873, %v399
    %v1876 = vadd.f32 %v1874, 1e-12
    %v1877 = vadd.f32 %v1875, 1e-12
    %v1878 = vrsqrt.pop %v1876
    %v1879 = vrsqrt.pop %v1877
    %v1880 = vmul.f32 %v1866, %v1878
    %v1881 = vmul.f32 %v1867, %v1879
    %v1883 = vlaneseq
    %v1884 = vshrl.u32 %v1883, 7
    %v1885 = vsub.s32 0, %v1884
    %v1886 = vrot.slane %v1858, %v1885
    %v1888 = vmul.f32 %v1880, %v1886
    %v1889 = vmul.f32 %v1881, %v1886
    %v1891 = vlaneseq
    %v1892 = vshrl.u32 %v1891, 7
    %v1893 = vsub.s32 0, %v1892
    %v1894 = vrot.slane %v1859, %v1893
    %v1896 = vadd.f32 %v1888, %v1894
    %v1897 = vadd.f32 %v1889, %v1894
    %v1898 = vld [vmem:[#allocation14] sm:$0xff]
    %v1899 = vld [vmem:[#allocation14 + $0x8] sm:$0xff]
    %v1900 = vld [vmem:[#allocation14 + $0x10] sm:$0xff]
    %v1901 = vld [vmem:[#allocation14 + $0x18] sm:$0xff]
    %v1902 = vld [vmem:[#allocation14 + $0x20] sm:$0xff]
    %v1903 = vld [vmem:[#allocation14 + $0x28] sm:$0xff]
    %v1904 = vld [vmem:[#allocation14 + $0x30] sm:$0xff]
    %v1905 = vld [vmem:[#allocation14 + $0x38] sm:$0xff]
    %v1906 = vld [vmem:[#allocation14 + $0x40] sm:$0xff]
    %v1907 = vld [vmem:[#allocation14 + $0x48] sm:$0xff]
    %v1908 = vld [vmem:[#allocation14 + $0x50] sm:$0xff]
    %v1909 = vld [vmem:[#allocation14 + $0x58] sm:$0xff]
    %v1910 = vld [vmem:[#allocation14 + $0x60] sm:$0xff]
    %v1911 = vld [vmem:[#allocation14 + $0x68] sm:$0xff]
    %v1912 = vld [vmem:[#allocation14 + $0x70] sm:$0xff]
    %v1913 = vld [vmem:[#allocation14 + $0x78] sm:$0xff]
    %v1914 = vld [vmem:[%s13] sm:$0x3]
    %v1915 = vpack.c.bf16 %v1897, %v1896
    %v1917 = vlaneseq
    %v1918 = vshrl.u32 %v1917, 7
    %v1919 = vsub.s32 0, %v1918
    %v1920 = vrot.slane %v1914, %v1919
    %v1921 = vlaneseq
    %v1922 = vshrl.u32 %v1921, 7
    %v1923 = vsub.s32 1, %v1922
    %v1924 = vrot.slane %v1914, %v1923
    %v1943 = vunpack.c.l.b16 %v1898
    %v1944 = vunpack.c.h.b16 %v1898
    %v1945 = vunpack.c.l.b16 %v1899
    %v1946 = vunpack.c.h.b16 %v1899
    %v1947 = vunpack.c.l.b16 %v1900
    %v1948 = vunpack.c.h.b16 %v1900
    %v1949 = vunpack.c.l.b16 %v1901
    %v1950 = vunpack.c.h.b16 %v1901
    %v1951 = vunpack.c.l.b16 %v1902
    %v1952 = vunpack.c.h.b16 %v1902
    %v1953 = vunpack.c.l.b16 %v1903
    %v1954 = vunpack.c.h.b16 %v1903
    %v1955 = vunpack.c.l.b16 %v1904
    %v1956 = vunpack.c.h.b16 %v1904
    %v1957 = vunpack.c.l.b16 %v1905
    %v1958 = vunpack.c.h.b16 %v1905
    %v1959 = vunpack.c.l.b16 %v1906
    %v1960 = vunpack.c.h.b16 %v1906
    %v1961 = vunpack.c.l.b16 %v1907
    %v1962 = vunpack.c.h.b16 %v1907
    %v1963 = vunpack.c.l.b16 %v1908
    %v1964 = vunpack.c.h.b16 %v1908
    %v1965 = vunpack.c.l.b16 %v1909
    %v1966 = vunpack.c.h.b16 %v1909
    %v1967 = vunpack.c.l.b16 %v1910
    %v1968 = vunpack.c.h.b16 %v1910
    %v1969 = vunpack.c.l.b16 %v1911
    %v1970 = vunpack.c.h.b16 %v1911
    %v1971 = vunpack.c.l.b16 %v1912
    %v1972 = vunpack.c.h.b16 %v1912
    %v1973 = vunpack.c.l.b16 %v1913
    %v1974 = vunpack.c.h.b16 %v1913
    %v1975 = vpack.c.b16 %v1945, %v1943
    %v1976 = vpack.c.b16 %v1946, %v1944
    %v1977 = vpack.c.b16 %v1949, %v1947
    %v1978 = vpack.c.b16 %v1950, %v1948
    %v1979 = vpack.c.b16 %v1953, %v1951
    %v1980 = vpack.c.b16 %v1954, %v1952
    %v1981 = vpack.c.b16 %v1957, %v1955
    %v1982 = vpack.c.b16 %v1958, %v1956
    %v1983 = vpack.c.b16 %v1961, %v1959
    %v1984 = vpack.c.b16 %v1962, %v1960
    %v1985 = vpack.c.b16 %v1965, %v1963
    %v1986 = vpack.c.b16 %v1966, %v1964
    %v1987 = vpack.c.b16 %v1969, %v1967
    %v1988 = vpack.c.b16 %v1970, %v1968
    %v1989 = vpack.c.b16 %v1973, %v1971
    %v1990 = vpack.c.b16 %v1974, %v1972
    %2007 = vmatprep.subr.bf16.mxu0 %v1976
    %2008 = vmatpush1.bf16.msra.mxu0 %v1975
    %2009 = vmatprep.subr.bf16.mxu0 %v1978
    %2010 = vmatpush1.bf16.msra.mxu0 %v1977
    %2011 = vmatprep.subr.bf16.mxu0 %v1980
    %2012 = vmatpush1.bf16.msra.mxu0 %v1979
    %2013 = vmatprep.subr.bf16.mxu0 %v1982
    %2014 = vmatpush1.bf16.msra.mxu0 %v1981
    %2015 = vmatprep.subr.bf16.mxu0 %v1984
    %2016 = vmatpush1.bf16.msra.mxu0 %v1983
    %2017 = vmatprep.subr.bf16.mxu0 %v1986
    %2018 = vmatpush1.bf16.msra.mxu0 %v1985
    %2019 = vmatprep.subr.bf16.mxu0 %v1988
    %2020 = vmatpush1.bf16.msra.mxu0 %v1987
    %2021 = vmatprep.subr.bf16.mxu0 %v1990
    %2022 = vmatpush1.bf16.msra.mxu0 %v1989
    %2023 = vmatprep.subr.bf16.mxu0 0
    %2024 = vmatpush1.bf16.msra.mxu0 0
    %2025 = vmatprep.subr.bf16.mxu0 0
    %2026 = vmatpush1.bf16.msra.mxu0 0
    %2027 = vmatprep.subr.bf16.mxu0 0
    %2028 = vmatpush1.bf16.msra.mxu0 0
    %2029 = vmatprep.subr.bf16.mxu0 0
    %2030 = vmatpush1.bf16.msra.mxu0 0
    %2031 = vmatprep.subr.bf16.mxu0 0
    %2032 = vmatpush1.bf16.msra.mxu0 0
    %2033 = vmatprep.subr.bf16.mxu0 0
    %2034 = vmatpush1.bf16.msra.mxu0 0
    %2035 = vmatprep.subr.bf16.mxu0 0
    %2036 = vmatpush1.bf16.msra.mxu0 0
    %2037 = vmatprep.subr.bf16.mxu0 0
    %2038 = vmatpush1.bf16.msra.mxu0 0
    %2039 = vmatprep.mubr.bf16.mxu0 0
    %2040 = vmatmul.mubr.bf16.gmra.mrb[0].mxu0 %v1915
    %v2041 = vpop.f32.mrb[0].mxu0
    %v2042 = vadd.f32 %v1920, %v2041
    %v2043 = vpop.f32.mrb[0].mxu0
    %v2044 = vadd.f32 %v1924, %v2043
    %v2045 = vpop.f32.mrb[0].mxu0
    %v2046 = vadd.f32 %v1920, %v2045
    %v2047 = vpop.f32.mrb[0].mxu0
    %v2048 = vadd.f32 %v1924, %v2047
    %2049 = vdwg.mxu0
    %v2050 = vmul.f32 %v2042, %v2042
    %v2051 = vmul.f32 %v2044, %v2044
    %v2052 = vmul.f32 %v2046, %v2046
    %v2053 = vmul.f32 %v2048, %v2048
    %v2054 = vmul.f32 %v2042, %v2050
    %v2055 = vmul.f32 %v2044, %v2051
    %v2056 = vmul.f32 %v2046, %v2052
    %v2057 = vmul.f32 %v2048, %v2053
    %v2058 = vmul.f32 %v2054, 0.044715
    %v2059 = vmul.f32 %v2055, 0.044715
    %v2060 = vmul.f32 %v2056, 0.044715
    %v2061 = vmul.f32 %v2057, 0.044715
    %v2062 = vadd.f32 %v2042, %v2058
    %v2063 = vadd.f32 %v2044, %v2059
    %v2064 = vadd.f32 %v2046, %v2060
    %v2065 = vadd.f32 %v2048, %v2061
    %v2066 = vmul.f32 %v2062, 0.7978846
    %v2067 = vmul.f32 %v2063, 0.7978846
    %v2068 = vmul.f32 %v2064, 0.7978846
    %v2069 = vmul.f32 %v2065, 0.7978846
    %v2070 = vtanh.pop %v2066
    %v2071 = vtanh.pop %v2067
    %v2072 = vtanh.pop %v2068
    %v2073 = vtanh.pop %v2069
    %v2074 = vadd.f32 %v2070, 1.0
    %v2075 = vadd.f32 %v2071, 1.0
    %v2076 = vadd.f32 %v2072, 1.0
    %v2077 = vadd.f32 %v2073, 1.0
    %v2078 = vmul.f32 %v2074, 0.5
    %v2079 = vmul.f32 %v2075, 0.5
    %v2080 = vmul.f32 %v2076, 0.5
    %v2081 = vmul.f32 %v2077, 0.5
    %v2082 = vmul.f32 %v2042, %v2078
    %v2083 = vmul.f32 %v2044, %v2079
    %v2084 = vmul.f32 %v2046, %v2080
    %v2085 = vmul.f32 %v2048, %v2081
    %v2086 = vld [vmem:[#allocation16] sm:$0xf]
    %v2087 = vld [vmem:[#allocation16 + $0x4] sm:$0xf]
    %v2088 = vld [vmem:[#allocation16 + $0x8] sm:$0xf]
    %v2089 = vld [vmem:[#allocation16 + $0xc] sm:$0xf]
    %v2090 = vld [vmem:[#allocation16 + $0x10] sm:$0xf]
    %v2091 = vld [vmem:[#allocation16 + $0x14] sm:$0xf]
    %v2092 = vld [vmem:[#allocation16 + $0x18] sm:$0xf]
    %v2093 = vld [vmem:[#allocation16 + $0x1c] sm:$0xf]
    %v2094 = vld [vmem:[#allocation16 + $0x20] sm:$0xf]
    %v2095 = vld [vmem:[#allocation16 + $0x24] sm:$0xf]
    %v2096 = vld [vmem:[#allocation16 + $0x28] sm:$0xf]
    %v2097 = vld [vmem:[#allocation16 + $0x2c] sm:$0xf]
    %v2098 = vld [vmem:[#allocation16 + $0x30] sm:$0xf]
    %v2099 = vld [vmem:[#allocation16 + $0x34] sm:$0xf]
    %v2100 = vld [vmem:[#allocation16 + $0x38] sm:$0xf]
    %v2101 = vld [vmem:[#allocation16 + $0x3c] sm:$0xf]
    %v2102 = vld [vmem:[#allocation16 + $0x40] sm:$0xf]
    %v2103 = vld [vmem:[#allocation16 + $0x44] sm:$0xf]
    %v2104 = vld [vmem:[#allocation16 + $0x48] sm:$0xf]
    %v2105 = vld [vmem:[#allocation16 + $0x4c] sm:$0xf]
    %v2106 = vld [vmem:[#allocation16 + $0x50] sm:$0xf]
    %v2107 = vld [vmem:[#allocation16 + $0x54] sm:$0xf]
    %v2108 = vld [vmem:[#allocation16 + $0x58] sm:$0xf]
    %v2109 = vld [vmem:[#allocation16 + $0x5c] sm:$0xf]
    %v2110 = vld [vmem:[#allocation16 + $0x60] sm:$0xf]
    %v2111 = vld [vmem:[#allocation16 + $0x64] sm:$0xf]
    %v2112 = vld [vmem:[#allocation16 + $0x68] sm:$0xf]
    %v2113 = vld [vmem:[#allocation16 + $0x6c] sm:$0xf]
    %v2114 = vld [vmem:[#allocation16 + $0x70] sm:$0xf]
    %v2115 = vld [vmem:[#allocation16 + $0x74] sm:$0xf]
    %v2116 = vld [vmem:[#allocation16 + $0x78] sm:$0xf]
    %v2117 = vld [vmem:[#allocation16 + $0x7c] sm:$0xf]
    %v2118 = vld [vmem:[#allocation17] sm:$0x1]
    %v2119 = vpack.c.bf16 %v2084, %v2082
    %v2120 = vpack.c.bf16 %v2085, %v2083
    %v2122 = vlaneseq
    %v2123 = vshrl.u32 %v2122, 7
    %v2124 = vsub.s32 0, %v2123
    %v2125 = vrot.slane %v2118, %v2124
    %v2159 = vunpack.c.l.b16 %v2086
    %v2160 = vunpack.c.l.b16 %v2087
    %v2161 = vunpack.c.l.b16 %v2088
    %v2162 = vunpack.c.l.b16 %v2089
    %v2163 = vunpack.c.l.b16 %v2090
    %v2164 = vunpack.c.l.b16 %v2091
    %v2165 = vunpack.c.l.b16 %v2092
    %v2166 = vunpack.c.l.b16 %v2093
    %v2167 = vunpack.c.l.b16 %v2094
    %v2168 = vunpack.c.l.b16 %v2095
    %v2169 = vunpack.c.l.b16 %v2096
    %v2170 = vunpack.c.l.b16 %v2097
    %v2171 = vunpack.c.l.b16 %v2098
    %v2172 = vunpack.c.l.b16 %v2099
    %v2173 = vunpack.c.l.b16 %v2100
    %v2174 = vunpack.c.l.b16 %v2101
    %v2175 = vunpack.c.l.b16 %v2102
    %v2176 = vunpack.c.l.b16 %v2103
    %v2177 = vunpack.c.l.b16 %v2104
    %v2178 = vunpack.c.l.b16 %v2105
    %v2179 = vunpack.c.l.b16 %v2106
    %v2180 = vunpack.c.l.b16 %v2107
    %v2181 = vunpack.c.l.b16 %v2108
    %v2182 = vunpack.c.l.b16 %v2109
    %v2183 = vunpack.c.l.b16 %v2110
    %v2184 = vunpack.c.l.b16 %v2111
    %v2185 = vunpack.c.l.b16 %v2112
    %v2186 = vunpack.c.l.b16 %v2113
    %v2187 = vunpack.c.l.b16 %v2114
    %v2188 = vunpack.c.l.b16 %v2115
    %v2189 = vunpack.c.l.b16 %v2116
    %v2190 = vunpack.c.l.b16 %v2117
    %v2191 = vpack.c.b16 %v2160, %v2159
    %v2192 = vpack.c.b16 %v2162, %v2161
    %v2193 = vpack.c.b16 %v2164, %v2163
    %v2194 = vpack.c.b16 %v2166, %v2165
    %v2195 = vpack.c.b16 %v2168, %v2167
    %v2196 = vpack.c.b16 %v2170, %v2169
    %v2197 = vpack.c.b16 %v2172, %v2171
    %v2198 = vpack.c.b16 %v2174, %v2173
    %v2199 = vpack.c.b16 %v2176, %v2175
    %v2200 = vpack.c.b16 %v2178, %v2177
    %v2201 = vpack.c.b16 %v2180, %v2179
    %v2202 = vpack.c.b16 %v2182, %v2181
    %v2203 = vpack.c.b16 %v2184, %v2183
    %v2204 = vpack.c.b16 %v2186, %v2185
    %v2205 = vpack.c.b16 %v2188, %v2187
    %v2206 = vpack.c.b16 %v2190, %v2189
    %2223 = vmatprep.subr.bf16.mxu0 0
    %2224 = vmatpush1.bf16.msra.mxu0 %v2191
    %2225 = vmatprep.subr.bf16.mxu0 0
    %2226 = vmatpush1.bf16.msra.mxu0 %v2192
    %2227 = vmatprep.subr.bf16.mxu0 0
    %2228 = vmatpush1.bf16.msra.mxu0 %v2193
    %2229 = vmatprep.subr.bf16.mxu0 0
    %2230 = vmatpush1.bf16.msra.mxu0 %v2194
    %2231 = vmatprep.subr.bf16.mxu0 0
    %2232 = vmatpush1.bf16.msra.mxu0 %v2195
    %2233 = vmatprep.subr.bf16.mxu0 0
    %2234 = vmatpush1.bf16.msra.mxu0 %v2196
    %2235 = vmatprep.subr.bf16.mxu0 0
    %2236 = vmatpush1.bf16.msra.mxu0 %v2197
    %2237 = vmatprep.subr.bf16.mxu0 0
    %2238 = vmatpush1.bf16.msra.mxu0 %v2198
    %2239 = vmatprep.subr.bf16.mxu0 0
    %2240 = vmatpush1.bf16.msra.mxu0 %v2199
    %2241 = vmatprep.subr.bf16.mxu0 0
    %2242 = vmatpush1.bf16.msra.mxu0 %v2200
    %2243 = vmatprep.subr.bf16.mxu0 0
    %2244 = vmatpush1.bf16.msra.mxu0 %v2201
    %2245 = vmatprep.subr.bf16.mxu0 0
    %2246 = vmatpush1.bf16.msra.mxu0 %v2202
    %2247 = vmatprep.subr.bf16.mxu0 0
    %2248 = vmatpush1.bf16.msra.mxu0 %v2203
    %2249 = vmatprep.subr.bf16.mxu0 0
    %2250 = vmatpush1.bf16.msra.mxu0 %v2204
    %2251 = vmatprep.subr.bf16.mxu0 0
    %2252 = vmatpush1.bf16.msra.mxu0 %v2205
    %2253 = vmatprep.subr.bf16.mxu0 0
    %2254 = vmatpush1.bf16.msra.mxu0 %v2206
    %2255 = vmatprep.mubr.bf16.mxu0 %v2120
    %2256 = vmatmul.mubr.bf16.gmra.mrb[0].mxu0 %v2119
    %v2257 = vpop.f32.mrb[0].mxu0
    %v2258 = vadd.f32 %v2125, %v2257
    %v2259 = vpop.f32.mrb[0].mxu0
    %v2260 = vpop.f32.mrb[0].mxu0
    %v2261 = vadd.f32 %v2125, %v2260
    %v2262 = vpop.f32.mrb[0].mxu0
    %2263 = vdwg.mxu0
    %v2264 = vadd.f32 %v2258, %v1896
    %v2265 = vadd.f32 %v2261, %v1897
    %v2266 = vld [vmem:[#allocation19] sm:$0x1]
    %v2267 = vld [vmem:[#allocation20] sm:$0x1]
    %2268 = vadd.xlane.f32.xlu0 %v2264
    %v2269 = vpop.xlane.xlu0 %2268
    %2270 = vadd.xlane.f32.xlu0 %v2265
    %v2271 = vpop.xlane.xlu0 %2270
    %v2272 = vmul.f32 %v2269, %v399
    %v2273 = vmul.f32 %v2271, %v399
    %v2274 = vsub.f32 %v2264, %v2272
    %v2275 = vsub.f32 %v2265, %v2273
    %v2276 = vmul.f32 %v2274, %v2274
    %v2277 = vmul.f32 %v2275, %v2275
    %2278 = vadd.xlane.f32.xlu0 %v2276
    %v2279 = vpop.xlane.xlu0 %2278
    %2280 = vadd.xlane.f32.xlu0 %v2277
    %v2281 = vpop.xlane.xlu0 %2280
    %v2282 = vmul.f32 %v2279, %v399
    %v2283 = vmul.f32 %v2281, %v399
    %v2284 = vadd.f32 %v2282, 1e-12
    %v2285 = vadd.f32 %v2283, 1e-12
    %v2286 = vrsqrt.pop %v2284
    %v2287 = vrsqrt.pop %v2285
    %v2288 = vmul.f32 %v2274, %v2286
    %v2289 = vmul.f32 %v2275, %v2287
    %v2291 = vlaneseq
    %v2292 = vshrl.u32 %v2291, 7
    %v2293 = vsub.s32 0, %v2292
    %v2294 = vrot.slane %v2266, %v2293
    %v2296 = vmul.f32 %v2288, %v2294
    %v2297 = vmul.f32 %v2289, %v2294
    %v2299 = vlaneseq
    %v2300 = vshrl.u32 %v2299, 7
    %v2301 = vsub.s32 0, %v2300
    %v2302 = vrot.slane %v2267, %v2301
    %v2304 = vadd.f32 %v2296, %v2302
    %v2305 = vadd.f32 %v2297, %v2302
    %s2306 = scalar_lea.vmem [#allocation8], 192
    %v2307 = vld [vmem:[%s2306] sm:$0xff]
    %v2308 = vld [vmem:[%s2306 + $0x8] sm:$0xf]
    %v2309 = vld [vmem:[%s2306 + $0xc] sm:$0xff]
    %v2310 = vld [vmem:[%s2306 + $0x14] sm:$0xf]
    %v2311 = vld [vmem:[%s2306 + $0x18] sm:$0xff]
    %v2312 = vld [vmem:[%s2306 + $0x20] sm:$0xf]
    %v2313 = vld [vmem:[%s2306 + $0x24] sm:$0xff]
    %v2314 = vld [vmem:[%s2306 + $0x2c] sm:$0xf]
    %v2315 = vld [vmem:[%s2306 + $0x30] sm:$0xff]
    %v2316 = vld [vmem:[%s2306 + $0x38] sm:$0xf]
    %v2317 = vld [vmem:[%s2306 + $0x3c] sm:$0xff]
    %v2318 = vld [vmem:[%s2306 + $0x44] sm:$0xf]
    %v2319 = vld [vmem:[%s2306 + $0x48] sm:$0xff]
    %v2320 = vld [vmem:[%s2306 + $0x50] sm:$0xf]
    %v2321 = vld [vmem:[%s2306 + $0x54] sm:$0xff]
    %v2322 = vld [vmem:[%s2306 + $0x5c] sm:$0xf]
    %v2323 = vld [vmem:[%s2306 + $0x60] sm:$0xff]
    %v2324 = vld [vmem:[%s2306 + $0x68] sm:$0xf]
    %v2325 = vld [vmem:[%s2306 + $0x6c] sm:$0xff]
    %v2326 = vld [vmem:[%s2306 + $0x74] sm:$0xf]
    %v2327 = vld [vmem:[%s2306 + $0x78] sm:$0xff]
    %v2328 = vld [vmem:[%s2306 + $0x80] sm:$0xf]
    %v2329 = vld [vmem:[%s2306 + $0x84] sm:$0xff]
    %v2330 = vld [vmem:[%s2306 + $0x8c] sm:$0xf]
    %v2331 = vld [vmem:[%s2306 + $0x90] sm:$0xff]
    %v2332 = vld [vmem:[%s2306 + $0x98] sm:$0xf]
    %v2333 = vld [vmem:[%s2306 + $0x9c] sm:$0xff]
    %v2334 = vld [vmem:[%s2306 + $0xa4] sm:$0xf]
    %v2335 = vld [vmem:[%s2306 + $0xa8] sm:$0xff]
    %v2336 = vld [vmem:[%s2306 + $0xb0] sm:$0xf]
    %v2337 = vld [vmem:[%s2306 + $0xb4] sm:$0xff]
    %v2338 = vld [vmem:[%s2306 + $0xbc] sm:$0xf]
    %s2339 = scalar_lea.vmem [#allocation10], 64
    %v2340 = vld [vmem:[%s2339] sm:$0xf]
    %v2341 = vld [vmem:[%s2339 + $0x4] sm:$0xf]
    %v2342 = vld [vmem:[%s2339 + $0x8] sm:$0xf]
    %v2343 = vld [vmem:[%s2339 + $0xc] sm:$0xf]
    %v2344 = vld [vmem:[%s2339 + $0x10] sm:$0xf]
    %v2345 = vld [vmem:[%s2339 + $0x14] sm:$0xf]
    %v2346 = vld [vmem:[%s2339 + $0x18] sm:$0xf]
    %v2347 = vld [vmem:[%s2339 + $0x1c] sm:$0xf]
    %v2348 = vld [vmem:[%s2339 + $0x20] sm:$0xf]
    %v2349 = vld [vmem:[%s2339 + $0x24] sm:$0xf]
    %v2350 = vld [vmem:[%s2339 + $0x28] sm:$0xf]
    %v2351 = vld [vmem:[%s2339 + $0x2c] sm:$0xf]
    %v2352 = vld [vmem:[%s2339 + $0x30] sm:$0xf]
    %v2353 = vld [vmem:[%s2339 + $0x34] sm:$0xf]
    %v2354 = vld [vmem:[%s2339 + $0x38] sm:$0xf]
    %v2355 = vld [vmem:[%s2339 + $0x3c] sm:$0xf]
    %s2356 = scalar_lea.vmem %s7, 3
    %v2357 = vld [vmem:[%s2356] sm:$0x7]
    %v2358 = vpack.c.bf16 %v2305, %v2304
    %v2360 = vlaneseq
    %v2361 = vshrl.u32 %v2360, 7
    %v2362 = vsub.s32 0, %v2361
    %v2363 = vrot.slane %v2357, %v2362
    %v2364 = vlaneseq
    %v2365 = vshrl.u32 %v2364, 7
    %v2366 = vsub.s32 1, %v2365
    %v2367 = vrot.slane %v2357, %v2366
    %v2368 = vlaneseq
    %v2369 = vshrl.u32 %v2368, 7
    %v2370 = vsub.s32 2, %v2369
    %v2371 = vrot.slane %v2357, %v2370
    %v2407 = vunpack.c.l.b16 %v2307
    %v2408 = vunpack.c.h.b16 %v2307
    %v2409 = vunpack.c.l.b16 %v2308
    %v2410 = vunpack.c.l.b16 %v2309
    %v2411 = vunpack.c.h.b16 %v2309
    %v2412 = vunpack.c.l.b16 %v2310
    %v2413 = vunpack.c.l.b16 %v2311
    %v2414 = vunpack.c.h.b16 %v2311
    %v2415 = vunpack.c.l.b16 %v2312
    %v2416 = vunpack.c.l.b16 %v2313
    %v2417 = vunpack.c.h.b16 %v2313
    %v2418 = vunpack.c.l.b16 %v2314
    %v2419 = vunpack.c.l.b16 %v2315
    %v2420 = vunpack.c.h.b16 %v2315
    %v2421 = vunpack.c.l.b16 %v2316
    %v2422 = vunpack.c.l.b16 %v2317
    %v2423 = vunpack.c.h.b16 %v2317
    %v2424 = vunpack.c.l.b16 %v2318
    %v2425 = vunpack.c.l.b16 %v2319
    %v2426 = vunpack.c.h.b16 %v2319
    %v2427 = vunpack.c.l.b16 %v2320
    %v2428 = vunpack.c.l.b16 %v2321
    %v2429 = vunpack.c.h.b16 %v2321
    %v2430 = vunpack.c.l.b16 %v2322
    %v2431 = vunpack.c.l.b16 %v2323
    %v2432 = vunpack.c.h.b16 %v2323
    %v2433 = vunpack.c.l.b16 %v2324
    %v2434 = vunpack.c.l.b16 %v2325
    %v2435 = vunpack.c.h.b16 %v2325
    %v2436 = vunpack.c.l.b16 %v2326
    %v2437 = vunpack.c.l.b16 %v2327
    %v2438 = vunpack.c.h.b16 %v2327
    %v2439 = vunpack.c.l.b16 %v2328
    %v2440 = vunpack.c.l.b16 %v2329
    %v2441 = vunpack.c.h.b16 %v2329
    %v2442 = vunpack.c.l.b16 %v2330
    %v2443 = vunpack.c.l.b16 %v2331
    %v2444 = vunpack.c.h.b16 %v2331
    %v2445 = vunpack.c.l.b16 %v2332
    %v2446 = vunpack.c.l.b16 %v2333
    %v2447 = vunpack.c.h.b16 %v2333
    %v2448 = vunpack.c.l.b16 %v2334
    %v2449 = vunpack.c.l.b16 %v2335
    %v2450 = vunpack.c.h.b16 %v2335
    %v2451 = vunpack.c.l.b16 %v2336
    %v2452 = vunpack.c.l.b16 %v2337
    %v2453 = vunpack.c.h.b16 %v2337
    %v2454 = vunpack.c.l.b16 %v2338
    %v2455 = vpack.c.b16 %v2410, %v2407
    %v2456 = vpack.c.b16 %v2411, %v2408
    %v2457 = vpack.c.b16 %v2412, %v2409
    %v2458 = vpack.c.b16 %v2416, %v2413
    %v2459 = vpack.c.b16 %v2417, %v2414
    %v2460 = vpack.c.b16 %v2418, %v2415
    %v2461 = vpack.c.b16 %v2422, %v2419
    %v2462 = vpack.c.b16 %v2423, %v2420
    %v2463 = vpack.c.b16 %v2424, %v2421
    %v2464 = vpack.c.b16 %v2428, %v2425
    %v2465 = vpack.c.b16 %v2429, %v2426
    %v2466 = vpack.c.b16 %v2430, %v2427
    %v2467 = vpack.c.b16 %v2434, %v2431
    %v2468 = vpack.c.b16 %v2435, %v2432
    %v2469 = vpack.c.b16 %v2436, %v2433
    %v2470 = vpack.c.b16 %v2440, %v2437
    %v2471 = vpack.c.b16 %v2441, %v2438
    %v2472 = vpack.c.b16 %v2442, %v2439
    %v2473 = vpack.c.b16 %v2446, %v2443
    %v2474 = vpack.c.b16 %v2447, %v2444
    %v2475 = vpack.c.b16 %v2448, %v2445
    %v2476 = vpack.c.b16 %v2452, %v2449
    %v2477 = vpack.c.b16 %v2453, %v2450
    %v2478 = vpack.c.b16 %v2454, %v2451
    %2503 = vmatprep.subr.bf16.mxu0 %v2456
    %2504 = vmatpush1.bf16.msra.mxu0 %v2455
    %2505 = vmatprep.subr.bf16.mxu0 %v2459
    %2506 = vmatpush1.bf16.msra.mxu0 %v2458
    %2507 = vmatprep.subr.bf16.mxu0 %v2462
    %2508 = vmatpush1.bf16.msra.mxu0 %v2461
    %2509 = vmatprep.subr.bf16.mxu0 %v2465
    %2510 = vmatpush1.bf16.msra.mxu0 %v2464
    %2511 = vmatprep.subr.bf16.mxu0 %v2468
    %2512 = vmatpush1.bf16.msra.mxu0 %v2467
    %2513 = vmatprep.subr.bf16.mxu0 %v2471
    %2514 = vmatpush1.bf16.msra.mxu0 %v2470
    %2515 = vmatprep.subr.bf16.mxu0 %v2474
    %2516 = vmatpush1.bf16.msra.mxu0 %v2473
    %2517 = vmatprep.subr.bf16.mxu0 %v2477
    %2518 = vmatpush1.bf16.msra.mxu0 %v2476
    %2519 = vmatprep.subr.bf16.mxu0 0
    %2520 = vmatpush1.bf16.msra.mxu0 0
    %2521 = vmatprep.subr.bf16.mxu0 0
    %2522 = vmatpush1.bf16.msra.mxu0 0
    %2523 = vmatprep.subr.bf16.mxu0 0
    %2524 = vmatpush1.bf16.msra.mxu0 0
    %2525 = vmatprep.subr.bf16.mxu0 0
    %2526 = vmatpush1.bf16.msra.mxu0 0
    %2527 = vmatprep.subr.bf16.mxu0 0
    %2528 = vmatpush1.bf16.msra.mxu0 0
    %2529 = vmatprep.subr.bf16.mxu0 0
    %2530 = vmatpush1.bf16.msra.mxu0 0
    %2531 = vmatprep.subr.bf16.mxu0 0
    %2532 = vmatpush1.bf16.msra.mxu0 0
    %2533 = vmatprep.subr.bf16.mxu0 0
    %2534 = vmatpush1.bf16.msra.mxu0 0
    %2535 = vmatprep.mubr.bf16.mxu0 0
    %2536 = vmatmul.mubr.bf16.gmra.mrb[0].mxu0 %v2358
    %v2537 = vpop.f32.mrb[0].mxu0
    %v2538 = vadd.f32 %v2363, %v2537
    %v2539 = vpop.f32.mrb[0].mxu0
    %v2540 = vadd.f32 %v2367, %v2539
    %v2541 = vpop.f32.mrb[0].mxu0
    %v2542 = vadd.f32 %v2363, %v2541
    %v2543 = vpop.f32.mrb[0].mxu0
    %v2544 = vadd.f32 %v2367, %v2543
    %2545 = vdwg.mxu0
    %2546 = vmatprep.subr.bf16.mxu0 0
    %2547 = vmatpush1.bf16.msra.mxu0 %v2457
    %2548 = vmatprep.subr.bf16.mxu0 0
    %2549 = vmatpush1.bf16.msra.mxu0 %v2460
    %2550 = vmatprep.subr.bf16.mxu0 0
    %2551 = vmatpush1.bf16.msra.mxu0 %v2463
    %2552 = vmatprep.subr.bf16.mxu0 0
    %2553 = vmatpush1.bf16.msra.mxu0 %v2466
    %2554 = vmatprep.subr.bf16.mxu0 0
    %2555 = vmatpush1.bf16.msra.mxu0 %v2469
    %2556 = vmatprep.subr.bf16.mxu0 0
    %2557 = vmatpush1.bf16.msra.mxu0 %v2472
    %2558 = vmatprep.subr.bf16.mxu0 0
    %2559 = vmatpush1.bf16.msra.mxu0 %v2475
    %2560 = vmatprep.subr.bf16.mxu0 0
    %2561 = vmatpush1.bf16.msra.mxu0 %v2478
    %2562 = vmatprep.subr.bf16.mxu0 0
    %2563 = vmatpush1.bf16.msra.mxu0 0
    %2564 = vmatprep.subr.bf16.mxu0 0
    %2565 = vmatpush1.bf16.msra.mxu0 0
    %2566 = vmatprep.subr.bf16.mxu0 0
    %2567 = vmatpush1.bf16.msra.mxu0 0
    %2568 = vmatprep.subr.bf16.mxu0 0
    %2569 = vmatpush1.bf16.msra.mxu0 0
    %2570 = vmatprep.subr.bf16.mxu0 0
    %2571 = vmatpush1.bf16.msra.mxu0 0
    %2572 = vmatprep.subr.bf16.mxu0 0
    %2573 = vmatpush1.bf16.msra.mxu0 0
    %2574 = vmatprep.subr.bf16.mxu0 0
    %2575 = vmatpush1.bf16.msra.mxu0 0
    %2576 = vmatprep.subr.bf16.mxu0 0
    %2577 = vmatpush1.bf16.msra.mxu0 0
    %2578 = vmatprep.mubr.bf16.mxu0 0
    %2579 = vmatmul.mubr.bf16.gmra.mrb[0].mxu0 %v2358
    %v2580 = vpop.f32.mrb[0].mxu0
    %v2581 = vadd.f32 %v2371, %v2580
    %v2582 = vpop.f32.mrb[0].mxu0
    %v2583 = vpop.f32.mrb[0].mxu0
    %v2584 = vadd.f32 %v2371, %v2583
    %v2585 = vpop.f32.mrb[0].mxu0
    %2586 = vdwg.mxu0
    %v2587 = vpack.c.bf16 %v2538, %v2538
    %v2588 = vpack.c.bf16 %v2542, %v2542
    %v2589 = vpack.c.bf16 %v2540, %v2540
    %v2590 = vpack.c.bf16 %v2544, %v2544
    %v2591 = vpack.c.bf16 %v2581, %v2581
    %v2592 = vpack.c.bf16 %v2584, %v2584
    %v2594 = vsel %vm738, %v2587, 0
    %v2597 = vsel %vm738, %v2589, 0
    %2599 = vmatprep.subr.bf16.mxu0 0
    %2600 = vmatpush1.bf16.xpose.msra.mxu0 %v2597
    %2601 = vmatprep.subr.bf16.mxu0 0
    %2602 = vmatpush1.bf16.xpose.msra.mxu0 0
    %2603 = vmatprep.subr.bf16.mxu0 0
    %2604 = vmatpush1.bf16.xpose.msra.mxu0 0
    %2605 = vmatprep.subr.bf16.mxu0 0
    %2606 = vmatpush1.bf16.xpose.msra.mxu0 0
    %2607 = vmatprep.subr.bf16.mxu0 0
    %2608 = vmatpush1.bf16.xpose.msra.mxu0 0
    %2609 = vmatprep.subr.bf16.mxu0 0
    %2610 = vmatpush1.bf16.xpose.msra.mxu0 0
    %2611 = vmatprep.subr.bf16.mxu0 0
    %2612 = vmatpush1.bf16.xpose.msra.mxu0 0
    %2613 = vmatprep.subr.bf16.mxu0 0
    %2614 = vmatpush1.bf16.xpose.msra.mxu0 0
    %2615 = vmatprep.subr.bf16.mxu0 0
    %2616 = vmatpush1.bf16.xpose.msra.mxu0 0
    %2617 = vmatprep.subr.bf16.mxu0 0
    %2618 = vmatpush1.bf16.xpose.msra.mxu0 0
    %2619 = vmatprep.subr.bf16.mxu0 0
    %2620 = vmatpush1.bf16.xpose.msra.mxu0 0
    %2621 = vmatprep.subr.bf16.mxu0 0
    %2622 = vmatpush1.bf16.xpose.msra.mxu0 0
    %2623 = vmatprep.subr.bf16.mxu0 0
    %2624 = vmatpush1.bf16.xpose.msra.mxu0 0
    %2625 = vmatprep.subr.bf16.mxu0 0
    %2626 = vmatpush1.bf16.xpose.msra.mxu0 0
    %2627 = vmatprep.subr.bf16.mxu0 0
    %2628 = vmatpush1.bf16.xpose.msra.mxu0 0
    %2629 = vmatprep.subr.bf16.mxu0 0
    %2630 = vmatpush1.bf16.xpose.msra.mxu0 0
    %2631 = vmatprep.mubr.bf16.mxu0 0
    %2632 = vmatmul.mubr.bf16.gmra.mrb[0].mxu0 %v2594
    %v2633 = vpop.f32.mrb[0].mxu0
    %v2634 = vadd.f32 %v447, %v2633
    %v2635 = vpop.f32.mrb[0].mxu0
    %v2636 = vpop.f32.mrb[0].mxu0
    %v2637 = vpop.f32.mrb[0].mxu0
    %2638 = vdwg.mxu0
    %v2640 = vsel %vm738, %v2588, 0
    %v2643 = vsel %vm738, %v2590, 0
    %2645 = vmatprep.subr.bf16.mxu0 0
    %2646 = vmatpush1.bf16.xpose.msra.mxu0 %v2643
    %2647 = vmatprep.subr.bf16.mxu0 0
    %2648 = vmatpush1.bf16.xpose.msra.mxu0 0
    %2649 = vmatprep.subr.bf16.mxu0 0
    %2650 = vmatpush1.bf16.xpose.msra.mxu0 0
    %2651 = vmatprep.subr.bf16.mxu0 0
    %2652 = vmatpush1.bf16.xpose.msra.mxu0 0
    %2653 = vmatprep.subr.bf16.mxu0 0
    %2654 = vmatpush1.bf16.xpose.msra.mxu0 0
    %2655 = vmatprep.subr.bf16.mxu0 0
    %2656 = vmatpush1.bf16.xpose.msra.mxu0 0
    %2657 = vmatprep.subr.bf16.mxu0 0
    %2658 = vmatpush1.bf16.xpose.msra.mxu0 0
    %2659 = vmatprep.subr.bf16.mxu0 0
    %2660 = vmatpush1.bf16.xpose.msra.mxu0 0
    %2661 = vmatprep.subr.bf16.mxu0 0
    %2662 = vmatpush1.bf16.xpose.msra.mxu0 0
    %2663 = vmatprep.subr.bf16.mxu0 0
    %2664 = vmatpush1.bf16.xpose.msra.mxu0 0
    %2665 = vmatprep.subr.bf16.mxu0 0
    %2666 = vmatpush1.bf16.xpose.msra.mxu0 0
    %2667 = vmatprep.subr.bf16.mxu0 0
    %2668 = vmatpush1.bf16.xpose.msra.mxu0 0
    %2669 = vmatprep.subr.bf16.mxu0 0
    %2670 = vmatpush1.bf16.xpose.msra.mxu0 0
    %2671 = vmatprep.subr.bf16.mxu0 0
    %2672 = vmatpush1.bf16.xpose.msra.mxu0 0
    %2673 = vmatprep.subr.bf16.mxu0 0
    %2674 = vmatpush1.bf16.xpose.msra.mxu0 0
    %2675 = vmatprep.subr.bf16.mxu0 0
    %2676 = vmatpush1.bf16.xpose.msra.mxu0 0
    %2677 = vmatprep.mubr.bf16.mxu0 0
    %2678 = vmatmul.mubr.bf16.gmra.mrb[0].mxu0 %v2640
    %v2679 = vpop.f32.mrb[0].mxu0
    %v2680 = vadd.f32 %v451, %v2679
    %v2681 = vpop.f32.mrb[0].mxu0
    %v2682 = vpop.f32.mrb[0].mxu0
    %v2683 = vpop.f32.mrb[0].mxu0
    %2684 = vdwg.mxu0
    %v2685 = vsel %vm831, %v2634, -inf
    %2686 = vmax.xlane.f32.xlu0 %v2685
    %v2687 = vpop.xlane.xlu0 %2686
    %v2688 = vsel %vm831, %v2680, -inf
    %2689 = vmax.xlane.f32.xlu0 %v2688
    %v2690 = vpop.xlane.xlu0 %2689
    %v2691 = vsub.f32 %v2634, %v2687
    %v2692 = vsub.f32 %v2680, %v2690
    %v2693 = vmul.f32 %v2691, 1.442695
    %v2694 = vpow.pop %v2693
    %v2695 = vmul.f32 %v2692, 1.442695
    %v2696 = vpow.pop %v2695
    %v2697 = vsel %vm831, %v2694, 0.0
    %2698 = vadd.xlane.f32.xlu0 %v2697
    %v2699 = vpop.xlane.xlu0 %2698
    %v2700 = vsel %vm831, %v2696, 0.0
    %2701 = vadd.xlane.f32.xlu0 %v2700
    %v2702 = vpop.xlane.xlu0 %2701
    %v2703 = vrcp.pop %v2699
    %v2704 = vrcp.pop %v2702
    %v2705 = vmul.f32 %v2694, %v2703
    %v2706 = vmul.f32 %v2696, %v2704
    %v2707 = vpack.c.bf16 %v2705, %v2705
    %v2708 = vpack.c.bf16 %v2706, %v2706
    %v2710 = vsel %vm831, %v2707, 0
    %v2713 = vsel %vm859, %v2591, 0
    %2715 = vmatprep.subr.bf16.mxu0 0
    %2716 = vmatpush1.bf16.msra.mxu0 %v2713
    %2717 = vmatprep.subr.bf16.mxu0 0
    %2718 = vmatpush1.bf16.msra.mxu0 0
    %2719 = vmatprep.subr.bf16.mxu0 0
    %2720 = vmatpush1.bf16.msra.mxu0 0
    %2721 = vmatprep.subr.bf16.mxu0 0
    %2722 = vmatpush1.bf16.msra.mxu0 0
    %2723 = vmatprep.subr.bf16.mxu0 0
    %2724 = vmatpush1.bf16.msra.mxu0 0
    %2725 = vmatprep.subr.bf16.mxu0 0
    %2726 = vmatpush1.bf16.msra.mxu0 0
    %2727 = vmatprep.subr.bf16.mxu0 0
    %2728 = vmatpush1.bf16.msra.mxu0 0
    %2729 = vmatprep.subr.bf16.mxu0 0
    %2730 = vmatpush1.bf16.msra.mxu0 0
    %2731 = vmatprep.subr.bf16.mxu0 0
    %2732 = vmatpush1.bf16.msra.mxu0 0
    %2733 = vmatprep.subr.bf16.mxu0 0
    %2734 = vmatpush1.bf16.msra.mxu0 0
    %2735 = vmatprep.subr.bf16.mxu0 0
    %2736 = vmatpush1.bf16.msra.mxu0 0
    %2737 = vmatprep.subr.bf16.mxu0 0
    %2738 = vmatpush1.bf16.msra.mxu0 0
    %2739 = vmatprep.subr.bf16.mxu0 0
    %2740 = vmatpush1.bf16.msra.mxu0 0
    %2741 = vmatprep.subr.bf16.mxu0 0
    %2742 = vmatpush1.bf16.msra.mxu0 0
    %2743 = vmatprep.subr.bf16.mxu0 0
    %2744 = vmatpush1.bf16.msra.mxu0 0
    %2745 = vmatprep.subr.bf16.mxu0 0
    %2746 = vmatpush1.bf16.msra.mxu0 0
    %2747 = vmatprep.mubr.bf16.mxu0 0
    %2748 = vmatmul.mubr.bf16.gmra.mrb[0].mxu0 %v2710
    %v2749 = vpop.f32.mrb[0].mxu0
    %v2750 = vadd.f32 0.0, %v2749
    %v2751 = vpop.f32.mrb[0].mxu0
    %v2752 = vpop.f32.mrb[0].mxu0
    %v2753 = vpop.f32.mrb[0].mxu0
    %2754 = vdwg.mxu0
    %v2756 = vsel %vm831, %v2708, 0
    %v2759 = vsel %vm859, %v2592, 0
    %2761 = vmatprep.subr.bf16.mxu0 0
    %2762 = vmatpush1.bf16.msra.mxu0 %v2759
    %2763 = vmatprep.subr.bf16.mxu0 0
    %2764 = vmatpush1.bf16.msra.mxu0 0
    %2765 = vmatprep.subr.bf16.mxu0 0
    %2766 = vmatpush1.bf16.msra.mxu0 0
    %2767 = vmatprep.subr.bf16.mxu0 0
    %2768 = vmatpush1.bf16.msra.mxu0 0
    %2769 = vmatprep.subr.bf16.mxu0 0
    %2770 = vmatpush1.bf16.msra.mxu0 0
    %2771 = vmatprep.subr.bf16.mxu0 0
    %2772 = vmatpush1.bf16.msra.mxu0 0
    %2773 = vmatprep.subr.bf16.mxu0 0
    %2774 = vmatpush1.bf16.msra.mxu0 0
    %2775 = vmatprep.subr.bf16.mxu0 0
    %2776 = vmatpush1.bf16.msra.mxu0 0
    %2777 = vmatprep.subr.bf16.mxu0 0
    %2778 = vmatpush1.bf16.msra.mxu0 0
    %2779 = vmatprep.subr.bf16.mxu0 0
    %2780 = vmatpush1.bf16.msra.mxu0 0
    %2781 = vmatprep.subr.bf16.mxu0 0
    %2782 = vmatpush1.bf16.msra.mxu0 0
    %2783 = vmatprep.subr.bf16.mxu0 0
    %2784 = vmatpush1.bf16.msra.mxu0 0
    %2785 = vmatprep.subr.bf16.mxu0 0
    %2786 = vmatpush1.bf16.msra.mxu0 0
    %2787 = vmatprep.subr.bf16.mxu0 0
    %2788 = vmatpush1.bf16.msra.mxu0 0
    %2789 = vmatprep.subr.bf16.mxu0 0
    %2790 = vmatpush1.bf16.msra.mxu0 0
    %2791 = vmatprep.subr.bf16.mxu0 0
    %2792 = vmatpush1.bf16.msra.mxu0 0
    %2793 = vmatprep.mubr.bf16.mxu0 0
    %2794 = vmatmul.mubr.bf16.gmra.mrb[0].mxu0 %v2756
    %v2795 = vpop.f32.mrb[0].mxu0
    %v2796 = vadd.f32 0.0, %v2795
    %v2797 = vpop.f32.mrb[0].mxu0
    %v2798 = vpop.f32.mrb[0].mxu0
    %v2799 = vpop.f32.mrb[0].mxu0
    %2800 = vdwg.mxu0
    %v2801 = vpack.c.bf16 %v2796, %v2750
    %2803 = vrot.lane.b32.xlu0 %v2587, 96
    %v2804 = vpop.permute.xlu0 %2803
    %2806 = vrot.lane.b32.xlu0 %v2589, 96
    %v2807 = vpop.permute.xlu0 %2806
    %v2809 = vsel %vm738, %v2804, 0
    %v2812 = vsel %vm738, %v2807, 0
    %2814 = vmatprep.subr.bf16.mxu0 0
    %2815 = vmatpush1.bf16.xpose.msra.mxu0 %v2812
    %2816 = vmatprep.subr.bf16.mxu0 0
    %2817 = vmatpush1.bf16.xpose.msra.mxu0 0
    %2818 = vmatprep.subr.bf16.mxu0 0
    %2819 = vmatpush1.bf16.xpose.msra.mxu0 0
    %2820 = vmatprep.subr.bf16.mxu0 0
    %2821 = vmatpush1.bf16.xpose.msra.mxu0 0
    %2822 = vmatprep.subr.bf16.mxu0 0
    %2823 = vmatpush1.bf16.xpose.msra.mxu0 0
    %2824 = vmatprep.subr.bf16.mxu0 0
    %2825 = vmatpush1.bf16.xpose.msra.mxu0 0
    %2826 = vmatprep.subr.bf16.mxu0 0
    %2827 = vmatpush1.bf16.xpose.msra.mxu0 0
    %2828 = vmatprep.subr.bf16.mxu0 0
    %2829 = vmatpush1.bf16.xpose.msra.mxu0 0
    %2830 = vmatprep.subr.bf16.mxu0 0
    %2831 = vmatpush1.bf16.xpose.msra.mxu0 0
    %2832 = vmatprep.subr.bf16.mxu0 0
    %2833 = vmatpush1.bf16.xpose.msra.mxu0 0
    %2834 = vmatprep.subr.bf16.mxu0 0
    %2835 = vmatpush1.bf16.xpose.msra.mxu0 0
    %2836 = vmatprep.subr.bf16.mxu0 0
    %2837 = vmatpush1.bf16.xpose.msra.mxu0 0
    %2838 = vmatprep.subr.bf16.mxu0 0
    %2839 = vmatpush1.bf16.xpose.msra.mxu0 0
    %2840 = vmatprep.subr.bf16.mxu0 0
    %2841 = vmatpush1.bf16.xpose.msra.mxu0 0
    %2842 = vmatprep.subr.bf16.mxu0 0
    %2843 = vmatpush1.bf16.xpose.msra.mxu0 0
    %2844 = vmatprep.subr.bf16.mxu0 0
    %2845 = vmatpush1.bf16.xpose.msra.mxu0 0
    %2846 = vmatprep.mubr.bf16.mxu0 0
    %2847 = vmatmul.mubr.bf16.gmra.mrb[0].mxu0 %v2809
    %v2848 = vpop.f32.mrb[0].mxu0
    %v2849 = vadd.f32 %v447, %v2848
    %v2850 = vpop.f32.mrb[0].mxu0
    %v2851 = vpop.f32.mrb[0].mxu0
    %v2852 = vpop.f32.mrb[0].mxu0
    %2853 = vdwg.mxu0
    %2855 = vrot.lane.b32.xlu0 %v2588, 96
    %v2856 = vpop.permute.xlu0 %2855
    %2858 = vrot.lane.b32.xlu0 %v2590, 96
    %v2859 = vpop.permute.xlu0 %2858
    %v2861 = vsel %vm738, %v2856, 0
    %v2864 = vsel %vm738, %v2859, 0
    %2866 = vmatprep.subr.bf16.mxu0 0
    %2867 = vmatpush1.bf16.xpose.msra.mxu0 %v2864
    %2868 = vmatprep.subr.bf16.mxu0 0
    %2869 = vmatpush1.bf16.xpose.msra.mxu0 0
    %2870 = vmatprep.subr.bf16.mxu0 0
    %2871 = vmatpush1.bf16.xpose.msra.mxu0 0
    %2872 = vmatprep.subr.bf16.mxu0 0
    %2873 = vmatpush1.bf16.xpose.msra.mxu0 0
    %2874 = vmatprep.subr.bf16.mxu0 0
    %2875 = vmatpush1.bf16.xpose.msra.mxu0 0
    %2876 = vmatprep.subr.bf16.mxu0 0
    %2877 = vmatpush1.bf16.xpose.msra.mxu0 0
    %2878 = vmatprep.subr.bf16.mxu0 0
    %2879 = vmatpush1.bf16.xpose.msra.mxu0 0
    %2880 = vmatprep.subr.bf16.mxu0 0
    %2881 = vmatpush1.bf16.xpose.msra.mxu0 0
    %2882 = vmatprep.subr.bf16.mxu0 0
    %2883 = vmatpush1.bf16.xpose.msra.mxu0 0
    %2884 = vmatprep.subr.bf16.mxu0 0
    %2885 = vmatpush1.bf16.xpose.msra.mxu0 0
    %2886 = vmatprep.subr.bf16.mxu0 0
    %2887 = vmatpush1.bf16.xpose.msra.mxu0 0
    %2888 = vmatprep.subr.bf16.mxu0 0
    %2889 = vmatpush1.bf16.xpose.msra.mxu0 0
    %2890 = vmatprep.subr.bf16.mxu0 0
    %2891 = vmatpush1.bf16.xpose.msra.mxu0 0
    %2892 = vmatprep.subr.bf16.mxu0 0
    %2893 = vmatpush1.bf16.xpose.msra.mxu0 0
    %2894 = vmatprep.subr.bf16.mxu0 0
    %2895 = vmatpush1.bf16.xpose.msra.mxu0 0
    %2896 = vmatprep.subr.bf16.mxu0 0
    %2897 = vmatpush1.bf16.xpose.msra.mxu0 0
    %2898 = vmatprep.mubr.bf16.mxu0 0
    %2899 = vmatmul.mubr.bf16.gmra.mrb[0].mxu0 %v2861
    %v2900 = vpop.f32.mrb[0].mxu0
    %v2901 = vadd.f32 %v451, %v2900
    %v2902 = vpop.f32.mrb[0].mxu0
    %v2903 = vpop.f32.mrb[0].mxu0
    %v2904 = vpop.f32.mrb[0].mxu0
    %2905 = vdwg.mxu0
    %v2906 = vsel %vm831, %v2849, -inf
    %2907 = vmax.xlane.f32.xlu0 %v2906
    %v2908 = vpop.xlane.xlu0 %2907
    %v2909 = vsel %vm831, %v2901, -inf
    %2910 = vmax.xlane.f32.xlu0 %v2909
    %v2911 = vpop.xlane.xlu0 %2910
    %v2912 = vsub.f32 %v2849, %v2908
    %v2913 = vsub.f32 %v2901, %v2911
    %v2914 = vmul.f32 %v2912, 1.442695
    %v2915 = vpow.pop %v2914
    %v2916 = vmul.f32 %v2913, 1.442695
    %v2917 = vpow.pop %v2916
    %v2918 = vsel %vm831, %v2915, 0.0
    %2919 = vadd.xlane.f32.xlu0 %v2918
    %v2920 = vpop.xlane.xlu0 %2919
    %v2921 = vsel %vm831, %v2917, 0.0
    %2922 = vadd.xlane.f32.xlu0 %v2921
    %v2923 = vpop.xlane.xlu0 %2922
    %v2924 = vrcp.pop %v2920
    %v2925 = vrcp.pop %v2923
    %v2926 = vmul.f32 %v2915, %v2924
    %v2927 = vmul.f32 %v2917, %v2925
    %v2928 = vpack.c.bf16 %v2926, %v2926
    %v2929 = vpack.c.bf16 %v2927, %v2927
    %2931 = vrot.lane.b32.xlu0 %v2591, 96
    %v2932 = vpop.permute.xlu0 %2931
    %v2934 = vsel %vm831, %v2928, 0
    %v2937 = vsel %vm859, %v2932, 0
    %2939 = vmatprep.subr.bf16.mxu0 0
    %2940 = vmatpush1.bf16.msra.mxu0 %v2937
    %2941 = vmatprep.subr.bf16.mxu0 0
    %2942 = vmatpush1.bf16.msra.mxu0 0
    %2943 = vmatprep.subr.bf16.mxu0 0
    %2944 = vmatpush1.bf16.msra.mxu0 0
    %2945 = vmatprep.subr.bf16.mxu0 0
    %2946 = vmatpush1.bf16.msra.mxu0 0
    %2947 = vmatprep.subr.bf16.mxu0 0
    %2948 = vmatpush1.bf16.msra.mxu0 0
    %2949 = vmatprep.subr.bf16.mxu0 0
    %2950 = vmatpush1.bf16.msra.mxu0 0
    %2951 = vmatprep.subr.bf16.mxu0 0
    %2952 = vmatpush1.bf16.msra.mxu0 0
    %2953 = vmatprep.subr.bf16.mxu0 0
    %2954 = vmatpush1.bf16.msra.mxu0 0
    %2955 = vmatprep.subr.bf16.mxu0 0
    %2956 = vmatpush1.bf16.msra.mxu0 0
    %2957 = vmatprep.subr.bf16.mxu0 0
    %2958 = vmatpush1.bf16.msra.mxu0 0
    %2959 = vmatprep.subr.bf16.mxu0 0
    %2960 = vmatpush1.bf16.msra.mxu0 0
    %2961 = vmatprep.subr.bf16.mxu0 0
    %2962 = vmatpush1.bf16.msra.mxu0 0
    %2963 = vmatprep.subr.bf16.mxu0 0
    %2964 = vmatpush1.bf16.msra.mxu0 0
    %2965 = vmatprep.subr.bf16.mxu0 0
    %2966 = vmatpush1.bf16.msra.mxu0 0
    %2967 = vmatprep.subr.bf16.mxu0 0
    %2968 = vmatpush1.bf16.msra.mxu0 0
    %2969 = vmatprep.subr.bf16.mxu0 0
    %2970 = vmatpush1.bf16.msra.mxu0 0
    %2971 = vmatprep.mubr.bf16.mxu0 0
    %2972 = vmatmul.mubr.bf16.gmra.mrb[0].mxu0 %v2934
    %v2973 = vpop.f32.mrb[0].mxu0
    %v2974 = vadd.f32 0.0, %v2973
    %v2975 = vpop.f32.mrb[0].mxu0
    %v2976 = vpop.f32.mrb[0].mxu0
    %v2977 = vpop.f32.mrb[0].mxu0
    %2978 = vdwg.mxu0
    %2980 = vrot.lane.b32.xlu0 %v2592, 96
    %v2981 = vpop.permute.xlu0 %2980
    %v2983 = vsel %vm831, %v2929, 0
    %v2986 = vsel %vm859, %v2981, 0
    %2988 = vmatprep.subr.bf16.mxu0 0
    %2989 = vmatpush1.bf16.msra.mxu0 %v2986
    %2990 = vmatprep.subr.bf16.mxu0 0
    %2991 = vmatpush1.bf16.msra.mxu0 0
    %2992 = vmatprep.subr.bf16.mxu0 0
    %2993 = vmatpush1.bf16.msra.mxu0 0
    %2994 = vmatprep.subr.bf16.mxu0 0
    %2995 = vmatpush1.bf16.msra.mxu0 0
    %2996 = vmatprep.subr.bf16.mxu0 0
    %2997 = vmatpush1.bf16.msra.mxu0 0
    %2998 = vmatprep.subr.bf16.mxu0 0
    %2999 = vmatpush1.bf16.msra.mxu0 0
    %3000 = vmatprep.subr.bf16.mxu0 0
    %3001 = vmatpush1.bf16.msra.mxu0 0
    %3002 = vmatprep.subr.bf16.mxu0 0
    %3003 = vmatpush1.bf16.msra.mxu0 0
    %3004 = vmatprep.subr.bf16.mxu0 0
    %3005 = vmatpush1.bf16.msra.mxu0 0
    %3006 = vmatprep.subr.bf16.mxu0 0
    %3007 = vmatpush1.bf16.msra.mxu0 0
    %3008 = vmatprep.subr.bf16.mxu0 0
    %3009 = vmatpush1.bf16.msra.mxu0 0
    %3010 = vmatprep.subr.bf16.mxu0 0
    %3011 = vmatpush1.bf16.msra.mxu0 0
    %3012 = vmatprep.subr.bf16.mxu0 0
    %3013 = vmatpush1.bf16.msra.mxu0 0
    %3014 = vmatprep.subr.bf16.mxu0 0
    %3015 = vmatpush1.bf16.msra.mxu0 0
    %3016 = vmatprep.subr.bf16.mxu0 0
    %3017 = vmatpush1.bf16.msra.mxu0 0
    %3018 = vmatprep.subr.bf16.mxu0 0
    %3019 = vmatpush1.bf16.msra.mxu0 0
    %3020 = vmatprep.mubr.bf16.mxu0 0
    %3021 = vmatmul.mubr.bf16.gmra.mrb[0].mxu0 %v2983
    %v3022 = vpop.f32.mrb[0].mxu0
    %v3023 = vadd.f32 0.0, %v3022
    %v3024 = vpop.f32.mrb[0].mxu0
    %v3025 = vpop.f32.mrb[0].mxu0
    %v3026 = vpop.f32.mrb[0].mxu0
    %3027 = vdwg.mxu0
    %v3028 = vpack.c.bf16 %v3023, %v2974
    %v3033 = vunpack.c.l.b16 %v2344
    %v3034 = vunpack.c.l.b16 %v2345
    %v3035 = vunpack.c.l.b16 %v2346
    %v3036 = vunpack.c.l.b16 %v2347
    %v3037 = vpack.c.b16 %v3034, %v3033
    %v3038 = vpack.c.b16 %v3036, %v3035
    %v3042 = vsel %vm738, %v3028, 0
    %3044 = vmatprep.subr.bf16.mxu0 0
    %3045 = vmatpush1.bf16.msra.mxu0 %v3037
    %3046 = vmatprep.subr.bf16.mxu0 0
    %3047 = vmatpush1.bf16.msra.mxu0 %v3038
    %3048 = vmatprep.subr.bf16.mxu0 0
    %3049 = vmatpush1.bf16.msra.mxu0 0
    %3050 = vmatprep.subr.bf16.mxu0 0
    %3051 = vmatpush1.bf16.msra.mxu0 0
    %3052 = vmatprep.subr.bf16.mxu0 0
    %3053 = vmatpush1.bf16.msra.mxu0 0
    %3054 = vmatprep.subr.bf16.mxu0 0
    %3055 = vmatpush1.bf16.msra.mxu0 0
    %3056 = vmatprep.subr.bf16.mxu0 0
    %3057 = vmatpush1.bf16.msra.mxu0 0
    %3058 = vmatprep.subr.bf16.mxu0 0
    %3059 = vmatpush1.bf16.msra.mxu0 0
    %3060 = vmatprep.subr.bf16.mxu0 0
    %3061 = vmatpush1.bf16.msra.mxu0 0
    %3062 = vmatprep.subr.bf16.mxu0 0
    %3063 = vmatpush1.bf16.msra.mxu0 0
    %3064 = vmatprep.subr.bf16.mxu0 0
    %3065 = vmatpush1.bf16.msra.mxu0 0
    %3066 = vmatprep.subr.bf16.mxu0 0
    %3067 = vmatpush1.bf16.msra.mxu0 0
    %3068 = vmatprep.subr.bf16.mxu0 0
    %3069 = vmatpush1.bf16.msra.mxu0 0
    %3070 = vmatprep.subr.bf16.mxu0 0
    %3071 = vmatpush1.bf16.msra.mxu0 0
    %3072 = vmatprep.subr.bf16.mxu0 0
    %3073 = vmatpush1.bf16.msra.mxu0 0
    %3074 = vmatprep.subr.bf16.mxu0 0
    %3075 = vmatpush1.bf16.msra.mxu0 0
    %3076 = vmatprep.mubr.bf16.mxu0 0
    %3077 = vmatmul.mubr.bf16.gmra.mrb[0].mxu0 %v3042
    %v3078 = vpop.f32.mrb[0].mxu0
    %v3079 = vadd.f32 0.0, %v3078
    %v3080 = vpop.f32.mrb[0].mxu0
    %v3081 = vpop.f32.mrb[0].mxu0
    %v3082 = vadd.f32 0.0, %v3081
    %v3083 = vpop.f32.mrb[0].mxu0
    %3084 = vdwg.mxu0
    %v3089 = vunpack.c.l.b16 %v2340
    %v3090 = vunpack.c.l.b16 %v2341
    %v3091 = vunpack.c.l.b16 %v2342
    %v3092 = vunpack.c.l.b16 %v2343
    %v3093 = vpack.c.b16 %v3090, %v3089
    %v3094 = vpack.c.b16 %v3092, %v3091
    %v3098 = vsel %vm738, %v2801, 0
    %3100 = vmatprep.subr.bf16.mxu0 0
    %3101 = vmatpush1.bf16.msra.mxu0 %v3093
    %3102 = vmatprep.subr.bf16.mxu0 0
    %3103 = vmatpush1.bf16.msra.mxu0 %v3094
    %3104 = vmatprep.subr.bf16.mxu0 0
    %3105 = vmatpush1.bf16.msra.mxu0 0
    %3106 = vmatprep.subr.bf16.mxu0 0
    %3107 = vmatpush1.bf16.msra.mxu0 0
    %3108 = vmatprep.subr.bf16.mxu0 0
    %3109 = vmatpush1.bf16.msra.mxu0 0
    %3110 = vmatprep.subr.bf16.mxu0 0
    %3111 = vmatpush1.bf16.msra.mxu0 0
    %3112 = vmatprep.subr.bf16.mxu0 0
    %3113 = vmatpush1.bf16.msra.mxu0 0
    %3114 = vmatprep.subr.bf16.mxu0 0
    %3115 = vmatpush1.bf16.msra.mxu0 0
    %3116 = vmatprep.subr.bf16.mxu0 0
    %3117 = vmatpush1.bf16.msra.mxu0 0
    %3118 = vmatprep.subr.bf16.mxu0 0
    %3119 = vmatpush1.bf16.msra.mxu0 0
    %3120 = vmatprep.subr.bf16.mxu0 0
    %3121 = vmatpush1.bf16.msra.mxu0 0
    %3122 = vmatprep.subr.bf16.mxu0 0
    %3123 = vmatpush1.bf16.msra.mxu0 0
    %3124 = vmatprep.subr.bf16.mxu0 0
    %3125 = vmatpush1.bf16.msra.mxu0 0
    %3126 = vmatprep.subr.bf16.mxu0 0
    %3127 = vmatpush1.bf16.msra.mxu0 0
    %3128 = vmatprep.subr.bf16.mxu0 0
    %3129 = vmatpush1.bf16.msra.mxu0 0
    %3130 = vmatprep.subr.bf16.mxu0 0
    %3131 = vmatpush1.bf16.msra.mxu0 0
    %3132 = vmatprep.mubr.bf16.mxu0 0
    %3133 = vmatmul.mubr.bf16.gmra.mrb[0].mxu0 %v3098
    %v3134 = vpop.f32.mrb[0].mxu0
    %v3135 = vadd.f32 %v3079, %v3134
    %v3136 = vpop.f32.mrb[0].mxu0
    %v3137 = vpop.f32.mrb[0].mxu0
    %v3138 = vadd.f32 %v3082, %v3137
    %v3139 = vpop.f32.mrb[0].mxu0
    %3140 = vdwg.mxu0
    %3141 = vrot.lane.b32.xlu0 %v2587, 64
    %v3142 = vpop.permute.xlu0 %3141
    %3143 = vrot.lane.b32.xlu0 %v2589, 64
    %v3144 = vpop.permute.xlu0 %3143
    %v3146 = vsel %vm738, %v3142, 0
    %v3149 = vsel %vm738, %v3144, 0
    %3151 = vmatprep.subr.bf16.mxu0 0
    %3152 = vmatpush1.bf16.xpose.msra.mxu0 %v3149
    %3153 = vmatprep.subr.bf16.mxu0 0
    %3154 = vmatpush1.bf16.xpose.msra.mxu0 0
    %3155 = vmatprep.subr.bf16.mxu0 0
    %3156 = vmatpush1.bf16.xpose.msra.mxu0 0
    %3157 = vmatprep.subr.bf16.mxu0 0
    %3158 = vmatpush1.bf16.xpose.msra.mxu0 0
    %3159 = vmatprep.subr.bf16.mxu0 0
    %3160 = vmatpush1.bf16.xpose.msra.mxu0 0
    %3161 = vmatprep.subr.bf16.mxu0 0
    %3162 = vmatpush1.bf16.xpose.msra.mxu0 0
    %3163 = vmatprep.subr.bf16.mxu0 0
    %3164 = vmatpush1.bf16.xpose.msra.mxu0 0
    %3165 = vmatprep.subr.bf16.mxu0 0
    %3166 = vmatpush1.bf16.xpose.msra.mxu0 0
    %3167 = vmatprep.subr.bf16.mxu0 0
    %3168 = vmatpush1.bf16.xpose.msra.mxu0 0
    %3169 = vmatprep.subr.bf16.mxu0 0
    %3170 = vmatpush1.bf16.xpose.msra.mxu0 0
    %3171 = vmatprep.subr.bf16.mxu0 0
    %3172 = vmatpush1.bf16.xpose.msra.mxu0 0
    %3173 = vmatprep.subr.bf16.mxu0 0
    %3174 = vmatpush1.bf16.xpose.msra.mxu0 0
    %3175 = vmatprep.subr.bf16.mxu0 0
    %3176 = vmatpush1.bf16.xpose.msra.mxu0 0
    %3177 = vmatprep.subr.bf16.mxu0 0
    %3178 = vmatpush1.bf16.xpose.msra.mxu0 0
    %3179 = vmatprep.subr.bf16.mxu0 0
    %3180 = vmatpush1.bf16.xpose.msra.mxu0 0
    %3181 = vmatprep.subr.bf16.mxu0 0
    %3182 = vmatpush1.bf16.xpose.msra.mxu0 0
    %3183 = vmatprep.mubr.bf16.mxu0 0
    %3184 = vmatmul.mubr.bf16.gmra.mrb[0].mxu0 %v3146
    %v3185 = vpop.f32.mrb[0].mxu0
    %v3186 = vadd.f32 %v447, %v3185
    %v3187 = vpop.f32.mrb[0].mxu0
    %v3188 = vpop.f32.mrb[0].mxu0
    %v3189 = vpop.f32.mrb[0].mxu0
    %3190 = vdwg.mxu0
    %3191 = vrot.lane.b32.xlu0 %v2588, 64
    %v3192 = vpop.permute.xlu0 %3191
    %3193 = vrot.lane.b32.xlu0 %v2590, 64
    %v3194 = vpop.permute.xlu0 %3193
    %v3196 = vsel %vm738, %v3192, 0
    %v3199 = vsel %vm738, %v3194, 0
    %3201 = vmatprep.subr.bf16.mxu0 0
    %3202 = vmatpush1.bf16.xpose.msra.mxu0 %v3199
    %3203 = vmatprep.subr.bf16.mxu0 0
    %3204 = vmatpush1.bf16.xpose.msra.mxu0 0
    %3205 = vmatprep.subr.bf16.mxu0 0
    %3206 = vmatpush1.bf16.xpose.msra.mxu0 0
    %3207 = vmatprep.subr.bf16.mxu0 0
    %3208 = vmatpush1.bf16.xpose.msra.mxu0 0
    %3209 = vmatprep.subr.bf16.mxu0 0
    %3210 = vmatpush1.bf16.xpose.msra.mxu0 0
    %3211 = vmatprep.subr.bf16.mxu0 0
    %3212 = vmatpush1.bf16.xpose.msra.mxu0 0
    %3213 = vmatprep.subr.bf16.mxu0 0
    %3214 = vmatpush1.bf16.xpose.msra.mxu0 0
    %3215 = vmatprep.subr.bf16.mxu0 0
    %3216 = vmatpush1.bf16.xpose.msra.mxu0 0
    %3217 = vmatprep.subr.bf16.mxu0 0
    %3218 = vmatpush1.bf16.xpose.msra.mxu0 0
    %3219 = vmatprep.subr.bf16.mxu0 0
    %3220 = vmatpush1.bf16.xpose.msra.mxu0 0
    %3221 = vmatprep.subr.bf16.mxu0 0
    %3222 = vmatpush1.bf16.xpose.msra.mxu0 0
    %3223 = vmatprep.subr.bf16.mxu0 0
    %3224 = vmatpush1.bf16.xpose.msra.mxu0 0
    %3225 = vmatprep.subr.bf16.mxu0 0
    %3226 = vmatpush1.bf16.xpose.msra.mxu0 0
    %3227 = vmatprep.subr.bf16.mxu0 0
    %3228 = vmatpush1.bf16.xpose.msra.mxu0 0
    %3229 = vmatprep.subr.bf16.mxu0 0
    %3230 = vmatpush1.bf16.xpose.msra.mxu0 0
    %3231 = vmatprep.subr.bf16.mxu0 0
    %3232 = vmatpush1.bf16.xpose.msra.mxu0 0
    %3233 = vmatprep.mubr.bf16.mxu0 0
    %3234 = vmatmul.mubr.bf16.gmra.mrb[0].mxu0 %v3196
    %v3235 = vpop.f32.mrb[0].mxu0
    %v3236 = vadd.f32 %v451, %v3235
    %v3237 = vpop.f32.mrb[0].mxu0
    %v3238 = vpop.f32.mrb[0].mxu0
    %v3239 = vpop.f32.mrb[0].mxu0
    %3240 = vdwg.mxu0
    %v3241 = vsel %vm831, %v3186, -inf
    %3242 = vmax.xlane.f32.xlu0 %v3241
    %v3243 = vpop.xlane.xlu0 %3242
    %v3244 = vsel %vm831, %v3236, -inf
    %3245 = vmax.xlane.f32.xlu0 %v3244
    %v3246 = vpop.xlane.xlu0 %3245
    %v3247 = vsub.f32 %v3186, %v3243
    %v3248 = vsub.f32 %v3236, %v3246
    %v3249 = vmul.f32 %v3247, 1.442695
    %v3250 = vpow.pop %v3249
    %v3251 = vmul.f32 %v3248, 1.442695
    %v3252 = vpow.pop %v3251
    %v3253 = vsel %vm831, %v3250, 0.0
    %3254 = vadd.xlane.f32.xlu0 %v3253
    %v3255 = vpop.xlane.xlu0 %3254
    %v3256 = vsel %vm831, %v3252, 0.0
    %3257 = vadd.xlane.f32.xlu0 %v3256
    %v3258 = vpop.xlane.xlu0 %3257
    %v3259 = vrcp.pop %v3255
    %v3260 = vrcp.pop %v3258
    %v3261 = vmul.f32 %v3250, %v3259
    %v3262 = vmul.f32 %v3252, %v3260
    %v3263 = vpack.c.bf16 %v3261, %v3261
    %v3264 = vpack.c.bf16 %v3262, %v3262
    %3265 = vrot.lane.b32.xlu0 %v2591, 64
    %v3266 = vpop.permute.xlu0 %3265
    %v3268 = vsel %vm831, %v3263, 0
    %v3271 = vsel %vm859, %v3266, 0
    %3273 = vmatprep.subr.bf16.mxu0 0
    %3274 = vmatpush1.bf16.msra.mxu0 %v3271
    %3275 = vmatprep.subr.bf16.mxu0 0
    %3276 = vmatpush1.bf16.msra.mxu0 0
    %3277 = vmatprep.subr.bf16.mxu0 0
    %3278 = vmatpush1.bf16.msra.mxu0 0
    %3279 = vmatprep.subr.bf16.mxu0 0
    %3280 = vmatpush1.bf16.msra.mxu0 0
    %3281 = vmatprep.subr.bf16.mxu0 0
    %3282 = vmatpush1.bf16.msra.mxu0 0
    %3283 = vmatprep.subr.bf16.mxu0 0
    %3284 = vmatpush1.bf16.msra.mxu0 0
    %3285 = vmatprep.subr.bf16.mxu0 0
    %3286 = vmatpush1.bf16.msra.mxu0 0
    %3287 = vmatprep.subr.bf16.mxu0 0
    %3288 = vmatpush1.bf16.msra.mxu0 0
    %3289 = vmatprep.subr.bf16.mxu0 0
    %3290 = vmatpush1.bf16.msra.mxu0 0
    %3291 = vmatprep.subr.bf16.mxu0 0
    %3292 = vmatpush1.bf16.msra.mxu0 0
    %3293 = vmatprep.subr.bf16.mxu0 0
    %3294 = vmatpush1.bf16.msra.mxu0 0
    %3295 = vmatprep.subr.bf16.mxu0 0
    %3296 = vmatpush1.bf16.msra.mxu0 0
    %3297 = vmatprep.subr.bf16.mxu0 0
    %3298 = vmatpush1.bf16.msra.mxu0 0
    %3299 = vmatprep.subr.bf16.mxu0 0
    %3300 = vmatpush1.bf16.msra.mxu0 0
    %3301 = vmatprep.subr.bf16.mxu0 0
    %3302 = vmatpush1.bf16.msra.mxu0 0
    %3303 = vmatprep.subr.bf16.mxu0 0
    %3304 = vmatpush1.bf16.msra.mxu0 0
    %3305 = vmatprep.mubr.bf16.mxu0 0
    %3306 = vmatmul.mubr.bf16.gmra.mrb[0].mxu0 %v3268
    %v3307 = vpop.f32.mrb[0].mxu0
    %v3308 = vadd.f32 0.0, %v3307
    %v3309 = vpop.f32.mrb[0].mxu0
    %v3310 = vpop.f32.mrb[0].mxu0
    %v3311 = vpop.f32.mrb[0].mxu0
    %3312 = vdwg.mxu0
    %3313 = vrot.lane.b32.xlu0 %v2592, 64
    %v3314 = vpop.permute.xlu0 %3313
    %v3316 = vsel %vm831, %v3264, 0
    %v3319 = vsel %vm859, %v3314, 0
    %3321 = vmatprep.subr.bf16.mxu0 0
    %3322 = vmatpush1.bf16.msra.mxu0 %v3319
    %3323 = vmatprep.subr.bf16.mxu0 0
    %3324 = vmatpush1.bf16.msra.mxu0 0
    %3325 = vmatprep.subr.bf16.mxu0 0
    %3326 = vmatpush1.bf16.msra.mxu0 0
    %3327 = vmatprep.subr.bf16.mxu0 0
    %3328 = vmatpush1.bf16.msra.mxu0 0
    %3329 = vmatprep.subr.bf16.mxu0 0
    %3330 = vmatpush1.bf16.msra.mxu0 0
    %3331 = vmatprep.subr.bf16.mxu0 0
    %3332 = vmatpush1.bf16.msra.mxu0 0
    %3333 = vmatprep.subr.bf16.mxu0 0
    %3334 = vmatpush1.bf16.msra.mxu0 0
    %3335 = vmatprep.subr.bf16.mxu0 0
    %3336 = vmatpush1.bf16.msra.mxu0 0
    %3337 = vmatprep.subr.bf16.mxu0 0
    %3338 = vmatpush1.bf16.msra.mxu0 0
    %3339 = vmatprep.subr.bf16.mxu0 0
    %3340 = vmatpush1.bf16.msra.mxu0 0
    %3341 = vmatprep.subr.bf16.mxu0 0
    %3342 = vmatpush1.bf16.msra.mxu0 0
    %3343 = vmatprep.subr.bf16.mxu0 0
    %3344 = vmatpush1.bf16.msra.mxu0 0
    %3345 = vmatprep.subr.bf16.mxu0 0
    %3346 = vmatpush1.bf16.msra.mxu0 0
    %3347 = vmatprep.subr.bf16.mxu0 0
    %3348 = vmatpush1.bf16.msra.mxu0 0
    %3349 = vmatprep.subr.bf16.mxu0 0
    %3350 = vmatpush1.bf16.msra.mxu0 0
    %3351 = vmatprep.subr.bf16.mxu0 0
    %3352 = vmatpush1.bf16.msra.mxu0 0
    %3353 = vmatprep.mubr.bf16.mxu0 0
    %3354 = vmatmul.mubr.bf16.gmra.mrb[0].mxu0 %v3316
    %v3355 = vpop.f32.mrb[0].mxu0
    %v3356 = vadd.f32 0.0, %v3355
    %v3357 = vpop.f32.mrb[0].mxu0
    %v3358 = vpop.f32.mrb[0].mxu0
    %v3359 = vpop.f32.mrb[0].mxu0
    %3360 = vdwg.mxu0
    %v3361 = vpack.c.bf16 %v3356, %v3308
    %v3366 = vunpack.c.l.b16 %v2348
    %v3367 = vunpack.c.l.b16 %v2349
    %v3368 = vunpack.c.l.b16 %v2350
    %v3369 = vunpack.c.l.b16 %v2351
    %v3370 = vpack.c.b16 %v3367, %v3366
    %v3371 = vpack.c.b16 %v3369, %v3368
    %v3375 = vsel %vm738, %v3361, 0
    %3377 = vmatprep.subr.bf16.mxu0 0
    %3378 = vmatpush1.bf16.msra.mxu0 %v3370
    %3379 = vmatprep.subr.bf16.mxu0 0
    %3380 = vmatpush1.bf16.msra.mxu0 %v3371
    %3381 = vmatprep.subr.bf16.mxu0 0
    %3382 = vmatpush1.bf16.msra.mxu0 0
    %3383 = vmatprep.subr.bf16.mxu0 0
    %3384 = vmatpush1.bf16.msra.mxu0 0
    %3385 = vmatprep.subr.bf16.mxu0 0
    %3386 = vmatpush1.bf16.msra.mxu0 0
    %3387 = vmatprep.subr.bf16.mxu0 0
    %3388 = vmatpush1.bf16.msra.mxu0 0
    %3389 = vmatprep.subr.bf16.mxu0 0
    %3390 = vmatpush1.bf16.msra.mxu0 0
    %3391 = vmatprep.subr.bf16.mxu0 0
    %3392 = vmatpush1.bf16.msra.mxu0 0
    %3393 = vmatprep.subr.bf16.mxu0 0
    %3394 = vmatpush1.bf16.msra.mxu0 0
    %3395 = vmatprep.subr.bf16.mxu0 0
    %3396 = vmatpush1.bf16.msra.mxu0 0
    %3397 = vmatprep.subr.bf16.mxu0 0
    %3398 = vmatpush1.bf16.msra.mxu0 0
    %3399 = vmatprep.subr.bf16.mxu0 0
    %3400 = vmatpush1.bf16.msra.mxu0 0
    %3401 = vmatprep.subr.bf16.mxu0 0
    %3402 = vmatpush1.bf16.msra.mxu0 0
    %3403 = vmatprep.subr.bf16.mxu0 0
    %3404 = vmatpush1.bf16.msra.mxu0 0
    %3405 = vmatprep.subr.bf16.mxu0 0
    %3406 = vmatpush1.bf16.msra.mxu0 0
    %3407 = vmatprep.subr.bf16.mxu0 0
    %3408 = vmatpush1.bf16.msra.mxu0 0
    %3409 = vmatprep.mubr.bf16.mxu0 0
    %3410 = vmatmul.mubr.bf16.gmra.mrb[0].mxu0 %v3375
    %v3411 = vpop.f32.mrb[0].mxu0
    %v3412 = vadd.f32 0.0, %v3411
    %v3413 = vpop.f32.mrb[0].mxu0
    %v3414 = vpop.f32.mrb[0].mxu0
    %v3415 = vadd.f32 0.0, %v3414
    %v3416 = vpop.f32.mrb[0].mxu0
    %3417 = vdwg.mxu0
    %v3418 = vadd.f32 %v3135, %v3412
    %v3419 = vadd.f32 %v3138, %v3415
    %3420 = vrot.lane.b32.xlu0 %v2587, 32
    %v3421 = vpop.permute.xlu0 %3420
    %3422 = vrot.lane.b32.xlu0 %v2589, 32
    %v3423 = vpop.permute.xlu0 %3422
    %v3425 = vsel %vm738, %v3421, 0
    %v3428 = vsel %vm738, %v3423, 0
    %3430 = vmatprep.subr.bf16.mxu0 0
    %3431 = vmatpush1.bf16.xpose.msra.mxu0 %v3428
    %3432 = vmatprep.subr.bf16.mxu0 0
    %3433 = vmatpush1.bf16.xpose.msra.mxu0 0
    %3434 = vmatprep.subr.bf16.mxu0 0
    %3435 = vmatpush1.bf16.xpose.msra.mxu0 0
    %3436 = vmatprep.subr.bf16.mxu0 0
    %3437 = vmatpush1.bf16.xpose.msra.mxu0 0
    %3438 = vmatprep.subr.bf16.mxu0 0
    %3439 = vmatpush1.bf16.xpose.msra.mxu0 0
    %3440 = vmatprep.subr.bf16.mxu0 0
    %3441 = vmatpush1.bf16.xpose.msra.mxu0 0
    %3442 = vmatprep.subr.bf16.mxu0 0
    %3443 = vmatpush1.bf16.xpose.msra.mxu0 0
    %3444 = vmatprep.subr.bf16.mxu0 0
    %3445 = vmatpush1.bf16.xpose.msra.mxu0 0
    %3446 = vmatprep.subr.bf16.mxu0 0
    %3447 = vmatpush1.bf16.xpose.msra.mxu0 0
    %3448 = vmatprep.subr.bf16.mxu0 0
    %3449 = vmatpush1.bf16.xpose.msra.mxu0 0
    %3450 = vmatprep.subr.bf16.mxu0 0
    %3451 = vmatpush1.bf16.xpose.msra.mxu0 0
    %3452 = vmatprep.subr.bf16.mxu0 0
    %3453 = vmatpush1.bf16.xpose.msra.mxu0 0
    %3454 = vmatprep.subr.bf16.mxu0 0
    %3455 = vmatpush1.bf16.xpose.msra.mxu0 0
    %3456 = vmatprep.subr.bf16.mxu0 0
    %3457 = vmatpush1.bf16.xpose.msra.mxu0 0
    %3458 = vmatprep.subr.bf16.mxu0 0
    %3459 = vmatpush1.bf16.xpose.msra.mxu0 0
    %3460 = vmatprep.subr.bf16.mxu0 0
    %3461 = vmatpush1.bf16.xpose.msra.mxu0 0
    %3462 = vmatprep.mubr.bf16.mxu0 0
    %3463 = vmatmul.mubr.bf16.gmra.mrb[0].mxu0 %v3425
    %v3464 = vpop.f32.mrb[0].mxu0
    %v3465 = vadd.f32 %v447, %v3464
    %v3466 = vpop.f32.mrb[0].mxu0
    %v3467 = vpop.f32.mrb[0].mxu0
    %v3468 = vpop.f32.mrb[0].mxu0
    %3469 = vdwg.mxu0
    %3470 = vrot.lane.b32.xlu0 %v2588, 32
    %v3471 = vpop.permute.xlu0 %3470
    %3472 = vrot.lane.b32.xlu0 %v2590, 32
    %v3473 = vpop.permute.xlu0 %3472
    %v3475 = vsel %vm738, %v3471, 0
    %v3478 = vsel %vm738, %v3473, 0
    %3480 = vmatprep.subr.bf16.mxu0 0
    %3481 = vmatpush1.bf16.xpose.msra.mxu0 %v3478
    %3482 = vmatprep.subr.bf16.mxu0 0
    %3483 = vmatpush1.bf16.xpose.msra.mxu0 0
    %3484 = vmatprep.subr.bf16.mxu0 0
    %3485 = vmatpush1.bf16.xpose.msra.mxu0 0
    %3486 = vmatprep.subr.bf16.mxu0 0
    %3487 = vmatpush1.bf16.xpose.msra.mxu0 0
    %3488 = vmatprep.subr.bf16.mxu0 0
    %3489 = vmatpush1.bf16.xpose.msra.mxu0 0
    %3490 = vmatprep.subr.bf16.mxu0 0
    %3491 = vmatpush1.bf16.xpose.msra.mxu0 0
    %3492 = vmatprep.subr.bf16.mxu0 0
    %3493 = vmatpush1.bf16.xpose.msra.mxu0 0
    %3494 = vmatprep.subr.bf16.mxu0 0
    %3495 = vmatpush1.bf16.xpose.msra.mxu0 0
    %3496 = vmatprep.subr.bf16.mxu0 0
    %3497 = vmatpush1.bf16.xpose.msra.mxu0 0
    %3498 = vmatprep.subr.bf16.mxu0 0
    %3499 = vmatpush1.bf16.xpose.msra.mxu0 0
    %3500 = vmatprep.subr.bf16.mxu0 0
    %3501 = vmatpush1.bf16.xpose.msra.mxu0 0
    %3502 = vmatprep.subr.bf16.mxu0 0
    %3503 = vmatpush1.bf16.xpose.msra.mxu0 0
    %3504 = vmatprep.subr.bf16.mxu0 0
    %3505 = vmatpush1.bf16.xpose.msra.mxu0 0
    %3506 = vmatprep.subr.bf16.mxu0 0
    %3507 = vmatpush1.bf16.xpose.msra.mxu0 0
    %3508 = vmatprep.subr.bf16.mxu0 0
    %3509 = vmatpush1.bf16.xpose.msra.mxu0 0
    %3510 = vmatprep.subr.bf16.mxu0 0
    %3511 = vmatpush1.bf16.xpose.msra.mxu0 0
    %3512 = vmatprep.mubr.bf16.mxu0 0
    %3513 = vmatmul.mubr.bf16.gmra.mrb[0].mxu0 %v3475
    %v3514 = vpop.f32.mrb[0].mxu0
    %v3515 = vadd.f32 %v451, %v3514
    %v3516 = vpop.f32.mrb[0].mxu0
    %v3517 = vpop.f32.mrb[0].mxu0
    %v3518 = vpop.f32.mrb[0].mxu0
    %3519 = vdwg.mxu0
    %v3520 = vsel %vm831, %v3465, -inf
    %3521 = vmax.xlane.f32.xlu0 %v3520
    %v3522 = vpop.xlane.xlu0 %3521
    %v3523 = vsel %vm831, %v3515, -inf
    %3524 = vmax.xlane.f32.xlu0 %v3523
    %v3525 = vpop.xlane.xlu0 %3524
    %v3526 = vsub.f32 %v3465, %v3522
    %v3527 = vsub.f32 %v3515, %v3525
    %v3528 = vmul.f32 %v3526, 1.442695
    %v3529 = vpow.pop %v3528
    %v3530 = vmul.f32 %v3527, 1.442695
    %v3531 = vpow.pop %v3530
    %v3532 = vsel %vm831, %v3529, 0.0
    %3533 = vadd.xlane.f32.xlu0 %v3532
    %v3534 = vpop.xlane.xlu0 %3533
    %v3535 = vsel %vm831, %v3531, 0.0
    %3536 = vadd.xlane.f32.xlu0 %v3535
    %v3537 = vpop.xlane.xlu0 %3536
    %v3538 = vrcp.pop %v3534
    %v3539 = vrcp.pop %v3537
    %v3540 = vmul.f32 %v3529, %v3538
    %v3541 = vmul.f32 %v3531, %v3539
    %v3542 = vpack.c.bf16 %v3540, %v3540
    %v3543 = vpack.c.bf16 %v3541, %v3541
    %3544 = vrot.lane.b32.xlu0 %v2591, 32
    %v3545 = vpop.permute.xlu0 %3544
    %v3547 = vsel %vm831, %v3542, 0
    %v3550 = vsel %vm859, %v3545, 0
    %3552 = vmatprep.subr.bf16.mxu0 0
    %3553 = vmatpush1.bf16.msra.mxu0 %v3550
    %3554 = vmatprep.subr.bf16.mxu0 0
    %3555 = vmatpush1.bf16.msra.mxu0 0
    %3556 = vmatprep.subr.bf16.mxu0 0
    %3557 = vmatpush1.bf16.msra.mxu0 0
    %3558 = vmatprep.subr.bf16.mxu0 0
    %3559 = vmatpush1.bf16.msra.mxu0 0
    %3560 = vmatprep.subr.bf16.mxu0 0
    %3561 = vmatpush1.bf16.msra.mxu0 0
    %3562 = vmatprep.subr.bf16.mxu0 0
    %3563 = vmatpush1.bf16.msra.mxu0 0
    %3564 = vmatprep.subr.bf16.mxu0 0
    %3565 = vmatpush1.bf16.msra.mxu0 0
    %3566 = vmatprep.subr.bf16.mxu0 0
    %3567 = vmatpush1.bf16.msra.mxu0 0
    %3568 = vmatprep.subr.bf16.mxu0 0
    %3569 = vmatpush1.bf16.msra.mxu0 0
    %3570 = vmatprep.subr.bf16.mxu0 0
    %3571 = vmatpush1.bf16.msra.mxu0 0
    %3572 = vmatprep.subr.bf16.mxu0 0
    %3573 = vmatpush1.bf16.msra.mxu0 0
    %3574 = vmatprep.subr.bf16.mxu0 0
    %3575 = vmatpush1.bf16.msra.mxu0 0
    %3576 = vmatprep.subr.bf16.mxu0 0
    %3577 = vmatpush1.bf16.msra.mxu0 0
    %3578 = vmatprep.subr.bf16.mxu0 0
    %3579 = vmatpush1.bf16.msra.mxu0 0
    %3580 = vmatprep.subr.bf16.mxu0 0
    %3581 = vmatpush1.bf16.msra.mxu0 0
    %3582 = vmatprep.subr.bf16.mxu0 0
    %3583 = vmatpush1.bf16.msra.mxu0 0
    %3584 = vmatprep.mubr.bf16.mxu0 0
    %3585 = vmatmul.mubr.bf16.gmra.mrb[0].mxu0 %v3547
    %v3586 = vpop.f32.mrb[0].mxu0
    %v3587 = vadd.f32 0.0, %v3586
    %v3588 = vpop.f32.mrb[0].mxu0
    %v3589 = vpop.f32.mrb[0].mxu0
    %v3590 = vpop.f32.mrb[0].mxu0
    %3591 = vdwg.mxu0
    %3592 = vrot.lane.b32.xlu0 %v2592, 32
    %v3593 = vpop.permute.xlu0 %3592
    %v3595 = vsel %vm831, %v3543, 0
    %v3598 = vsel %vm859, %v3593, 0
    %3600 = vmatprep.subr.bf16.mxu0 0
    %3601 = vmatpush1.bf16.msra.mxu0 %v3598
    %3602 = vmatprep.subr.bf16.mxu0 0
    %3603 = vmatpush1.bf16.msra.mxu0 0
    %3604 = vmatprep.subr.bf16.mxu0 0
    %3605 = vmatpush1.bf16.msra.mxu0 0
    %3606 = vmatprep.subr.bf16.mxu0 0
    %3607 = vmatpush1.bf16.msra.mxu0 0
    %3608 = vmatprep.subr.bf16.mxu0 0
    %3609 = vmatpush1.bf16.msra.mxu0 0
    %3610 = vmatprep.subr.bf16.mxu0 0
    %3611 = vmatpush1.bf16.msra.mxu0 0
    %3612 = vmatprep.subr.bf16.mxu0 0
    %3613 = vmatpush1.bf16.msra.mxu0 0
    %3614 = vmatprep.subr.bf16.mxu0 0
    %3615 = vmatpush1.bf16.msra.mxu0 0
    %3616 = vmatprep.subr.bf16.mxu0 0
    %3617 = vmatpush1.bf16.msra.mxu0 0
    %3618 = vmatprep.subr.bf16.mxu0 0
    %3619 = vmatpush1.bf16.msra.mxu0 0
    %3620 = vmatprep.subr.bf16.mxu0 0
    %3621 = vmatpush1.bf16.msra.mxu0 0
    %3622 = vmatprep.subr.bf16.mxu0 0
    %3623 = vmatpush1.bf16.msra.mxu0 0
    %3624 = vmatprep.subr.bf16.mxu0 0
    %3625 = vmatpush1.bf16.msra.mxu0 0
    %3626 = vmatprep.subr.bf16.mxu0 0
    %3627 = vmatpush1.bf16.msra.mxu0 0
    %3628 = vmatprep.subr.bf16.mxu0 0
    %3629 = vmatpush1.bf16.msra.mxu0 0
    %3630 = vmatprep.subr.bf16.mxu0 0
    %3631 = vmatpush1.bf16.msra.mxu0 0
    %3632 = vmatprep.mubr.bf16.mxu0 0
    %3633 = vmatmul.mubr.bf16.gmra.mrb[0].mxu0 %v3595
    %v3634 = vpop.f32.mrb[0].mxu0
    %v3635 = vadd.f32 0.0, %v3634
    %v3636 = vpop.f32.mrb[0].mxu0
    %v3637 = vpop.f32.mrb[0].mxu0
    %v3638 = vpop.f32.mrb[0].mxu0
    %3639 = vdwg.mxu0
    %v3640 = vpack.c.bf16 %v3635, %v3587
    %v3645 = vunpack.c.l.b16 %v2352
    %v3646 = vunpack.c.l.b16 %v2353
    %v3647 = vunpack.c.l.b16 %v2354
    %v3648 = vunpack.c.l.b16 %v2355
    %v3649 = vpack.c.b16 %v3646, %v3645
    %v3650 = vpack.c.b16 %v3648, %v3647
    %v3654 = vsel %vm738, %v3640, 0
    %3656 = vmatprep.subr.bf16.mxu0 0
    %3657 = vmatpush1.bf16.msra.mxu0 %v3649
    %3658 = vmatprep.subr.bf16.mxu0 0
    %3659 = vmatpush1.bf16.msra.mxu0 %v3650
    %3660 = vmatprep.subr.bf16.mxu0 0
    %3661 = vmatpush1.bf16.msra.mxu0 0
    %3662 = vmatprep.subr.bf16.mxu0 0
    %3663 = vmatpush1.bf16.msra.mxu0 0
    %3664 = vmatprep.subr.bf16.mxu0 0
    %3665 = vmatpush1.bf16.msra.mxu0 0
    %3666 = vmatprep.subr.bf16.mxu0 0
    %3667 = vmatpush1.bf16.msra.mxu0 0
    %3668 = vmatprep.subr.bf16.mxu0 0
    %3669 = vmatpush1.bf16.msra.mxu0 0
    %3670 = vmatprep.subr.bf16.mxu0 0
    %3671 = vmatpush1.bf16.msra.mxu0 0
    %3672 = vmatprep.subr.bf16.mxu0 0
    %3673 = vmatpush1.bf16.msra.mxu0 0
    %3674 = vmatprep.subr.bf16.mxu0 0
    %3675 = vmatpush1.bf16.msra.mxu0 0
    %3676 = vmatprep.subr.bf16.mxu0 0
    %3677 = vmatpush1.bf16.msra.mxu0 0
    %3678 = vmatprep.subr.bf16.mxu0 0
    %3679 = vmatpush1.bf16.msra.mxu0 0
    %3680 = vmatprep.subr.bf16.mxu0 0
    %3681 = vmatpush1.bf16.msra.mxu0 0
    %3682 = vmatprep.subr.bf16.mxu0 0
    %3683 = vmatpush1.bf16.msra.mxu0 0
    %3684 = vmatprep.subr.bf16.mxu0 0
    %3685 = vmatpush1.bf16.msra.mxu0 0
    %3686 = vmatprep.subr.bf16.mxu0 0
    %3687 = vmatpush1.bf16.msra.mxu0 0
    %3688 = vmatprep.mubr.bf16.mxu0 0
    %3689 = vmatmul.mubr.bf16.gmra.mrb[0].mxu0 %v3654
    %v3690 = vpop.f32.mrb[0].mxu0
    %v3691 = vadd.f32 0.0, %v3690
    %v3692 = vpop.f32.mrb[0].mxu0
    %v3693 = vpop.f32.mrb[0].mxu0
    %v3694 = vadd.f32 0.0, %v3693
    %v3695 = vpop.f32.mrb[0].mxu0
    %3696 = vdwg.mxu0
    %v3697 = vadd.f32 %v3418, %v3691
    %v3698 = vadd.f32 %v3419, %v3694
    %s3699 = scalar_lea.vmem %s9, 1
    %v3700 = vld [vmem:[%s3699] sm:$0x1]
    %v3702 = vlaneseq
    %v3703 = vshrl.u32 %v3702, 7
    %v3704 = vsub.s32 0, %v3703
    %v3705 = vrot.slane %v3700, %v3704
    %v3707 = vadd.f32 %v3697, %v3705
    %v3708 = vadd.f32 %v3698, %v3705
    %v3709 = vadd.f32 %v3707, %v2304
    %v3710 = vadd.f32 %v3708, %v2305
    %s3711 = scalar_lea.vmem [#allocation11], 1
    %v3712 = vld [vmem:[%s3711] sm:$0x1]
    %s3713 = scalar_lea.vmem [#allocation13], 1
    %v3714 = vld [vmem:[%s3713] sm:$0x1]
    %3715 = vadd.xlane.f32.xlu0 %v3709
    %v3716 = vpop.xlane.xlu0 %3715
    %3717 = vadd.xlane.f32.xlu0 %v3710
    %v3718 = vpop.xlane.xlu0 %3717
    %v3719 = vmul.f32 %v3716, %v399
    %v3720 = vmul.f32 %v3718, %v399
    %v3721 = vsub.f32 %v3709, %v3719
    %v3722 = vsub.f32 %v3710, %v3720
    %v3723 = vmul.f32 %v3721, %v3721
    %v3724 = vmul.f32 %v3722, %v3722
    %3725 = vadd.xlane.f32.xlu0 %v3723
    %v3726 = vpop.xlane.xlu0 %3725
    %3727 = vadd.xlane.f32.xlu0 %v3724
    %v3728 = vpop.xlane.xlu0 %3727
    %v3729 = vmul.f32 %v3726, %v399
    %v3730 = vmul.f32 %v3728, %v399
    %v3731 = vadd.f32 %v3729, 1e-12
    %v3732 = vadd.f32 %v3730, 1e-12
    %v3733 = vrsqrt.pop %v3731
    %v3734 = vrsqrt.pop %v3732
    %v3735 = vmul.f32 %v3721, %v3733
    %v3736 = vmul.f32 %v3722, %v3734
    %v3738 = vlaneseq
    %v3739 = vshrl.u32 %v3738, 7
    %v3740 = vsub.s32 0, %v3739
    %v3741 = vrot.slane %v3712, %v3740
    %v3743 = vmul.f32 %v3735, %v3741
    %v3744 = vmul.f32 %v3736, %v3741
    %v3746 = vlaneseq
    %v3747 = vshrl.u32 %v3746, 7
    %v3748 = vsub.s32 0, %v3747
    %v3749 = vrot.slane %v3714, %v3748
    %v3751 = vadd.f32 %v3743, %v3749
    %v3752 = vadd.f32 %v3744, %v3749
    %s3753 = scalar_lea.vmem [#allocation14], 128
    %v3754 = vld [vmem:[%s3753] sm:$0xff]
    %v3755 = vld [vmem:[%s3753 + $0x8] sm:$0xff]
    %v3756 = vld [vmem:[%s3753 + $0x10] sm:$0xff]
    %v3757 = vld [vmem:[%s3753 + $0x18] sm:$0xff]
    %v3758 = vld [vmem:[%s3753 + $0x20] sm:$0xff]
    %v3759 = vld [vmem:[%s3753 + $0x28] sm:$0xff]
    %v3760 = vld [vmem:[%s3753 + $0x30] sm:$0xff]
    %v3761 = vld [vmem:[%s3753 + $0x38] sm:$0xff]
    %v3762 = vld [vmem:[%s3753 + $0x40] sm:$0xff]
    %v3763 = vld [vmem:[%s3753 + $0x48] sm:$0xff]
    %v3764 = vld [vmem:[%s3753 + $0x50] sm:$0xff]
    %v3765 = vld [vmem:[%s3753 + $0x58] sm:$0xff]
    %v3766 = vld [vmem:[%s3753 + $0x60] sm:$0xff]
    %v3767 = vld [vmem:[%s3753 + $0x68] sm:$0xff]
    %v3768 = vld [vmem:[%s3753 + $0x70] sm:$0xff]
    %v3769 = vld [vmem:[%s3753 + $0x78] sm:$0xff]
    %s3770 = scalar_lea.vmem %s13, 2
    %v3771 = vld [vmem:[%s3770] sm:$0x3]
    %v3772 = vpack.c.bf16 %v3752, %v3751
    %v3774 = vlaneseq
    %v3775 = vshrl.u32 %v3774, 7
    %v3776 = vsub.s32 0, %v3775
    %v3777 = vrot.slane %v3771, %v3776
    %v3778 = vlaneseq
    %v3779 = vshrl.u32 %v3778, 7
    %v3780 = vsub.s32 1, %v3779
    %v3781 = vrot.slane %v3771, %v3780
    %v3800 = vunpack.c.l.b16 %v3754
    %v3801 = vunpack.c.h.b16 %v3754
    %v3802 = vunpack.c.l.b16 %v3755
    %v3803 = vunpack.c.h.b16 %v3755
    %v3804 = vunpack.c.l.b16 %v3756
    %v3805 = vunpack.c.h.b16 %v3756
    %v3806 = vunpack.c.l.b16 %v3757
    %v3807 = vunpack.c.h.b16 %v3757
    %v3808 = vunpack.c.l.b16 %v3758
    %v3809 = vunpack.c.h.b16 %v3758
    %v3810 = vunpack.c.l.b16 %v3759
    %v3811 = vunpack.c.h.b16 %v3759
    %v3812 = vunpack.c.l.b16 %v3760
    %v3813 = vunpack.c.h.b16 %v3760
    %v3814 = vunpack.c.l.b16 %v3761
    %v3815 = vunpack.c.h.b16 %v3761
    %v3816 = vunpack.c.l.b16 %v3762
    %v3817 = vunpack.c.h.b16 %v3762
    %v3818 = vunpack.c.l.b16 %v3763
    %v3819 = vunpack.c.h.b16 %v3763
    %v3820 = vunpack.c.l.b16 %v3764
    %v3821 = vunpack.c.h.b16 %v3764
    %v3822 = vunpack.c.l.b16 %v3765
    %v3823 = vunpack.c.h.b16 %v3765
    %v3824 = vunpack.c.l.b16 %v3766
    %v3825 = vunpack.c.h.b16 %v3766
    %v3826 = vunpack.c.l.b16 %v3767
    %v3827 = vunpack.c.h.b16 %v3767
    %v3828 = vunpack.c.l.b16 %v3768
    %v3829 = vunpack.c.h.b16 %v3768
    %v3830 = vunpack.c.l.b16 %v3769
    %v3831 = vunpack.c.h.b16 %v3769
    %v3832 = vpack.c.b16 %v3802, %v3800
    %v3833 = vpack.c.b16 %v3803, %v3801
    %v3834 = vpack.c.b16 %v3806, %v3804
    %v3835 = vpack.c.b16 %v3807, %v3805
    %v3836 = vpack.c.b16 %v3810, %v3808
    %v3837 = vpack.c.b16 %v3811, %v3809
    %v3838 = vpack.c.b16 %v3814, %v3812
    %v3839 = vpack.c.b16 %v3815, %v3813
    %v3840 = vpack.c.b16 %v3818, %v3816
    %v3841 = vpack.c.b16 %v3819, %v3817
    %v3842 = vpack.c.b16 %v3822, %v3820
    %v3843 = vpack.c.b16 %v3823, %v3821
    %v3844 = vpack.c.b16 %v3826, %v3824
    %v3845 = vpack.c.b16 %v3827, %v3825
    %v3846 = vpack.c.b16 %v3830, %v3828
    %v3847 = vpack.c.b16 %v3831, %v3829
    %3864 = vmatprep.subr.bf16.mxu0 %v3833
    %3865 = vmatpush1.bf16.msra.mxu0 %v3832
    %3866 = vmatprep.subr.bf16.mxu0 %v3835
    %3867 = vmatpush1.bf16.msra.mxu0 %v3834
    %3868 = vmatprep.subr.bf16.mxu0 %v3837
    %3869 = vmatpush1.bf16.msra.mxu0 %v3836
    %3870 = vmatprep.subr.bf16.mxu0 %v3839
    %3871 = vmatpush1.bf16.msra.mxu0 %v3838
    %3872 = vmatprep.subr.bf16.mxu0 %v3841
    %3873 = vmatpush1.bf16.msra.mxu0 %v3840
    %3874 = vmatprep.subr.bf16.mxu0 %v3843
    %3875 = vmatpush1.bf16.msra.mxu0 %v3842
    %3876 = vmatprep.subr.bf16.mxu0 %v3845
    %3877 = vmatpush1.bf16.msra.mxu0 %v3844
    %3878 = vmatprep.subr.bf16.mxu0 %v3847
    %3879 = vmatpush1.bf16.msra.mxu0 %v3846
    %3880 = vmatprep.subr.bf16.mxu0 0
    %3881 = vmatpush1.bf16.msra.mxu0 0
    %3882 = vmatprep.subr.bf16.mxu0 0
    %3883 = vmatpush1.bf16.msra.mxu0 0
    %3884 = vmatprep.subr.bf16.mxu0 0
    %3885 = vmatpush1.bf16.msra.mxu0 0
    %3886 = vmatprep.subr.bf16.mxu0 0
    %3887 = vmatpush1.bf16.msra.mxu0 0
    %3888 = vmatprep.subr.bf16.mxu0 0
    %3889 = vmatpush1.bf16.msra.mxu0 0
    %3890 = vmatprep.subr.bf16.mxu0 0
    %3891 = vmatpush1.bf16.msra.mxu0 0
    %3892 = vmatprep.subr.bf16.mxu0 0
    %3893 = vmatpush1.bf16.msra.mxu0 0
    %3894 = vmatprep.subr.bf16.mxu0 0
    %3895 = vmatpush1.bf16.msra.mxu0 0
    %3896 = vmatprep.mubr.bf16.mxu0 0
    %3897 = vmatmul.mubr.bf16.gmra.mrb[0].mxu0 %v3772
    %v3898 = vpop.f32.mrb[0].mxu0
    %v3899 = vadd.f32 %v3777, %v3898
    %v3900 = vpop.f32.mrb[0].mxu0
    %v3901 = vadd.f32 %v3781, %v3900
    %v3902 = vpop.f32.mrb[0].mxu0
    %v3903 = vadd.f32 %v3777, %v3902
    %v3904 = vpop.f32.mrb[0].mxu0
    %v3905 = vadd.f32 %v3781, %v3904
    %3906 = vdwg.mxu0
    %v3907 = vmul.f32 %v3899, %v3899
    %v3908 = vmul.f32 %v3901, %v3901
    %v3909 = vmul.f32 %v3903, %v3903
    %v3910 = vmul.f32 %v3905, %v3905
    %v3911 = vmul.f32 %v3899, %v3907
    %v3912 = vmul.f32 %v3901, %v3908
    %v3913 = vmul.f32 %v3903, %v3909
    %v3914 = vmul.f32 %v3905, %v3910
    %v3915 = vmul.f32 %v3911, 0.044715
    %v3916 = vmul.f32 %v3912, 0.044715
    %v3917 = vmul.f32 %v3913, 0.044715
    %v3918 = vmul.f32 %v3914, 0.044715
    %v3919 = vadd.f32 %v3899, %v3915
    %v3920 = vadd.f32 %v3901, %v3916
    %v3921 = vadd.f32 %v3903, %v3917
    %v3922 = vadd.f32 %v3905, %v3918
    %v3923 = vmul.f32 %v3919, 0.7978846
    %v3924 = vmul.f32 %v3920, 0.7978846
    %v3925 = vmul.f32 %v3921, 0.7978846
    %v3926 = vmul.f32 %v3922, 0.7978846
    %v3927 = vtanh.pop %v3923
    %v3928 = vtanh.pop %v3924
    %v3929 = vtanh.pop %v3925
    %v3930 = vtanh.pop %v3926
    %v3931 = vadd.f32 %v3927, 1.0
    %v3932 = vadd.f32 %v3928, 1.0
    %v3933 = vadd.f32 %v3929, 1.0
    %v3934 = vadd.f32 %v3930, 1.0
    %v3935 = vmul.f32 %v3931, 0.5
    %v3936 = vmul.f32 %v3932, 0.5
    %v3937 = vmul.f32 %v3933, 0.5
    %v3938 = vmul.f32 %v3934, 0.5
    %v3939 = vmul.f32 %v3899, %v3935
    %v3940 = vmul.f32 %v3901, %v3936
    %v3941 = vmul.f32 %v3903, %v3937
    %v3942 = vmul.f32 %v3905, %v3938
    %s3943 = scalar_lea.vmem [#allocation16], 128
    %v3944 = vld [vmem:[%s3943] sm:$0xf]
    %v3945 = vld [vmem:[%s3943 + $0x4] sm:$0xf]
    %v3946 = vld [vmem:[%s3943 + $0x8] sm:$0xf]
    %v3947 = vld [vmem:[%s3943 + $0xc] sm:$0xf]
    %v3948 = vld [vmem:[%s3943 + $0x10] sm:$0xf]
    %v3949 = vld [vmem:[%s3943 + $0x14] sm:$0xf]
    %v3950 = vld [vmem:[%s3943 + $0x18] sm:$0xf]
    %v3951 = vld [vmem:[%s3943 + $0x1c] sm:$0xf]
    %v3952 = vld [vmem:[%s3943 + $0x20] sm:$0xf]
    %v3953 = vld [vmem:[%s3943 + $0x24] sm:$0xf]
    %v3954 = vld [vmem:[%s3943 + $0x28] sm:$0xf]
    %v3955 = vld [vmem:[%s3943 + $0x2c] sm:$0xf]
    %v3956 = vld [vmem:[%s3943 + $0x30] sm:$0xf]
    %v3957 = vld [vmem:[%s3943 + $0x34] sm:$0xf]
    %v3958 = vld [vmem:[%s3943 + $0x38] sm:$0xf]
    %v3959 = vld [vmem:[%s3943 + $0x3c] sm:$0xf]
    %v3960 = vld [vmem:[%s3943 + $0x40] sm:$0xf]
    %v3961 = vld [vmem:[%s3943 + $0x44] sm:$0xf]
    %v3962 = vld [vmem:[%s3943 + $0x48] sm:$0xf]
    %v3963 = vld [vmem:[%s3943 + $0x4c] sm:$0xf]
    %v3964 = vld [vmem:[%s3943 + $0x50] sm:$0xf]
    %v3965 = vld [vmem:[%s3943 + $0x54] sm:$0xf]
    %v3966 = vld [vmem:[%s3943 + $0x58] sm:$0xf]
    %v3967 = vld [vmem:[%s3943 + $0x5c] sm:$0xf]
    %v3968 = vld [vmem:[%s3943 + $0x60] sm:$0xf]
    %v3969 = vld [vmem:[%s3943 + $0x64] sm:$0xf]
    %v3970 = vld [vmem:[%s3943 + $0x68] sm:$0xf]
    %v3971 = vld [vmem:[%s3943 + $0x6c] sm:$0xf]
    %v3972 = vld [vmem:[%s3943 + $0x70] sm:$0xf]
    %v3973 = vld [vmem:[%s3943 + $0x74] sm:$0xf]
    %v3974 = vld [vmem:[%s3943 + $0x78] sm:$0xf]
    %v3975 = vld [vmem:[%s3943 + $0x7c] sm:$0xf]
    %s3976 = scalar_lea.vmem [#allocation17], 1
    %v3977 = vld [vmem:[%s3976] sm:$0x1]
    %v3978 = vpack.c.bf16 %v3941, %v3939
    %v3979 = vpack.c.bf16 %v3942, %v3940
    %v3981 = vlaneseq
    %v3982 = vshrl.u32 %v3981, 7
    %v3983 = vsub.s32 0, %v3982
    %v3984 = vrot.slane %v3977, %v3983
    %v4018 = vunpack.c.l.b16 %v3944
    %v4019 = vunpack.c.l.b16 %v3945
    %v4020 = vunpack.c.l.b16 %v3946
    %v4021 = vunpack.c.l.b16 %v3947
    %v4022 = vunpack.c.l.b16 %v3948
    %v4023 = vunpack.c.l.b16 %v3949
    %v4024 = vunpack.c.l.b16 %v3950
    %v4025 = vunpack.c.l.b16 %v3951
    %v4026 = vunpack.c.l.b16 %v3952
    %v4027 = vunpack.c.l.b16 %v3953
    %v4028 = vunpack.c.l.b16 %v3954
    %v4029 = vunpack.c.l.b16 %v3955
    %v4030 = vunpack.c.l.b16 %v3956
    %v4031 = vunpack.c.l.b16 %v3957
    %v4032 = vunpack.c.l.b16 %v3958
    %v4033 = vunpack.c.l.b16 %v3959
    %v4034 = vunpack.c.l.b16 %v3960
    %v4035 = vunpack.c.l.b16 %v3961
    %v4036 = vunpack.c.l.b16 %v3962
    %v4037 = vunpack.c.l.b16 %v3963
    %v4038 = vunpack.c.l.b16 %v3964
    %v4039 = vunpack.c.l.b16 %v3965
    %v4040 = vunpack.c.l.b16 %v3966
    %v4041 = vunpack.c.l.b16 %v3967
    %v4042 = vunpack.c.l.b16 %v3968
    %v4043 = vunpack.c.l.b16 %v3969
    %v4044 = vunpack.c.l.b16 %v3970
    %v4045 = vunpack.c.l.b16 %v3971
    %v4046 = vunpack.c.l.b16 %v3972
    %v4047 = vunpack.c.l.b16 %v3973
    %v4048 = vunpack.c.l.b16 %v3974
    %v4049 = vunpack.c.l.b16 %v3975
    %v4050 = vpack.c.b16 %v4019, %v4018
    %v4051 = vpack.c.b16 %v4021, %v4020
    %v4052 = vpack.c.b16 %v4023, %v4022
    %v4053 = vpack.c.b16 %v4025, %v4024
    %v4054 = vpack.c.b16 %v4027, %v4026
    %v4055 = vpack.c.b16 %v4029, %v4028
    %v4056 = vpack.c.b16 %v4031, %v4030
    %v4057 = vpack.c.b16 %v4033, %v4032
    %v4058 = vpack.c.b16 %v4035, %v4034
    %v4059 = vpack.c.b16 %v4037, %v4036
    %v4060 = vpack.c.b16 %v4039, %v4038
    %v4061 = vpack.c.b16 %v4041, %v4040
    %v4062 = vpack.c.b16 %v4043, %v4042
    %v4063 = vpack.c.b16 %v4045, %v4044
    %v4064 = vpack.c.b16 %v4047, %v4046
    %v4065 = vpack.c.b16 %v4049, %v4048
    %4082 = vmatprep.subr.bf16.mxu0 0
    %4083 = vmatpush1.bf16.msra.mxu0 %v4050
    %4084 = vmatprep.subr.bf16.mxu0 0
    %4085 = vmatpush1.bf16.msra.mxu0 %v4051
    %4086 = vmatprep.subr.bf16.mxu0 0
    %4087 = vmatpush1.bf16.msra.mxu0 %v4052
    %4088 = vmatprep.subr.bf16.mxu0 0
    %4089 = vmatpush1.bf16.msra.mxu0 %v4053
    %4090 = vmatprep.subr.bf16.mxu0 0
    %4091 = vmatpush1.bf16.msra.mxu0 %v4054
    %4092 = vmatprep.subr.bf16.mxu0 0
    %4093 = vmatpush1.bf16.msra.mxu0 %v4055
    %4094 = vmatprep.subr.bf16.mxu0 0
    %4095 = vmatpush1.bf16.msra.mxu0 %v4056
    %4096 = vmatprep.subr.bf16.mxu0 0
    %4097 = vmatpush1.bf16.msra.mxu0 %v4057
    %4098 = vmatprep.subr.bf16.mxu0 0
    %4099 = vmatpush1.bf16.msra.mxu0 %v4058
    %4100 = vmatprep.subr.bf16.mxu0 0
    %4101 = vmatpush1.bf16.msra.mxu0 %v4059
    %4102 = vmatprep.subr.bf16.mxu0 0
    %4103 = vmatpush1.bf16.msra.mxu0 %v4060
    %4104 = vmatprep.subr.bf16.mxu0 0
    %4105 = vmatpush1.bf16.msra.mxu0 %v4061
    %4106 = vmatprep.subr.bf16.mxu0 0
    %4107 = vmatpush1.bf16.msra.mxu0 %v4062
    %4108 = vmatprep.subr.bf16.mxu0 0
    %4109 = vmatpush1.bf16.msra.mxu0 %v4063
    %4110 = vmatprep.subr.bf16.mxu0 0
    %4111 = vmatpush1.bf16.msra.mxu0 %v4064
    %4112 = vmatprep.subr.bf16.mxu0 0
    %4113 = vmatpush1.bf16.msra.mxu0 %v4065
    %4114 = vmatprep.mubr.bf16.mxu0 %v3979
    %4115 = vmatmul.mubr.bf16.gmra.mrb[0].mxu0 %v3978
    %v4116 = vpop.f32.mrb[0].mxu0
    %v4117 = vadd.f32 %v3984, %v4116
    %v4118 = vpop.f32.mrb[0].mxu0
    %v4119 = vpop.f32.mrb[0].mxu0
    %v4120 = vadd.f32 %v3984, %v4119
    %v4121 = vpop.f32.mrb[0].mxu0
    %4122 = vdwg.mxu0
    %v4123 = vadd.f32 %v4117, %v3751
    %v4124 = vadd.f32 %v4120, %v3752
    %s4125 = scalar_lea.vmem [#allocation19], 1
    %v4126 = vld [vmem:[%s4125] sm:$0x1]
    %s4127 = scalar_lea.vmem [#allocation20], 1
    %v4128 = vld [vmem:[%s4127] sm:$0x1]
    %4129 = vadd.xlane.f32.xlu0 %v4123
    %v4130 = vpop.xlane.xlu0 %4129
    %4131 = vadd.xlane.f32.xlu0 %v4124
    %v4132 = vpop.xlane.xlu0 %4131
    %v4133 = vmul.f32 %v4130, %v399
    %v4134 = vmul.f32 %v4132, %v399
    %v4135 = vsub.f32 %v4123, %v4133
    %v4136 = vsub.f32 %v4124, %v4134
    %v4137 = vmul.f32 %v4135, %v4135
    %v4138 = vmul.f32 %v4136, %v4136
    %4139 = vadd.xlane.f32.xlu0 %v4137
    %v4140 = vpop.xlane.xlu0 %4139
    %4141 = vadd.xlane.f32.xlu0 %v4138
    %v4142 = vpop.xlane.xlu0 %4141
    %v4143 = vmul.f32 %v4140, %v399
    %v4144 = vmul.f32 %v4142, %v399
    %v4145 = vadd.f32 %v4143, 1e-12
    %v4146 = vadd.f32 %v4144, 1e-12
    %v4147 = vrsqrt.pop %v4145
    %v4148 = vrsqrt.pop %v4146
    %v4149 = vmul.f32 %v4135, %v4147
    %v4150 = vmul.f32 %v4136, %v4148
    %v4152 = vlaneseq
    %v4153 = vshrl.u32 %v4152, 7
    %v4154 = vsub.s32 0, %v4153
    %v4155 = vrot.slane %v4126, %v4154
    %v4157 = vmul.f32 %v4149, %v4155
    %v4158 = vmul.f32 %v4150, %v4155
    %v4160 = vlaneseq
    %v4161 = vshrl.u32 %v4160, 7
    %v4162 = vsub.s32 0, %v4161
    %v4163 = vrot.slane %v4128, %v4162
    %v4165 = vadd.f32 %v4157, %v4163
    %v4166 = vadd.f32 %v4158, %v4163
    %v4168 = vrot.slane %v4166, 7
    %vm4170 = vcmask 1040384
    %v4171 = vsel %vm4170, %v4165, %v4168
    %v4172 = vld [vmem:[#allocation22] sm:$0xf]
    %v4173 = vld [vmem:[#allocation22 + $0x4] sm:$0xf]
    %v4174 = vld [vmem:[#allocation22 + $0x8] sm:$0xf]
    %v4175 = vld [vmem:[#allocation22 + $0xc] sm:$0xf]
    %v4176 = vld [vmem:[#allocation22 + $0x10] sm:$0xf]
    %v4177 = vld [vmem:[#allocation22 + $0x14] sm:$0xf]
    %v4178 = vld [vmem:[#allocation22 + $0x18] sm:$0xf]
    %v4179 = vld [vmem:[#allocation22 + $0x1c] sm:$0xf]
    %v4180 = vld [vmem:[#allocation22 + $0x20] sm:$0xf]
    %v4181 = vld [vmem:[#allocation22 + $0x24] sm:$0xf]
    %v4182 = vld [vmem:[#allocation22 + $0x28] sm:$0xf]
    %v4183 = vld [vmem:[#allocation22 + $0x2c] sm:$0xf]
    %v4184 = vld [vmem:[#allocation22 + $0x30] sm:$0xf]
    %v4185 = vld [vmem:[#allocation22 + $0x34] sm:$0xf]
    %v4186 = vld [vmem:[#allocation22 + $0x38] sm:$0xf]
    %v4187 = vld [vmem:[#allocation22 + $0x3c] sm:$0xf]
    %v4188 = vld [vmem:[#allocation23] sm:$0x1]
    %v4189 = vpack.c.bf16 %v4171, %v4171
    %v4191 = vlaneseq
    %v4192 = vshrl.u32 %v4191, 7
    %v4193 = vsub.s32 0, %v4192
    %v4194 = vrot.slane %v4188, %v4193
    %v4212 = vunpack.c.l.b16 %v4172
    %v4213 = vunpack.c.l.b16 %v4173
    %v4214 = vunpack.c.l.b16 %v4174
    %v4215 = vunpack.c.l.b16 %v4175
    %v4216 = vunpack.c.l.b16 %v4176
    %v4217 = vunpack.c.l.b16 %v4177
    %v4218 = vunpack.c.l.b16 %v4178
    %v4219 = vunpack.c.l.b16 %v4179
    %v4220 = vunpack.c.l.b16 %v4180
    %v4221 = vunpack.c.l.b16 %v4181
    %v4222 = vunpack.c.l.b16 %v4182
    %v4223 = vunpack.c.l.b16 %v4183
    %v4224 = vunpack.c.l.b16 %v4184
    %v4225 = vunpack.c.l.b16 %v4185
    %v4226 = vunpack.c.l.b16 %v4186
    %v4227 = vunpack.c.l.b16 %v4187
    %v4228 = vpack.c.b16 %v4213, %v4212
    %v4229 = vpack.c.b16 %v4215, %v4214
    %v4230 = vpack.c.b16 %v4217, %v4216
    %v4231 = vpack.c.b16 %v4219, %v4218
    %v4232 = vpack.c.b16 %v4221, %v4220
    %v4233 = vpack.c.b16 %v4223, %v4222
    %v4234 = vpack.c.b16 %v4225, %v4224
    %v4235 = vpack.c.b16 %v4227, %v4226
    %4244 = vmatprep.subr.bf16.mxu0 0
    %4245 = vmatpush1.bf16.msra.mxu0 %v4228
    %4246 = vmatprep.subr.bf16.mxu0 0
    %4247 = vmatpush1.bf16.msra.mxu0 %v4229
    %4248 = vmatprep.subr.bf16.mxu0 0
    %4249 = vmatpush1.bf16.msra.mxu0 %v4230
    %4250 = vmatprep.subr.bf16.mxu0 0
    %4251 = vmatpush1.bf16.msra.mxu0 %v4231
    %4252 = vmatprep.subr.bf16.mxu0 0
    %4253 = vmatpush1.bf16.msra.mxu0 %v4232
    %4254 = vmatprep.subr.bf16.mxu0 0
    %4255 = vmatpush1.bf16.msra.mxu0 %v4233
    %4256 = vmatprep.subr.bf16.mxu0 0
    %4257 = vmatpush1.bf16.msra.mxu0 %v4234
    %4258 = vmatprep.subr.bf16.mxu0 0
    %4259 = vmatpush1.bf16.msra.mxu0 %v4235
    %4260 = vmatprep.subr.bf16.mxu0 0
    %4261 = vmatpush1.bf16.msra.mxu0 0
    %4262 = vmatprep.subr.bf16.mxu0 0
    %4263 = vmatpush1.bf16.msra.mxu0 0
    %4264 = vmatprep.subr.bf16.mxu0 0
    %4265 = vmatpush1.bf16.msra.mxu0 0
    %4266 = vmatprep.subr.bf16.mxu0 0
    %4267 = vmatpush1.bf16.msra.mxu0 0
    %4268 = vmatprep.subr.bf16.mxu0 0
    %4269 = vmatpush1.bf16.msra.mxu0 0
    %4270 = vmatprep.subr.bf16.mxu0 0
    %4271 = vmatpush1.bf16.msra.mxu0 0
    %4272 = vmatprep.subr.bf16.mxu0 0
    %4273 = vmatpush1.bf16.msra.mxu0 0
    %4274 = vmatprep.subr.bf16.mxu0 0
    %4275 = vmatpush1.bf16.msra.mxu0 0
    %4276 = vmatprep.mubr.bf16.mxu0 0
    %4277 = vmatmul.mubr.bf16.gmra.mrb[0].mxu0 %v4189
    %v4278 = vpop.f32.mrb[0].mxu0
    %v4279 = vadd.f32 %v4194, %v4278
    %v4280 = vpop.f32.mrb[0].mxu0
    %v4281 = vpop.f32.mrb[0].mxu0
    %v4282 = vpop.f32.mrb[0].mxu0
    %4283 = vdwg.mxu0
    %v4284 = vtanh.pop %v4279
    %v4285 = vld [vmem:[#allocation25] sm:$0x1]
    %v4287 = vlaneseq
    %v4288 = vshrl.u32 %v4287, 7
    %v4289 = vsub.s32 0, %v4288
    %v4290 = vrot.slane %v4285, %v4289
    %v4292 = vmul.f32 %v4284, %v4290
    %vm4293 = vcmask 1041408
    %v4294 = vsel %vm4293, %v4292, 0.0
    %4295 = vadd.xlane.f32.xlu0 %v4294
    %v4296 = vpop.xlane.xlu0 %4295
    %v4297 = vld [vmem:[#allocation2] sm:$0x1]
    %v4299 = vlaneseq
    %v4300 = vshrl.u32 %v4299, 7
    %v4301 = vsub.s32 0, %v4300
    %v4302 = vrot.slane %v4297, %v4301
    %v4304 = vadd.f32 %v4296, %v4302
    %vm4305 = vcmask 1024
    %4306 = vst.msk [vmem:[%s22] sm:$0x3] %vm4305, %v4304
    // Predicated region
    $region150: #{chemberta_forward.1} parent=1 // pred_check
      _
    $region151: #{chemberta_forward.1} parent=1 // pred_check_branch
      %4308 = sbr.rel (0) target = $region153
    $region152: #{chemberta_forward.1} parent=1 // pred_region
      _
    $region153: #{chemberta_forward.1} parent=1 // pred_fallthru
      _
    // Predicated region
    $region154: #{chemberta_forward.1} parent=1 // pred_check
      _
    $region155: #{chemberta_forward.1} parent=1 // pred_check_branch
      %4310 = sbr.rel (0) target = $region157
    $region156: #{chemberta_forward.1} parent=1 // pred_region
      _
    $region157: #{chemberta_forward.1} parent=1 // pred_fallthru
      _
    %4311 = vsyncpa [#allocation4], 1
    %4312 = vsyncpa [#allocation6], 1
    %4313 = vsyncpa [#allocation9], 1
    %4314 = vsyncpa [#allocation12], 1
    %4315 = vsyncpa [#allocation15], 1
    %4316 = vsyncpa [#allocation18], 1
    %4317 = vsyncpa [#allocation21], 1
    %4318 = vsyncpa [#allocation24], 1

</llo_original>
